<compile_context>
chip_gen: v5e
topology: v5e:2x2
jax: 0.10.0
libtpu: 0.0.40
codegen_flags: <defaults>
</compile_context>

<pallas_src>
import functools

import jax
import jax.numpy as jnp
import numpy as np
from jax.experimental import pallas as pl
from jax.experimental.pallas import tpu as pltpu

LN_EPS = 1e-6
GELU_C = 0.7978845608028654  # sqrt(2/pi)


# --------------------------------- kernel ----------------------------------- #
def vit_block_kernel(x_ref, wqkv_ref, bqkv_ref, wproj_ref, bproj_ref,
                     w1_ref, b1_ref, w2_ref, b2_ref, o_ref, *, num_heads):
    bt, S, D = x_ref.shape
    N = bt * S
    hd = D // num_heads

    x = x_ref[...].astype(jnp.float32).reshape(N, D)      # (N, D), token-major

    def layer_norm(h):                                     # no affine, eps=1e-6
        # one-pass: var = E[h^2] - mu^2 -> the two lane reductions are independent
        mu = jnp.mean(h, axis=-1, keepdims=True)
        ms = jnp.mean(h * h, axis=-1, keepdims=True)
        var = ms - mu * mu
        return (h - mu) * jax.lax.rsqrt(var + LN_EPS)

    # ------------------------- attention branch ----------------------------- #
    h = layer_norm(x)
    # one fused QKV matmul over all bt*S tokens; softmax scale is already folded
    # into the q-columns of wqkv/bqkv (wrapper), so no per-score multiply here.
    qkv = jnp.dot(h.astype(jnp.bfloat16), wqkv_ref[...],
                  preferred_element_type=jnp.float32) + bqkv_ref[...]
    qkv_bf = qkv.astype(jnp.bfloat16)                       # (N, 3D)

    wproj = wproj_ref[...]                                  # (D, D) bf16
    attn = jnp.zeros((N, D), jnp.float32)
    for hh in range(num_heads):                             # static loop over heads
        qh = qkv_bf[:, 0 * D + hh * hd: 0 * D + (hh + 1) * hd].reshape(bt, S, hd)
        kh = qkv_bf[:, 1 * D + hh * hd: 1 * D + (hh + 1) * hd].reshape(bt, S, hd)
        vh = qkv_bf[:, 2 * D + hh * hd: 2 * D + (hh + 1) * hd].reshape(bt, S, hd)
        # batched (over the bt samples in this block) attention for this head
        s = jnp.einsum('bqd,bkd->bqk', qh, kh,
                       preferred_element_type=jnp.float32)  # (bt, S, S), f32
        m = jnp.max(s, axis=-1, keepdims=True)
        p = jnp.exp(s - m)
        p = p * pl.reciprocal(jnp.sum(p, axis=-1, keepdims=True), approx=True)
        o = jnp.einsum('bqk,bkd->bqd', p.astype(jnp.bfloat16), vh,
                       preferred_element_type=jnp.float32)  # (bt, S, hd)
        # fold this head's slice of the output projection (no concatenate)
        attn = attn + jnp.dot(o.reshape(N, hd).astype(jnp.bfloat16),
                              wproj[hh * hd:(hh + 1) * hd, :],
                              preferred_element_type=jnp.float32)
    # TODO(synk): training-mode attn_drop / proj_drop not implemented (p=0 / eval).
    x = x + attn + bproj_ref[...]                           # residual

    # ---------------------------- MLP branch -------------------------------- #
    h = layer_norm(x)
    h = jnp.dot(h.astype(jnp.bfloat16), w1_ref[...],
                preferred_element_type=jnp.float32) + b1_ref[...]
    h = 0.5 * h * (1.0 + jnp.tanh(GELU_C * (h + 0.044715 * (h * h * h))))  # GELU(tanh)
    h = jnp.dot(h.astype(jnp.bfloat16), w2_ref[...],
                preferred_element_type=jnp.float32) + b2_ref[...]
    # TODO(synk): training-mode mlp dropout not implemented (p=0 / eval only).

    o_ref[...] = (x + h).reshape(bt, S, D).astype(o_ref.dtype)


# -------------------------------- wrapper ----------------------------------- #
def _invariant_spec(shape):
    # grid-invariant operand: constant index_map + single-buffered (no 2x VMEM)
    n = len(shape)
    return pl.BlockSpec(shape, lambda *_, _n=n: (0,) * _n,
                        pipeline_mode=pl.Buffered(1))


def prepare_params(params, *, num_heads):
    """Cast weights to bf16 and fold the softmax scale into the q-columns."""
    D = params["wproj"].shape[0]
    hd = D // num_heads
    scale = float(hd) ** -0.5
    colscale = jnp.concatenate([jnp.full((D,), scale, jnp.float32),
                                jnp.ones((2 * D,), jnp.float32)])
    return dict(
        wqkv=(params["wqkv"] * colscale).astype(jnp.bfloat16),
        bqkv=(params["bqkv"] * colscale).astype(jnp.float32),
        wproj=params["wproj"].astype(jnp.bfloat16),
        bproj=params["bproj"].astype(jnp.float32),
        w1=params["w1"].astype(jnp.bfloat16),
        b1=params["b1"].astype(jnp.float32),
        w2=params["w2"].astype(jnp.bfloat16),
        b2=params["b2"].astype(jnp.float32),
    )


def vit_block_forward(x, params, *, num_heads, batch_tile=None):
    """x: (B, S, D).  Linear weights are stored (in, out) = PyTorch W.T."""
    B, S, D = x.shape
    MLP = params["w1"].shape[-1]
    p = prepare_params(params, num_heads=num_heads)

    if batch_tile is None:
        # largest divisor of B such that bt*S tokens stay VMEM-friendly;
        # bt*S >= 128/256 fills MXU rows on v5e / v6e+.
        batch_tile = 1
        for cand in range(B, 0, -1):
            if B % cand == 0 and cand * S <= 4096:
                batch_tile = cand
                break
    bt = batch_tile
    assert B % bt == 0

    kernel = functools.partial(vit_block_kernel, num_heads=num_heads)

    return pl.pallas_call(
        kernel,
        out_shape=jax.ShapeDtypeStruct((B, S, D), x.dtype),
        grid_spec=pltpu.PrefetchScalarGridSpec(
            num_scalar_prefetch=0,
            grid=(B // bt,),
            in_specs=[
                pl.BlockSpec((bt, S, D), lambda b: (b, 0, 0)),      # x
                _invariant_spec((D, 3 * D)), _invariant_spec((1, 3 * D)),  # qkv w/b
                _invariant_spec((D, D)), _invariant_spec((1, D)),          # proj w/b
                _invariant_spec((D, MLP)), _invariant_spec((1, MLP)),      # fc1 w/b
                _invariant_spec((MLP, D)), _invariant_spec((1, D)),        # fc2 w/b
            ],
            out_specs=pl.BlockSpec((bt, S, D), lambda b: (b, 0, 0)),
        ),
        compiler_params=pltpu.CompilerParams(
            dimension_semantics=("parallel",),
            vmem_limit_bytes=32 * 1024 * 1024,
        ),
    )(x, p["wqkv"], p["bqkv"], p["wproj"], p["bproj"],
      p["w1"], p["b1"], p["w2"], p["b2"])


# ------------------------------ pure-JAX ref -------------------------------- #
def ref_forward(x, p, *, num_heads):
    B, S, D = x.shape
    hd = D // num_heads

    def ln(h):
        mu = h.mean(-1, keepdims=True)
        var = h.var(-1, keepdims=True)
        return (h - mu) * jax.lax.rsqrt(var + LN_EPS)

    # attention (timm-style), full f32 reference
    h = ln(x)
    qkv = h @ p["wqkv"] + p["bqkv"]                     # (B, S, 3D)
    qkv = qkv.reshape(B, S, 3, num_heads, hd)
    qkv = jnp.transpose(qkv, (2, 0, 3, 1, 4))           # (3, B, H, S, hd)
    q, k, v = qkv[0], qkv[1], qkv[2]
    scores = jnp.einsum("bhqd,bhkd->bhqk", q, k) * (hd ** -0.5)
    attn = jax.nn.softmax(scores, axis=-1)
    o = jnp.einsum("bhqk,bhkd->bhqd", attn, v)
    o = jnp.transpose(o, (0, 2, 1, 3)).reshape(B, S, D)
    o = o @ p["wproj"] + p["bproj"]
    x = x + o

    # mlp
    h = ln(x)
    h = h @ p["w1"] + p["b1"]
    h = 0.5 * h * (1.0 + jnp.tanh(GELU_C * (h + 0.044715 * h ** 3)))
    h = h @ p["w2"] + p["b2"]
    return x + h


# --------------------------------- main ------------------------------------- #
if __name__ == "__main__":
    key = jax.random.PRNGKey(0)
    ks = jax.random.split(key, 9)

    B, S, D, H = 2, 64, 128, 4          # small, lane-dense: D=128 on lanes
    MLP = int(D * 4.0)                  # mlp_ratio = 4.0

    x = jax.random.normal(ks[0], (B, S, D), jnp.float32)
    params = dict(
        wqkv=0.05 * jax.random.normal(ks[1], (D, 3 * D), jnp.float32),
        bqkv=0.05 * jax.random.normal(ks[2], (1, 3 * D), jnp.float32),
        wproj=0.05 * jax.random.normal(ks[3], (D, D), jnp.float32),
        bproj=0.05 * jax.random.normal(ks[4], (1, D), jnp.float32),
        w1=0.05 * jax.random.normal(ks[5], (D, MLP), jnp.float32),
        b1=0.05 * jax.random.normal(ks[6], (1, MLP), jnp.float32),
        w2=0.05 * jax.random.normal(ks[7], (MLP, D), jnp.float32),
        b2=0.05 * jax.random.normal(ks[8], (1, D), jnp.float32),
    )

    out = jax.block_until_ready(vit_block_forward(x, params, num_heads=H))
    ref = jax.block_until_ready(ref_forward(x, params, num_heads=H))
    # bf16 matmul operands (f32 accumulation) -> looser tolerance than pure f32
    np.testing.assert_allclose(np.asarray(out), np.asarray(ref), rtol=3e-2, atol=3e-2)
    print("KERNEL_OK")
</pallas_src>

<mosaic_0001>
module attributes {stable_mosaic.version = 11 : i64} {
  func.func @vit_block_kernel(%arg0: i32, %arg1: memref<2x64x128xf32, #tpu.memory_space<vmem>>, %arg2: memref<128x384xbf16, #tpu.memory_space<vmem>>, %arg3: memref<1x384xf32, #tpu.memory_space<vmem>>, %arg4: memref<128x128xbf16, #tpu.memory_space<vmem>>, %arg5: memref<1x128xf32, #tpu.memory_space<vmem>>, %arg6: memref<128x512xbf16, #tpu.memory_space<vmem>>, %arg7: memref<1x512xf32, #tpu.memory_space<vmem>>, %arg8: memref<512x128xbf16, #tpu.memory_space<vmem>>, %arg9: memref<1x128xf32, #tpu.memory_space<vmem>>, %arg10: memref<2x64x128xf32, #tpu.memory_space<vmem>>) attributes {dimension_semantics = [#tpu.dimension_semantics<parallel>], iteration_bounds = array<i64: 1>, scalar_prefetch = 0 : i64, scratch_operands = 0 : i64, tpu.core_type = #tpu.core_type<tc>, window_params = [{transform_indices = @transform_0, window_bounds = array<i64: 2, 64, 128>}, {pipeline_mode = #tpu.pipeline_mode<synchronous>, transform_indices = @transform_1, window_bounds = array<i64: 128, 384>}, {pipeline_mode = #tpu.pipeline_mode<synchronous>, transform_indices = @transform_2, window_bounds = array<i64: 1, 384>}, {pipeline_mode = #tpu.pipeline_mode<synchronous>, transform_indices = @transform_3, window_bounds = array<i64: 128, 128>}, {pipeline_mode = #tpu.pipeline_mode<synchronous>, transform_indices = @transform_4, window_bounds = array<i64: 1, 128>}, {pipeline_mode = #tpu.pipeline_mode<synchronous>, transform_indices = @transform_5, window_bounds = array<i64: 128, 512>}, {pipeline_mode = #tpu.pipeline_mode<synchronous>, transform_indices = @transform_6, window_bounds = array<i64: 1, 512>}, {pipeline_mode = #tpu.pipeline_mode<synchronous>, transform_indices = @transform_7, window_bounds = array<i64: 512, 128>}, {pipeline_mode = #tpu.pipeline_mode<synchronous>, transform_indices = @transform_8, window_bounds = array<i64: 1, 128>}, {transform_indices = @transform_9, window_bounds = array<i64: 2, 64, 128>}]} {
    %c0 = arith.constant 0 : index
    %c0_0 = arith.constant 0 : index
    %c0_1 = arith.constant 0 : index
    %0 = vector.load %arg1[%c0, %c0_0, %c0_1] : memref<2x64x128xf32, #tpu.memory_space<vmem>>, vector<2x64x128xf32>
    %1 = vector.shape_cast %0 : vector<2x64x128xf32> to vector<128x128xf32>
    %cst = arith.constant dense<0.000000e+00> : vector<128xf32>
    %2 = vector.multi_reduction <add>, %1, %cst [1] : vector<128x128xf32> to vector<128xf32>
    %3 = vector.shape_cast %2 : vector<128xf32> to vector<128x1xf32>
    %cst_2 = arith.constant 1.280000e+02 : f32
    %4 = vector.broadcast %cst_2 : f32 to vector<128x1xf32>
    %5 = arith.divf %3, %4 : vector<128x1xf32>
    %6 = arith.mulf %1, %1 : vector<128x128xf32>
    %cst_3 = arith.constant dense<0.000000e+00> : vector<128xf32>
    %7 = vector.multi_reduction <add>, %6, %cst_3 [1] : vector<128x128xf32> to vector<128xf32>
    %8 = vector.shape_cast %7 : vector<128xf32> to vector<128x1xf32>
    %cst_4 = arith.constant 1.280000e+02 : f32
    %9 = vector.broadcast %cst_4 : f32 to vector<128x1xf32>
    %10 = arith.divf %8, %9 : vector<128x1xf32>
    %11 = arith.mulf %5, %5 : vector<128x1xf32>
    %12 = arith.subf %10, %11 : vector<128x1xf32>
    %13 = vector.broadcast %5 : vector<128x1xf32> to vector<128x128xf32>
    %14 = arith.subf %1, %13 : vector<128x128xf32>
    %cst_5 = arith.constant 9.99999997E-7 : f32
    %15 = vector.broadcast %cst_5 : f32 to vector<128x1xf32>
    %16 = arith.addf %12, %15 : vector<128x1xf32>
    %17 = math.rsqrt %16 : vector<128x1xf32>
    %18 = vector.broadcast %17 : vector<128x1xf32> to vector<128x128xf32>
    %19 = arith.mulf %14, %18 : vector<128x128xf32>
    %20 = arith.truncf %19 : vector<128x128xf32> to vector<128x128xbf16>
    %c0_6 = arith.constant 0 : index
    %c0_7 = arith.constant 0 : index
    %21 = vector.load %arg2[%c0_6, %c0_7] : memref<128x384xbf16, #tpu.memory_space<vmem>>, vector<128x384xbf16>
    %cst_8 = arith.constant dense<0.000000e+00> : vector<128x384xf32>
    %22 = tpu.matmul %20, %21, %cst_8 {dimension_numbers = #tpu.dot_dimension_numbers<[1], [0], [0], [1], [0, 0, 1, 1], [], []>} : vector<128x128xbf16>, vector<128x384xbf16>, vector<128x384xf32> -> vector<128x384xf32>
    %c0_9 = arith.constant 0 : index
    %c0_10 = arith.constant 0 : index
    %23 = vector.load %arg3[%c0_9, %c0_10] : memref<1x384xf32, #tpu.memory_space<vmem>>, vector<1x384xf32>
    %24 = vector.broadcast %23 : vector<1x384xf32> to vector<128x384xf32>
    %25 = arith.addf %22, %24 : vector<128x384xf32>
    %26 = arith.truncf %25 : vector<128x384xf32> to vector<128x384xbf16>
    %c0_11 = arith.constant 0 : index
    %c0_12 = arith.constant 0 : index
    %27 = vector.load %arg4[%c0_11, %c0_12] : memref<128x128xbf16, #tpu.memory_space<vmem>>, vector<128x128xbf16>
    %cst_13 = arith.constant 0.000000e+00 : f32
    %28 = vector.broadcast %cst_13 : f32 to vector<128x128xf32>
    %29 = vector.extract_strided_slice %26 {offsets = [0, 0], sizes = [128, 32], strides = [1, 1]} : vector<128x384xbf16> to vector<128x32xbf16>
    %30 = vector.shape_cast %29 : vector<128x32xbf16> to vector<2x64x32xbf16>
    %31 = vector.extract_strided_slice %26 {offsets = [0, 128], sizes = [128, 32], strides = [1, 1]} : vector<128x384xbf16> to vector<128x32xbf16>
    %32 = vector.shape_cast %31 : vector<128x32xbf16> to vector<2x64x32xbf16>
    %33 = vector.extract_strided_slice %26 {offsets = [0, 256], sizes = [128, 32], strides = [1, 1]} : vector<128x384xbf16> to vector<128x32xbf16>
    %34 = vector.shape_cast %33 : vector<128x32xbf16> to vector<2x64x32xbf16>
    "tpu.trace_start"() <{level = 10 : i32, message = "bqd,bkd->bqk"}> : () -> ()
    %cst_14 = arith.constant dense<0.000000e+00> : vector<2x64x64xf32>
    %35 = tpu.matmul %30, %32, %cst_14 {dimension_numbers = #tpu.dot_dimension_numbers<[2], [2], [1], [1], [0, 0, 0, 1, 1, 1], [0], [0]>} : vector<2x64x32xbf16>, vector<2x64x32xbf16>, vector<2x64x64xf32> -> vector<2x64x64xf32>
    "tpu.trace_stop"() : () -> ()
    %cst_15 = arith.constant dense<0xFF800000> : vector<2x64xf32>
    %36 = vector.multi_reduction <maximumf>, %35, %cst_15 [2] : vector<2x64x64xf32> to vector<2x64xf32>
    %37 = vector.shape_cast %36 : vector<2x64xf32> to vector<2x64x1xf32>
    %38 = vector.broadcast %37 : vector<2x64x1xf32> to vector<2x64x64xf32>
    %39 = arith.subf %35, %38 : vector<2x64x64xf32>
    %40 = math.exp %39 : vector<2x64x64xf32>
    %cst_16 = arith.constant dense<0.000000e+00> : vector<2x64xf32>
    %41 = vector.multi_reduction <add>, %40, %cst_16 [2] : vector<2x64x64xf32> to vector<2x64xf32>
    %42 = vector.shape_cast %41 : vector<2x64xf32> to vector<2x64x1xf32>
    %43 = tpu.reciprocal %42 {approx = true} : vector<2x64x1xf32> -> vector<2x64x1xf32>
    %44 = vector.broadcast %43 : vector<2x64x1xf32> to vector<2x64x64xf32>
    %45 = arith.mulf %40, %44 : vector<2x64x64xf32>
    %46 = arith.truncf %45 : vector<2x64x64xf32> to vector<2x64x64xbf16>
    "tpu.trace_start"() <{level = 10 : i32, message = "bqk,bkd->bqd"}> : () -> ()
    %cst_17 = arith.constant dense<0.000000e+00> : vector<2x64x32xf32>
    %47 = tpu.matmul %46, %34, %cst_17 {dimension_numbers = #tpu.dot_dimension_numbers<[2], [1], [1], [2], [0, 0, 0, 1, 1, 2], [0], [0]>} : vector<2x64x64xbf16>, vector<2x64x32xbf16>, vector<2x64x32xf32> -> vector<2x64x32xf32>
    "tpu.trace_stop"() : () -> ()
    %48 = vector.shape_cast %47 : vector<2x64x32xf32> to vector<128x32xf32>
    %49 = arith.truncf %48 : vector<128x32xf32> to vector<128x32xbf16>
    %50 = vector.extract_strided_slice %27 {offsets = [0, 0], sizes = [32, 128], strides = [1, 1]} : vector<128x128xbf16> to vector<32x128xbf16>
    %cst_18 = arith.constant dense<0.000000e+00> : vector<128x128xf32>
    %51 = tpu.matmul %49, %50, %cst_18 {dimension_numbers = #tpu.dot_dimension_numbers<[1], [0], [0], [1], [0, 0, 1, 1], [], []>} : vector<128x32xbf16>, vector<32x128xbf16>, vector<128x128xf32> -> vector<128x128xf32>
    %52 = arith.addf %28, %51 : vector<128x128xf32>
    %53 = vector.extract_strided_slice %26 {offsets = [0, 32], sizes = [128, 32], strides = [1, 1]} : vector<128x384xbf16> to vector<128x32xbf16>
    %54 = vector.shape_cast %53 : vector<128x32xbf16> to vector<2x64x32xbf16>
    %55 = vector.extract_strided_slice %26 {offsets = [0, 160], sizes = [128, 32], strides = [1, 1]} : vector<128x384xbf16> to vector<128x32xbf16>
    %56 = vector.shape_cast %55 : vector<128x32xbf16> to vector<2x64x32xbf16>
    %57 = vector.extract_strided_slice %26 {offsets = [0, 288], sizes = [128, 32], strides = [1, 1]} : vector<128x384xbf16> to vector<128x32xbf16>
    %58 = vector.shape_cast %57 : vector<128x32xbf16> to vector<2x64x32xbf16>
    "tpu.trace_start"() <{level = 10 : i32, message = "bqd,bkd->bqk"}> : () -> ()
    %cst_19 = arith.constant dense<0.000000e+00> : vector<2x64x64xf32>
    %59 = tpu.matmul %54, %56, %cst_19 {dimension_numbers = #tpu.dot_dimension_numbers<[2], [2], [1], [1], [0, 0, 0, 1, 1, 1], [0], [0]>} : vector<2x64x32xbf16>, vector<2x64x32xbf16>, vector<2x64x64xf32> -> vector<2x64x64xf32>
    "tpu.trace_stop"() : () -> ()
    %cst_20 = arith.constant dense<0xFF800000> : vector<2x64xf32>
    %60 = vector.multi_reduction <maximumf>, %59, %cst_20 [2] : vector<2x64x64xf32> to vector<2x64xf32>
    %61 = vector.shape_cast %60 : vector<2x64xf32> to vector<2x64x1xf32>
    %62 = vector.broadcast %61 : vector<2x64x1xf32> to vector<2x64x64xf32>
    %63 = arith.subf %59, %62 : vector<2x64x64xf32>
    %64 = math.exp %63 : vector<2x64x64xf32>
    %cst_21 = arith.constant dense<0.000000e+00> : vector<2x64xf32>
    %65 = vector.multi_reduction <add>, %64, %cst_21 [2] : vector<2x64x64xf32> to vector<2x64xf32>
    %66 = vector.shape_cast %65 : vector<2x64xf32> to vector<2x64x1xf32>
    %67 = tpu.reciprocal %66 {approx = true} : vector<2x64x1xf32> -> vector<2x64x1xf32>
    %68 = vector.broadcast %67 : vector<2x64x1xf32> to vector<2x64x64xf32>
    %69 = arith.mulf %64, %68 : vector<2x64x64xf32>
    %70 = arith.truncf %69 : vector<2x64x64xf32> to vector<2x64x64xbf16>
    "tpu.trace_start"() <{level = 10 : i32, message = "bqk,bkd->bqd"}> : () -> ()
    %cst_22 = arith.constant dense<0.000000e+00> : vector<2x64x32xf32>
    %71 = tpu.matmul %70, %58, %cst_22 {dimension_numbers = #tpu.dot_dimension_numbers<[2], [1], [1], [2], [0, 0, 0, 1, 1, 2], [0], [0]>} : vector<2x64x64xbf16>, vector<2x64x32xbf16>, vector<2x64x32xf32> -> vector<2x64x32xf32>
    "tpu.trace_stop"() : () -> ()
    %72 = vector.shape_cast %71 : vector<2x64x32xf32> to vector<128x32xf32>
    %73 = arith.truncf %72 : vector<128x32xf32> to vector<128x32xbf16>
    %74 = vector.extract_strided_slice %27 {offsets = [32, 0], sizes = [32, 128], strides = [1, 1]} : vector<128x128xbf16> to vector<32x128xbf16>
    %cst_23 = arith.constant dense<0.000000e+00> : vector<128x128xf32>
    %75 = tpu.matmul %73, %74, %cst_23 {dimension_numbers = #tpu.dot_dimension_numbers<[1], [0], [0], [1], [0, 0, 1, 1], [], []>} : vector<128x32xbf16>, vector<32x128xbf16>, vector<128x128xf32> -> vector<128x128xf32>
    %76 = arith.addf %52, %75 : vector<128x128xf32>
    %77 = vector.extract_strided_slice %26 {offsets = [0, 64], sizes = [128, 32], strides = [1, 1]} : vector<128x384xbf16> to vector<128x32xbf16>
    %78 = vector.shape_cast %77 : vector<128x32xbf16> to vector<2x64x32xbf16>
    %79 = vector.extract_strided_slice %26 {offsets = [0, 192], sizes = [128, 32], strides = [1, 1]} : vector<128x384xbf16> to vector<128x32xbf16>
    %80 = vector.shape_cast %79 : vector<128x32xbf16> to vector<2x64x32xbf16>
    %81 = vector.extract_strided_slice %26 {offsets = [0, 320], sizes = [128, 32], strides = [1, 1]} : vector<128x384xbf16> to vector<128x32xbf16>
    %82 = vector.shape_cast %81 : vector<128x32xbf16> to vector<2x64x32xbf16>
    "tpu.trace_start"() <{level = 10 : i32, message = "bqd,bkd->bqk"}> : () -> ()
    %cst_24 = arith.constant dense<0.000000e+00> : vector<2x64x64xf32>
    %83 = tpu.matmul %78, %80, %cst_24 {dimension_numbers = #tpu.dot_dimension_numbers<[2], [2], [1], [1], [0, 0, 0, 1, 1, 1], [0], [0]>} : vector<2x64x32xbf16>, vector<2x64x32xbf16>, vector<2x64x64xf32> -> vector<2x64x64xf32>
    "tpu.trace_stop"() : () -> ()
    %cst_25 = arith.constant dense<0xFF800000> : vector<2x64xf32>
    %84 = vector.multi_reduction <maximumf>, %83, %cst_25 [2] : vector<2x64x64xf32> to vector<2x64xf32>
    %85 = vector.shape_cast %84 : vector<2x64xf32> to vector<2x64x1xf32>
    %86 = vector.broadcast %85 : vector<2x64x1xf32> to vector<2x64x64xf32>
    %87 = arith.subf %83, %86 : vector<2x64x64xf32>
    %88 = math.exp %87 : vector<2x64x64xf32>
    %cst_26 = arith.constant dense<0.000000e+00> : vector<2x64xf32>
    %89 = vector.multi_reduction <add>, %88, %cst_26 [2] : vector<2x64x64xf32> to vector<2x64xf32>
    %90 = vector.shape_cast %89 : vector<2x64xf32> to vector<2x64x1xf32>
    %91 = tpu.reciprocal %90 {approx = true} : vector<2x64x1xf32> -> vector<2x64x1xf32>
    %92 = vector.broadcast %91 : vector<2x64x1xf32> to vector<2x64x64xf32>
    %93 = arith.mulf %88, %92 : vector<2x64x64xf32>
    %94 = arith.truncf %93 : vector<2x64x64xf32> to vector<2x64x64xbf16>
    "tpu.trace_start"() <{level = 10 : i32, message = "bqk,bkd->bqd"}> : () -> ()
    %cst_27 = arith.constant dense<0.000000e+00> : vector<2x64x32xf32>
    %95 = tpu.matmul %94, %82, %cst_27 {dimension_numbers = #tpu.dot_dimension_numbers<[2], [1], [1], [2], [0, 0, 0, 1, 1, 2], [0], [0]>} : vector<2x64x64xbf16>, vector<2x64x32xbf16>, vector<2x64x32xf32> -> vector<2x64x32xf32>
    "tpu.trace_stop"() : () -> ()
    %96 = vector.shape_cast %95 : vector<2x64x32xf32> to vector<128x32xf32>
    %97 = arith.truncf %96 : vector<128x32xf32> to vector<128x32xbf16>
    %98 = vector.extract_strided_slice %27 {offsets = [64, 0], sizes = [32, 128], strides = [1, 1]} : vector<128x128xbf16> to vector<32x128xbf16>
    %cst_28 = arith.constant dense<0.000000e+00> : vector<128x128xf32>
    %99 = tpu.matmul %97, %98, %cst_28 {dimension_numbers = #tpu.dot_dimension_numbers<[1], [0], [0], [1], [0, 0, 1, 1], [], []>} : vector<128x32xbf16>, vector<32x128xbf16>, vector<128x128xf32> -> vector<128x128xf32>
    %100 = arith.addf %76, %99 : vector<128x128xf32>
    %101 = vector.extract_strided_slice %26 {offsets = [0, 96], sizes = [128, 32], strides = [1, 1]} : vector<128x384xbf16> to vector<128x32xbf16>
    %102 = vector.shape_cast %101 : vector<128x32xbf16> to vector<2x64x32xbf16>
    %103 = vector.extract_strided_slice %26 {offsets = [0, 224], sizes = [128, 32], strides = [1, 1]} : vector<128x384xbf16> to vector<128x32xbf16>
    %104 = vector.shape_cast %103 : vector<128x32xbf16> to vector<2x64x32xbf16>
    %105 = vector.extract_strided_slice %26 {offsets = [0, 352], sizes = [128, 32], strides = [1, 1]} : vector<128x384xbf16> to vector<128x32xbf16>
    %106 = vector.shape_cast %105 : vector<128x32xbf16> to vector<2x64x32xbf16>
    "tpu.trace_start"() <{level = 10 : i32, message = "bqd,bkd->bqk"}> : () -> ()
    %cst_29 = arith.constant dense<0.000000e+00> : vector<2x64x64xf32>
    %107 = tpu.matmul %102, %104, %cst_29 {dimension_numbers = #tpu.dot_dimension_numbers<[2], [2], [1], [1], [0, 0, 0, 1, 1, 1], [0], [0]>} : vector<2x64x32xbf16>, vector<2x64x32xbf16>, vector<2x64x64xf32> -> vector<2x64x64xf32>
    "tpu.trace_stop"() : () -> ()
    %cst_30 = arith.constant dense<0xFF800000> : vector<2x64xf32>
    %108 = vector.multi_reduction <maximumf>, %107, %cst_30 [2] : vector<2x64x64xf32> to vector<2x64xf32>
    %109 = vector.shape_cast %108 : vector<2x64xf32> to vector<2x64x1xf32>
    %110 = vector.broadcast %109 : vector<2x64x1xf32> to vector<2x64x64xf32>
    %111 = arith.subf %107, %110 : vector<2x64x64xf32>
    %112 = math.exp %111 : vector<2x64x64xf32>
    %cst_31 = arith.constant dense<0.000000e+00> : vector<2x64xf32>
    %113 = vector.multi_reduction <add>, %112, %cst_31 [2] : vector<2x64x64xf32> to vector<2x64xf32>
    %114 = vector.shape_cast %113 : vector<2x64xf32> to vector<2x64x1xf32>
    %115 = tpu.reciprocal %114 {approx = true} : vector<2x64x1xf32> -> vector<2x64x1xf32>
    %116 = vector.broadcast %115 : vector<2x64x1xf32> to vector<2x64x64xf32>
    %117 = arith.mulf %112, %116 : vector<2x64x64xf32>
    %118 = arith.truncf %117 : vector<2x64x64xf32> to vector<2x64x64xbf16>
    "tpu.trace_start"() <{level = 10 : i32, message = "bqk,bkd->bqd"}> : () -> ()
    %cst_32 = arith.constant dense<0.000000e+00> : vector<2x64x32xf32>
    %119 = tpu.matmul %118, %106, %cst_32 {dimension_numbers = #tpu.dot_dimension_numbers<[2], [1], [1], [2], [0, 0, 0, 1, 1, 2], [0], [0]>} : vector<2x64x64xbf16>, vector<2x64x32xbf16>, vector<2x64x32xf32> -> vector<2x64x32xf32>
    "tpu.trace_stop"() : () -> ()
    %120 = vector.shape_cast %119 : vector<2x64x32xf32> to vector<128x32xf32>
    %121 = arith.truncf %120 : vector<128x32xf32> to vector<128x32xbf16>
    %122 = vector.extract_strided_slice %27 {offsets = [96, 0], sizes = [32, 128], strides = [1, 1]} : vector<128x128xbf16> to vector<32x128xbf16>
    %cst_33 = arith.constant dense<0.000000e+00> : vector<128x128xf32>
    %123 = tpu.matmul %121, %122, %cst_33 {dimension_numbers = #tpu.dot_dimension_numbers<[1], [0], [0], [1], [0, 0, 1, 1], [], []>} : vector<128x32xbf16>, vector<32x128xbf16>, vector<128x128xf32> -> vector<128x128xf32>
    %124 = arith.addf %100, %123 : vector<128x128xf32>
    %125 = arith.addf %1, %124 : vector<128x128xf32>
    %c0_34 = arith.constant 0 : index
    %c0_35 = arith.constant 0 : index
    %126 = vector.load %arg5[%c0_34, %c0_35] : memref<1x128xf32, #tpu.memory_space<vmem>>, vector<1x128xf32>
    %127 = vector.broadcast %126 : vector<1x128xf32> to vector<128x128xf32>
    %128 = arith.addf %125, %127 : vector<128x128xf32>
    %cst_36 = arith.constant dense<0.000000e+00> : vector<128xf32>
    %129 = vector.multi_reduction <add>, %128, %cst_36 [1] : vector<128x128xf32> to vector<128xf32>
    %130 = vector.shape_cast %129 : vector<128xf32> to vector<128x1xf32>
    %cst_37 = arith.constant 1.280000e+02 : f32
    %131 = vector.broadcast %cst_37 : f32 to vector<128x1xf32>
    %132 = arith.divf %130, %131 : vector<128x1xf32>
    %133 = arith.mulf %128, %128 : vector<128x128xf32>
    %cst_38 = arith.constant dense<0.000000e+00> : vector<128xf32>
    %134 = vector.multi_reduction <add>, %133, %cst_38 [1] : vector<128x128xf32> to vector<128xf32>
    %135 = vector.shape_cast %134 : vector<128xf32> to vector<128x1xf32>
    %cst_39 = arith.constant 1.280000e+02 : f32
    %136 = vector.broadcast %cst_39 : f32 to vector<128x1xf32>
    %137 = arith.divf %135, %136 : vector<128x1xf32>
    %138 = arith.mulf %132, %132 : vector<128x1xf32>
    %139 = arith.subf %137, %138 : vector<128x1xf32>
    %140 = vector.broadcast %132 : vector<128x1xf32> to vector<128x128xf32>
    %141 = arith.subf %128, %140 : vector<128x128xf32>
    %cst_40 = arith.constant 9.99999997E-7 : f32
    %142 = vector.broadcast %cst_40 : f32 to vector<128x1xf32>
    %143 = arith.addf %139, %142 : vector<128x1xf32>
    %144 = math.rsqrt %143 : vector<128x1xf32>
    %145 = vector.broadcast %144 : vector<128x1xf32> to vector<128x128xf32>
    %146 = arith.mulf %141, %145 : vector<128x128xf32>
    %147 = arith.truncf %146 : vector<128x128xf32> to vector<128x128xbf16>
    %c0_41 = arith.constant 0 : index
    %c0_42 = arith.constant 0 : index
    %148 = vector.load %arg6[%c0_41, %c0_42] : memref<128x512xbf16, #tpu.memory_space<vmem>>, vector<128x512xbf16>
    %cst_43 = arith.constant dense<0.000000e+00> : vector<128x512xf32>
    %149 = tpu.matmul %147, %148, %cst_43 {dimension_numbers = #tpu.dot_dimension_numbers<[1], [0], [0], [1], [0, 0, 1, 1], [], []>} : vector<128x128xbf16>, vector<128x512xbf16>, vector<128x512xf32> -> vector<128x512xf32>
    %c0_44 = arith.constant 0 : index
    %c0_45 = arith.constant 0 : index
    %150 = vector.load %arg7[%c0_44, %c0_45] : memref<1x512xf32, #tpu.memory_space<vmem>>, vector<1x512xf32>
    %151 = vector.broadcast %150 : vector<1x512xf32> to vector<128x512xf32>
    %152 = arith.addf %149, %151 : vector<128x512xf32>
    %cst_46 = arith.constant 5.000000e-01 : f32
    %153 = vector.broadcast %cst_46 : f32 to vector<128x512xf32>
    %154 = arith.mulf %153, %152 : vector<128x512xf32>
    %155 = arith.mulf %152, %152 : vector<128x512xf32>
    %156 = arith.mulf %155, %152 : vector<128x512xf32>
    %cst_47 = arith.constant 4.471500e-02 : f32
    %157 = vector.broadcast %cst_47 : f32 to vector<128x512xf32>
    %158 = arith.mulf %157, %156 : vector<128x512xf32>
    %159 = arith.addf %152, %158 : vector<128x512xf32>
    %cst_48 = arith.constant 0.797884583 : f32
    %160 = vector.broadcast %cst_48 : f32 to vector<128x512xf32>
    %161 = arith.mulf %160, %159 : vector<128x512xf32>
    %162 = math.tanh %161 : vector<128x512xf32>
    %cst_49 = arith.constant 1.000000e+00 : f32
    %163 = vector.broadcast %cst_49 : f32 to vector<128x512xf32>
    %164 = arith.addf %163, %162 : vector<128x512xf32>
    %165 = arith.mulf %154, %164 : vector<128x512xf32>
    %166 = arith.truncf %165 : vector<128x512xf32> to vector<128x512xbf16>
    %c0_50 = arith.constant 0 : index
    %c0_51 = arith.constant 0 : index
    %167 = vector.load %arg8[%c0_50, %c0_51] : memref<512x128xbf16, #tpu.memory_space<vmem>>, vector<512x128xbf16>
    %cst_52 = arith.constant dense<0.000000e+00> : vector<128x128xf32>
    %168 = tpu.matmul %166, %167, %cst_52 {dimension_numbers = #tpu.dot_dimension_numbers<[1], [0], [0], [1], [0, 0, 1, 1], [], []>} : vector<128x512xbf16>, vector<512x128xbf16>, vector<128x128xf32> -> vector<128x128xf32>
    %c0_53 = arith.constant 0 : index
    %c0_54 = arith.constant 0 : index
    %169 = vector.load %arg9[%c0_53, %c0_54] : memref<1x128xf32, #tpu.memory_space<vmem>>, vector<1x128xf32>
    %170 = vector.broadcast %169 : vector<1x128xf32> to vector<128x128xf32>
    %171 = arith.addf %168, %170 : vector<128x128xf32>
    %172 = arith.addf %128, %171 : vector<128x128xf32>
    %173 = vector.shape_cast %172 : vector<128x128xf32> to vector<2x64x128xf32>
    %c0_55 = arith.constant 0 : index
    %c0_56 = arith.constant 0 : index
    %c0_57 = arith.constant 0 : index
    %174 = vector.load %arg10[%c0_55, %c0_56, %c0_57] : memref<2x64x128xf32, #tpu.memory_space<vmem>>, vector<2x64x128xf32>
    tpu.vector_store %arg10[%c0_55, %c0_56, %c0_57], %173 {strides = array<i32>} : memref<2x64x128xf32, #tpu.memory_space<vmem>>, vector<2x64x128xf32>,
    return
  }
  func.func @transform_0(%arg0: i32) -> (i32, i32, i32) {
    %c0_i32 = arith.constant 0 : i32
    %c0_i32_0 = arith.constant 0 : i32
    %c0_i32_1 = arith.constant 0 : i32
    return %arg0, %c0_i32, %c0_i32_0 : i32, i32, i32
  }
  func.func @transform_1(%arg0: i32) -> (i32, i32) {
    %c0_i32 = arith.constant 0 : i32
    %c0_i32_0 = arith.constant 0 : i32
    %c0_i32_1 = arith.constant 0 : i32
    return %c0_i32, %c0_i32_0 : i32, i32
  }
  func.func @transform_2(%arg0: i32) -> (i32, i32) {
    %c0_i32 = arith.constant 0 : i32
    %c0_i32_0 = arith.constant 0 : i32
    %c0_i32_1 = arith.constant 0 : i32
    return %c0_i32, %c0_i32_0 : i32, i32
  }
  func.func @transform_3(%arg0: i32) -> (i32, i32) {
    %c0_i32 = arith.constant 0 : i32
    %c0_i32_0 = arith.constant 0 : i32
    %c0_i32_1 = arith.constant 0 : i32
    return %c0_i32, %c0_i32_0 : i32, i32
  }
  func.func @transform_4(%arg0: i32) -> (i32, i32) {
    %c0_i32 = arith.constant 0 : i32
    %c0_i32_0 = arith.constant 0 : i32
    %c0_i32_1 = arith.constant 0 : i32
    return %c0_i32, %c0_i32_0 : i32, i32
  }
  func.func @transform_5(%arg0: i32) -> (i32, i32) {
    %c0_i32 = arith.constant 0 : i32
    %c0_i32_0 = arith.constant 0 : i32
    %c0_i32_1 = arith.constant 0 : i32
    return %c0_i32, %c0_i32_0 : i32, i32
  }
  func.func @transform_6(%arg0: i32) -> (i32, i32) {
    %c0_i32 = arith.constant 0 : i32
    %c0_i32_0 = arith.constant 0 : i32
    %c0_i32_1 = arith.constant 0 : i32
    return %c0_i32, %c0_i32_0 : i32, i32
  }
  func.func @transform_7(%arg0: i32) -> (i32, i32) {
    %c0_i32 = arith.constant 0 : i32
    %c0_i32_0 = arith.constant 0 : i32
    %c0_i32_1 = arith.constant 0 : i32
    return %c0_i32, %c0_i32_0 : i32, i32
  }
  func.func @transform_8(%arg0: i32) -> (i32, i32) {
    %c0_i32 = arith.constant 0 : i32
    %c0_i32_0 = arith.constant 0 : i32
    %c0_i32_1 = arith.constant 0 : i32
    return %c0_i32, %c0_i32_0 : i32, i32
  }
  func.func @transform_9(%arg0: i32) -> (i32, i32, i32) {
    %c0_i32 = arith.constant 0 : i32
    %c0_i32_0 = arith.constant 0 : i32
    %c0_i32_1 = arith.constant 0 : i32
    return %arg0, %c0_i32, %c0_i32_0 : i32, i32, i32
  }
}

</mosaic_0001>

<llo_original>
// kernel: tpu_custom_call.1
$region0: #{tpu_custom_call.1}
  #allocation0 [shape = 'u32[]', space=smem, size = 0x4, offset = 0x4, fixed_abs, tag = 'smem constant byte address 0x4 - core index']
  #allocation1 [shape = 'u32[72,128]{1,0:T(1,128)}', space=vmem, size = 0x9000, scoped, tag = 'internal scratch']
  %s0 = inlined_call_operand.hbm [shape: f32[2,64,128], index: 0, kind: input, shape index: {}]
  %s1 = inlined_call_operand.hbm [shape: bf16[128,384], index: 1, kind: input, shape index: {}]
  %s2 = inlined_call_operand.hbm [shape: f32[1,384], index: 2, kind: input, shape index: {}]
  %s3 = inlined_call_operand.hbm [shape: bf16[128,128], index: 3, kind: input, shape index: {}]
  %s4 = inlined_call_operand.vmem [shape: f32[1,128], index: 4, kind: input, shape index: {}]
  %s5 = inlined_call_operand.hbm [shape: bf16[128,512], index: 5, kind: input, shape index: {}]
  %s6 = inlined_call_operand.vmem [shape: f32[1,512], index: 6, kind: input, shape index: {}]
  %s7 = inlined_call_operand.hbm [shape: bf16[512,128], index: 7, kind: input, shape index: {}]
  %s8 = inlined_call_operand.vmem [shape: f32[1,128], index: 8, kind: input, shape index: {}]
  %s9 = inlined_call_operand.hbm [shape: f32[2,64,128], index: 9, kind: output, shape index: {}]
  %s10 = sld [smem:[#allocation0]]
  $region70: #{tpu_custom_call.1} parent=0
    _
  %s12 = ssub.s32 1, %s10
  %s13 = scalar_select 0, %s12, %s10
  $region1: #{tpu_custom_call.1} parent=0
    #allocation2 [shape = 'u8[65536]{0}', space=vmem, size = 0x10000, scoped, tag = 'input window, operand 0, single buffered']
    #allocation3 [shape = 's32[1]{0}', space=sflag, size = 0x4, scoped, tag = 'scoped memory for tpu_custom_call.1']
    #allocation4 [shape = 's32[1]{0}', space=sflag, size = 0x4, scoped, tag = 'scoped memory for tpu_custom_call.1']
    #allocation5 [shape = 'u8[98304]{0}', space=vmem, size = 0x18000, scoped, tag = 'input window, operand 1, single buffered']
    #allocation6 [shape = 's32[1]{0}', space=sflag, size = 0x4, scoped, tag = 'scoped memory for tpu_custom_call.1']
    #allocation7 [shape = 'u8[1536]{0}', space=vmem, size = 0x800, scoped, tag = 'input window, operand 2, single buffered']
    #allocation8 [shape = 'u8[32768]{0}', space=vmem, size = 0x8000, scoped, tag = 'input window, operand 3, single buffered']
    #allocation9 [shape = 's32[1]{0}', space=sflag, size = 0x4, scoped, tag = 'scoped memory for tpu_custom_call.1']
    #allocation10 [shape = 'u8[131072]{0}', space=vmem, size = 0x20000, scoped, tag = 'input window, operand 5, single buffered']
    #allocation11 [shape = 'u8[131072]{0}', space=vmem, size = 0x20000, scoped, tag = 'input window, operand 7, single buffered']
    #allocation12 [shape = 's32[1]{0}', space=sflag, size = 0x4, scoped, tag = 'scoped memory for tpu_custom_call.1']
    #allocation13 [shape = 'u8[65536]{0}', space=vmem, size = 0x10000, scoped, tag = 'output window, operand 0, single buffered']
    %14 = vsyncpa [#allocation3], 0
    %15 = vsyncpa [#allocation6], 0
    %16 = vsyncpa [#allocation9], 0
    %17 = vsyncpa [#allocation12], 0
    %18 = vsyncpa [#allocation4], 0
    // Predicated region
    $region2: #{tpu_custom_call.1} parent=1 // pred_check
      _
    $region3: #{tpu_custom_call.1} parent=1 // pred_check_branch
      %20 = sbr.rel (0) target = $region5
    $region4: #{tpu_custom_call.1} parent=1 // pred_region
      %22 = vsyncadd [#allocation3], 0
      %s23 = sshll.u32 %s0, 4
      %s24 = int_to_ptr.hbm [resolvable:$true] %s23
      %s25 = sshll.u32 [#allocation2], 4
      %s26 = int_to_ptr.vmem [resolvable:$true] %s25
      %31 = dma.hbm_to_vmem [thread:$0]  %s24, 2048, %s26, [#allocation3], 128, 128, 8
    $region5: #{tpu_custom_call.1} parent=1 // pred_fallthru
      _
    // Predicated region
    $region6: #{tpu_custom_call.1} parent=1 // pred_check
      _
    $region7: #{tpu_custom_call.1} parent=1 // pred_check_branch
      %33 = sbr.rel (0) target = $region9
    $region8: #{tpu_custom_call.1} parent=1 // pred_region
      %35 = vsyncadd [#allocation6], 0
      %s36 = sshll.u32 %s1, 4
      %s37 = int_to_ptr.hbm [resolvable:$true] %s36
      %s38 = sshll.u32 [#allocation5], 4
      %s39 = int_to_ptr.vmem [resolvable:$true] %s38
      %44 = dma.hbm_to_vmem [thread:$0]  %s37, 3072, %s39, [#allocation6], 192, 192, 12
    $region9: #{tpu_custom_call.1} parent=1 // pred_fallthru
      _
    // Predicated region
    $region10: #{tpu_custom_call.1} parent=1 // pred_check
      _
    $region11: #{tpu_custom_call.1} parent=1 // pred_check_branch
      %46 = sbr.rel (0) target = $region13
    $region12: #{tpu_custom_call.1} parent=1 // pred_region
      %48 = vsyncadd [#allocation6], 0
      %s50 = sshll.u32 %s2, 4
      %s51 = int_to_ptr.hbm [resolvable:$true] %s50
      %s52 = sshll.u32 [#allocation7], 4
      %s53 = int_to_ptr.vmem [resolvable:$true] %s52
      %55 = dma.hbm_to_vmem [thread:$0]  %s51, 48, %s53, [#allocation6]
    $region13: #{tpu_custom_call.1} parent=1 // pred_fallthru
      _
    // Predicated region
    $region14: #{tpu_custom_call.1} parent=1 // pred_check
      _
    $region15: #{tpu_custom_call.1} parent=1 // pred_check_branch
      %57 = sbr.rel (0) target = $region17
    $region16: #{tpu_custom_call.1} parent=1 // pred_region
      %59 = vsyncadd [#allocation9], 0
      %s60 = sshll.u32 %s3, 4
      %s61 = int_to_ptr.hbm [resolvable:$true] %s60
      %s62 = sshll.u32 [#allocation8], 4
      %s63 = int_to_ptr.vmem [resolvable:$true] %s62
      %68 = dma.hbm_to_vmem [thread:$0]  %s61, 1024, %s63, [#allocation9], 64, 64, 4
    $region17: #{tpu_custom_call.1} parent=1 // pred_fallthru
      _
    // Predicated region
    $region18: #{tpu_custom_call.1} parent=1 // pred_check
      _
    $region19: #{tpu_custom_call.1} parent=1 // pred_check_branch
      %70 = sbr.rel (0) target = $region21
    $region20: #{tpu_custom_call.1} parent=1 // pred_region
      _
    $region21: #{tpu_custom_call.1} parent=1 // pred_fallthru
      _
    // Predicated region
    $region22: #{tpu_custom_call.1} parent=1 // pred_check
      _
    $region23: #{tpu_custom_call.1} parent=1 // pred_check_branch
      %72 = sbr.rel (0) target = $region25
    $region24: #{tpu_custom_call.1} parent=1 // pred_region
      %74 = vsyncadd [#allocation9], 0
      %s75 = sshll.u32 %s5, 4
      %s76 = int_to_ptr.hbm [resolvable:$true] %s75
      %s77 = sshll.u32 [#allocation10], 4
      %s78 = int_to_ptr.vmem [resolvable:$true] %s77
      %83 = dma.hbm_to_vmem [thread:$0]  %s76, 4096, %s78, [#allocation9], 256, 256, 16
    $region25: #{tpu_custom_call.1} parent=1 // pred_fallthru
      _
    // Predicated region
    $region26: #{tpu_custom_call.1} parent=1 // pred_check
      _
    $region27: #{tpu_custom_call.1} parent=1 // pred_check_branch
      %85 = sbr.rel (0) target = $region29
    $region28: #{tpu_custom_call.1} parent=1 // pred_region
      _
    $region29: #{tpu_custom_call.1} parent=1 // pred_fallthru
      _
    // Predicated region
    $region30: #{tpu_custom_call.1} parent=1 // pred_check
      _
    $region31: #{tpu_custom_call.1} parent=1 // pred_check_branch
      %87 = sbr.rel (0) target = $region33
    $region32: #{tpu_custom_call.1} parent=1 // pred_region
      %89 = vsyncadd [#allocation12], 0
      %s90 = sshll.u32 %s7, 4
      %s91 = int_to_ptr.hbm [resolvable:$true] %s90
      %s92 = sshll.u32 [#allocation11], 4
      %s93 = int_to_ptr.vmem [resolvable:$true] %s92
      %98 = dma.hbm_to_vmem [thread:$0]  %s91, 4096, %s93, [#allocation12], 64, 64, 4
    $region33: #{tpu_custom_call.1} parent=1 // pred_fallthru
      _
    // Predicated region
    $region34: #{tpu_custom_call.1} parent=1 // pred_check
      _
    $region35: #{tpu_custom_call.1} parent=1 // pred_check_branch
      %100 = sbr.rel (0) target = $region37
    $region36: #{tpu_custom_call.1} parent=1 // pred_region
      _
    $region37: #{tpu_custom_call.1} parent=1 // pred_fallthru
      _
    // Predicated region
    $region38: #{tpu_custom_call.1} parent=1 // pred_check
      _
    $region39: #{tpu_custom_call.1} parent=1 // pred_check_branch
      %102 = sbr.rel (0) target = $region41
    $region40: #{tpu_custom_call.1} parent=1 // pred_region
      %104 = dma.done [#allocation3], 2048
    $region41: #{tpu_custom_call.1} parent=1 // pred_fallthru
      _
    // Predicated region
    $region42: #{tpu_custom_call.1} parent=1 // pred_check
      _
    $region43: #{tpu_custom_call.1} parent=1 // pred_check_branch
      %106 = sbr.rel (0) target = $region45
    $region44: #{tpu_custom_call.1} parent=1 // pred_region
      %108 = dma.done [#allocation6], 3072
    $region45: #{tpu_custom_call.1} parent=1 // pred_fallthru
      _
    // Predicated region
    $region46: #{tpu_custom_call.1} parent=1 // pred_check
      _
    $region47: #{tpu_custom_call.1} parent=1 // pred_check_branch
      %110 = sbr.rel (0) target = $region49
    $region48: #{tpu_custom_call.1} parent=1 // pred_region
      %112 = dma.done [#allocation6], 48
    $region49: #{tpu_custom_call.1} parent=1 // pred_fallthru
      _
    // Predicated region
    $region50: #{tpu_custom_call.1} parent=1 // pred_check
      _
    $region51: #{tpu_custom_call.1} parent=1 // pred_check_branch
      %114 = sbr.rel (0) target = $region53
    $region52: #{tpu_custom_call.1} parent=1 // pred_region
      %116 = dma.done [#allocation9], 1024
    $region53: #{tpu_custom_call.1} parent=1 // pred_fallthru
      _
    // Predicated region
    $region54: #{tpu_custom_call.1} parent=1 // pred_check
      _
    $region55: #{tpu_custom_call.1} parent=1 // pred_check_branch
      %118 = sbr.rel (0) target = $region57
    $region56: #{tpu_custom_call.1} parent=1 // pred_region
      %120 = dma.done [#allocation9], 4096
    $region57: #{tpu_custom_call.1} parent=1 // pred_fallthru
      _
    // Predicated region
    $region58: #{tpu_custom_call.1} parent=1 // pred_check
      _
    $region59: #{tpu_custom_call.1} parent=1 // pred_check_branch
      %122 = sbr.rel (0) target = $region61
    $region60: #{tpu_custom_call.1} parent=1 // pred_region
      %124 = dma.done [#allocation12], 4096
    $region61: #{tpu_custom_call.1} parent=1 // pred_fallthru
      _
    %v126 = vld [vmem:[#allocation2] sm:$0xff]
    %v127 = vld [vmem:[#allocation2 + $0x8] sm:$0xff]
    %v128 = vld [vmem:[#allocation2 + $0x10] sm:$0xff]
    %v129 = vld [vmem:[#allocation2 + $0x18] sm:$0xff]
    %v130 = vld [vmem:[#allocation2 + $0x20] sm:$0xff]
    %v131 = vld [vmem:[#allocation2 + $0x28] sm:$0xff]
    %v132 = vld [vmem:[#allocation2 + $0x30] sm:$0xff]
    %v133 = vld [vmem:[#allocation2 + $0x38] sm:$0xff]
    %v134 = vld [vmem:[#allocation2 + $0x40] sm:$0xff]
    %v135 = vld [vmem:[#allocation2 + $0x48] sm:$0xff]
    %v136 = vld [vmem:[#allocation2 + $0x50] sm:$0xff]
    %v137 = vld [vmem:[#allocation2 + $0x58] sm:$0xff]
    %v138 = vld [vmem:[#allocation2 + $0x60] sm:$0xff]
    %v139 = vld [vmem:[#allocation2 + $0x68] sm:$0xff]
    %v140 = vld [vmem:[#allocation2 + $0x70] sm:$0xff]
    %v141 = vld [vmem:[#allocation2 + $0x78] sm:$0xff]
    %142 = vadd.xlane.f32.xlu0 %v126
    %v143 = vpop.xlane.xlu0 %142
    %144 = vadd.xlane.f32.xlu0 %v127
    %v145 = vpop.xlane.xlu0 %144
    %146 = vadd.xlane.f32.xlu0 %v128
    %v147 = vpop.xlane.xlu0 %146
    %148 = vadd.xlane.f32.xlu0 %v129
    %v149 = vpop.xlane.xlu0 %148
    %150 = vadd.xlane.f32.xlu0 %v130
    %v151 = vpop.xlane.xlu0 %150
    %152 = vadd.xlane.f32.xlu0 %v131
    %v153 = vpop.xlane.xlu0 %152
    %154 = vadd.xlane.f32.xlu0 %v132
    %v155 = vpop.xlane.xlu0 %154
    %156 = vadd.xlane.f32.xlu0 %v133
    %v157 = vpop.xlane.xlu0 %156
    %158 = vadd.xlane.f32.xlu0 %v134
    %v159 = vpop.xlane.xlu0 %158
    %160 = vadd.xlane.f32.xlu0 %v135
    %v161 = vpop.xlane.xlu0 %160
    %162 = vadd.xlane.f32.xlu0 %v136
    %v163 = vpop.xlane.xlu0 %162
    %164 = vadd.xlane.f32.xlu0 %v137
    %v165 = vpop.xlane.xlu0 %164
    %166 = vadd.xlane.f32.xlu0 %v138
    %v167 = vpop.xlane.xlu0 %166
    %168 = vadd.xlane.f32.xlu0 %v139
    %v169 = vpop.xlane.xlu0 %168
    %170 = vadd.xlane.f32.xlu0 %v140
    %v171 = vpop.xlane.xlu0 %170
    %172 = vadd.xlane.f32.xlu0 %v141
    %v173 = vpop.xlane.xlu0 %172
    %v174 = vrcp.pop 128.0
    %v175 = vmul.f32 128.0, %v174
    %v176 = vsub.f32 1.0, %v175
    %v177 = vmul.f32 %v174, %v176
    %v178 = vadd.f32 %v174, %v177
    %vm179 = vweird.f32 %v174
    %v180 = vsel %vm179, %v174, %v178
    %v181 = vmul.f32 %v143, %v180
    %v182 = vmul.f32 %v145, %v180
    %v183 = vmul.f32 %v147, %v180
    %v184 = vmul.f32 %v149, %v180
    %v185 = vmul.f32 %v151, %v180
    %v186 = vmul.f32 %v153, %v180
    %v187 = vmul.f32 %v155, %v180
    %v188 = vmul.f32 %v157, %v180
    %v189 = vmul.f32 %v159, %v180
    %v190 = vmul.f32 %v161, %v180
    %v191 = vmul.f32 %v163, %v180
    %v192 = vmul.f32 %v165, %v180
    %v193 = vmul.f32 %v167, %v180
    %v194 = vmul.f32 %v169, %v180
    %v195 = vmul.f32 %v171, %v180
    %v196 = vmul.f32 %v173, %v180
    %v197 = vmul.f32 %v126, %v126
    %v198 = vmul.f32 %v127, %v127
    %v199 = vmul.f32 %v128, %v128
    %v200 = vmul.f32 %v129, %v129
    %v201 = vmul.f32 %v130, %v130
    %v202 = vmul.f32 %v131, %v131
    %v203 = vmul.f32 %v132, %v132
    %v204 = vmul.f32 %v133, %v133
    %v205 = vmul.f32 %v134, %v134
    %v206 = vmul.f32 %v135, %v135
    %v207 = vmul.f32 %v136, %v136
    %v208 = vmul.f32 %v137, %v137
    %v209 = vmul.f32 %v138, %v138
    %v210 = vmul.f32 %v139, %v139
    %v211 = vmul.f32 %v140, %v140
    %v212 = vmul.f32 %v141, %v141
    %213 = vadd.xlane.f32.xlu0 %v197
    %v214 = vpop.xlane.xlu0 %213
    %215 = vadd.xlane.f32.xlu0 %v198
    %v216 = vpop.xlane.xlu0 %215
    %217 = vadd.xlane.f32.xlu0 %v199
    %v218 = vpop.xlane.xlu0 %217
    %219 = vadd.xlane.f32.xlu0 %v200
    %v220 = vpop.xlane.xlu0 %219
    %221 = vadd.xlane.f32.xlu0 %v201
    %v222 = vpop.xlane.xlu0 %221
    %223 = vadd.xlane.f32.xlu0 %v202
    %v224 = vpop.xlane.xlu0 %223
    %225 = vadd.xlane.f32.xlu0 %v203
    %v226 = vpop.xlane.xlu0 %225
    %227 = vadd.xlane.f32.xlu0 %v204
    %v228 = vpop.xlane.xlu0 %227
    %229 = vadd.xlane.f32.xlu0 %v205
    %v230 = vpop.xlane.xlu0 %229
    %231 = vadd.xlane.f32.xlu0 %v206
    %v232 = vpop.xlane.xlu0 %231
    %233 = vadd.xlane.f32.xlu0 %v207
    %v234 = vpop.xlane.xlu0 %233
    %235 = vadd.xlane.f32.xlu0 %v208
    %v236 = vpop.xlane.xlu0 %235
    %237 = vadd.xlane.f32.xlu0 %v209
    %v238 = vpop.xlane.xlu0 %237
    %239 = vadd.xlane.f32.xlu0 %v210
    %v240 = vpop.xlane.xlu0 %239
    %241 = vadd.xlane.f32.xlu0 %v211
    %v242 = vpop.xlane.xlu0 %241
    %243 = vadd.xlane.f32.xlu0 %v212
    %v244 = vpop.xlane.xlu0 %243
    %v245 = vmul.f32 %v214, %v180
    %v246 = vmul.f32 %v216, %v180
    %v247 = vmul.f32 %v218, %v180
    %v248 = vmul.f32 %v220, %v180
    %v249 = vmul.f32 %v222, %v180
    %v250 = vmul.f32 %v224, %v180
    %v251 = vmul.f32 %v226, %v180
    %v252 = vmul.f32 %v228, %v180
    %v253 = vmul.f32 %v230, %v180
    %v254 = vmul.f32 %v232, %v180
    %v255 = vmul.f32 %v234, %v180
    %v256 = vmul.f32 %v236, %v180
    %v257 = vmul.f32 %v238, %v180
    %v258 = vmul.f32 %v240, %v180
    %v259 = vmul.f32 %v242, %v180
    %v260 = vmul.f32 %v244, %v180
    %v261 = vmul.f32 %v181, %v181
    %v262 = vmul.f32 %v182, %v182
    %v263 = vmul.f32 %v183, %v183
    %v264 = vmul.f32 %v184, %v184
    %v265 = vmul.f32 %v185, %v185
    %v266 = vmul.f32 %v186, %v186
    %v267 = vmul.f32 %v187, %v187
    %v268 = vmul.f32 %v188, %v188
    %v269 = vmul.f32 %v189, %v189
    %v270 = vmul.f32 %v190, %v190
    %v271 = vmul.f32 %v191, %v191
    %v272 = vmul.f32 %v192, %v192
    %v273 = vmul.f32 %v193, %v193
    %v274 = vmul.f32 %v194, %v194
    %v275 = vmul.f32 %v195, %v195
    %v276 = vmul.f32 %v196, %v196
    %v277 = vsub.f32 %v245, %v261
    %v278 = vsub.f32 %v246, %v262
    %v279 = vsub.f32 %v247, %v263
    %v280 = vsub.f32 %v248, %v264
    %v281 = vsub.f32 %v249, %v265
    %v282 = vsub.f32 %v250, %v266
    %v283 = vsub.f32 %v251, %v267
    %v284 = vsub.f32 %v252, %v268
    %v285 = vsub.f32 %v253, %v269
    %v286 = vsub.f32 %v254, %v270
    %v287 = vsub.f32 %v255, %v271
    %v288 = vsub.f32 %v256, %v272
    %v289 = vsub.f32 %v257, %v273
    %v290 = vsub.f32 %v258, %v274
    %v291 = vsub.f32 %v259, %v275
    %v292 = vsub.f32 %v260, %v276
    %v293 = vsub.f32 %v126, %v181
    %v294 = vsub.f32 %v127, %v182
    %v295 = vsub.f32 %v128, %v183
    %v296 = vsub.f32 %v129, %v184
    %v297 = vsub.f32 %v130, %v185
    %v298 = vsub.f32 %v131, %v186
    %v299 = vsub.f32 %v132, %v187
    %v300 = vsub.f32 %v133, %v188
    %v301 = vsub.f32 %v134, %v189
    %v302 = vsub.f32 %v135, %v190
    %v303 = vsub.f32 %v136, %v191
    %v304 = vsub.f32 %v137, %v192
    %v305 = vsub.f32 %v138, %v193
    %v306 = vsub.f32 %v139, %v194
    %v307 = vsub.f32 %v140, %v195
    %v308 = vsub.f32 %v141, %v196
    %v309 = vadd.f32 %v277, 1e-06
    %v310 = vadd.f32 %v278, 1e-06
    %v311 = vadd.f32 %v279, 1e-06
    %v312 = vadd.f32 %v280, 1e-06
    %v313 = vadd.f32 %v281, 1e-06
    %v314 = vadd.f32 %v282, 1e-06
    %v315 = vadd.f32 %v283, 1e-06
    %v316 = vadd.f32 %v284, 1e-06
    %v317 = vadd.f32 %v285, 1e-06
    %v318 = vadd.f32 %v286, 1e-06
    %v319 = vadd.f32 %v287, 1e-06
    %v320 = vadd.f32 %v288, 1e-06
    %v321 = vadd.f32 %v289, 1e-06
    %v322 = vadd.f32 %v290, 1e-06
    %v323 = vadd.f32 %v291, 1e-06
    %v324 = vadd.f32 %v292, 1e-06
    %v325 = vrsqrt.pop %v309
    %v326 = vmul.f32 %v325, %v309
    %v327 = vmul.f32 %v326, %v325
    %v328 = vmul.f32 0.5, %v327
    %v329 = vsub.f32 1.5, %v328
    %v330 = vmul.f32 %v325, %v329
    %vm331 = vweird.f32 %v309
    %vm332 = vweird.f32 %v325
    %vm333 = vmor %vm331, %vm332
    %v334 = vsel %vm333, %v325, %v330
    %v335 = vrsqrt.pop %v310
    %v336 = vmul.f32 %v335, %v310
    %v337 = vmul.f32 %v336, %v335
    %v338 = vmul.f32 0.5, %v337
    %v339 = vsub.f32 1.5, %v338
    %v340 = vmul.f32 %v335, %v339
    %vm341 = vweird.f32 %v310
    %vm342 = vweird.f32 %v335
    %vm343 = vmor %vm341, %vm342
    %v344 = vsel %vm343, %v335, %v340
    %v345 = vrsqrt.pop %v311
    %v346 = vmul.f32 %v345, %v311
    %v347 = vmul.f32 %v346, %v345
    %v348 = vmul.f32 0.5, %v347
    %v349 = vsub.f32 1.5, %v348
    %v350 = vmul.f32 %v345, %v349
    %vm351 = vweird.f32 %v311
    %vm352 = vweird.f32 %v345
    %vm353 = vmor %vm351, %vm352
    %v354 = vsel %vm353, %v345, %v350
    %v355 = vrsqrt.pop %v312
    %v356 = vmul.f32 %v355, %v312
    %v357 = vmul.f32 %v356, %v355
    %v358 = vmul.f32 0.5, %v357
    %v359 = vsub.f32 1.5, %v358
    %v360 = vmul.f32 %v355, %v359
    %vm361 = vweird.f32 %v312
    %vm362 = vweird.f32 %v355
    %vm363 = vmor %vm361, %vm362
    %v364 = vsel %vm363, %v355, %v360
    %v365 = vrsqrt.pop %v313
    %v366 = vmul.f32 %v365, %v313
    %v367 = vmul.f32 %v366, %v365
    %v368 = vmul.f32 0.5, %v367
    %v369 = vsub.f32 1.5, %v368
    %v370 = vmul.f32 %v365, %v369
    %vm371 = vweird.f32 %v313
    %vm372 = vweird.f32 %v365
    %vm373 = vmor %vm371, %vm372
    %v374 = vsel %vm373, %v365, %v370
    %v375 = vrsqrt.pop %v314
    %v376 = vmul.f32 %v375, %v314
    %v377 = vmul.f32 %v376, %v375
    %v378 = vmul.f32 0.5, %v377
    %v379 = vsub.f32 1.5, %v378
    %v380 = vmul.f32 %v375, %v379
    %vm381 = vweird.f32 %v314
    %vm382 = vweird.f32 %v375
    %vm383 = vmor %vm381, %vm382
    %v384 = vsel %vm383, %v375, %v380
    %v385 = vrsqrt.pop %v315
    %v386 = vmul.f32 %v385, %v315
    %v387 = vmul.f32 %v386, %v385
    %v388 = vmul.f32 0.5, %v387
    %v389 = vsub.f32 1.5, %v388
    %v390 = vmul.f32 %v385, %v389
    %vm391 = vweird.f32 %v315
    %vm392 = vweird.f32 %v385
    %vm393 = vmor %vm391, %vm392
    %v394 = vsel %vm393, %v385, %v390
    %v395 = vrsqrt.pop %v316
    %v396 = vmul.f32 %v395, %v316
    %v397 = vmul.f32 %v396, %v395
    %v398 = vmul.f32 0.5, %v397
    %v399 = vsub.f32 1.5, %v398
    %v400 = vmul.f32 %v395, %v399
    %vm401 = vweird.f32 %v316
    %vm402 = vweird.f32 %v395
    %vm403 = vmor %vm401, %vm402
    %v404 = vsel %vm403, %v395, %v400
    %v405 = vrsqrt.pop %v317
    %v406 = vmul.f32 %v405, %v317
    %v407 = vmul.f32 %v406, %v405
    %v408 = vmul.f32 0.5, %v407
    %v409 = vsub.f32 1.5, %v408
    %v410 = vmul.f32 %v405, %v409
    %vm411 = vweird.f32 %v317
    %vm412 = vweird.f32 %v405
    %vm413 = vmor %vm411, %vm412
    %v414 = vsel %vm413, %v405, %v410
    %v415 = vrsqrt.pop %v318
    %v416 = vmul.f32 %v415, %v318
    %v417 = vmul.f32 %v416, %v415
    %v418 = vmul.f32 0.5, %v417
    %v419 = vsub.f32 1.5, %v418
    %v420 = vmul.f32 %v415, %v419
    %vm421 = vweird.f32 %v318
    %vm422 = vweird.f32 %v415
    %vm423 = vmor %vm421, %vm422
    %v424 = vsel %vm423, %v415, %v420
    %v425 = vrsqrt.pop %v319
    %v426 = vmul.f32 %v425, %v319
    %v427 = vmul.f32 %v426, %v425
    %v428 = vmul.f32 0.5, %v427
    %v429 = vsub.f32 1.5, %v428
    %v430 = vmul.f32 %v425, %v429
    %vm431 = vweird.f32 %v319
    %vm432 = vweird.f32 %v425
    %vm433 = vmor %vm431, %vm432
    %v434 = vsel %vm433, %v425, %v430
    %v435 = vrsqrt.pop %v320
    %v436 = vmul.f32 %v435, %v320
    %v437 = vmul.f32 %v436, %v435
    %v438 = vmul.f32 0.5, %v437
    %v439 = vsub.f32 1.5, %v438
    %v440 = vmul.f32 %v435, %v439
    %vm441 = vweird.f32 %v320
    %vm442 = vweird.f32 %v435
    %vm443 = vmor %vm441, %vm442
    %v444 = vsel %vm443, %v435, %v440
    %v445 = vrsqrt.pop %v321
    %v446 = vmul.f32 %v445, %v321
    %v447 = vmul.f32 %v446, %v445
    %v448 = vmul.f32 0.5, %v447
    %v449 = vsub.f32 1.5, %v448
    %v450 = vmul.f32 %v445, %v449
    %vm451 = vweird.f32 %v321
    %vm452 = vweird.f32 %v445
    %vm453 = vmor %vm451, %vm452
    %v454 = vsel %vm453, %v445, %v450
    %v455 = vrsqrt.pop %v322
    %v456 = vmul.f32 %v455, %v322
    %v457 = vmul.f32 %v456, %v455
    %v458 = vmul.f32 0.5, %v457
    %v459 = vsub.f32 1.5, %v458
    %v460 = vmul.f32 %v455, %v459
    %vm461 = vweird.f32 %v322
    %vm462 = vweird.f32 %v455
    %vm463 = vmor %vm461, %vm462
    %v464 = vsel %vm463, %v455, %v460
    %v465 = vrsqrt.pop %v323
    %v466 = vmul.f32 %v465, %v323
    %v467 = vmul.f32 %v466, %v465
    %v468 = vmul.f32 0.5, %v467
    %v469 = vsub.f32 1.5, %v468
    %v470 = vmul.f32 %v465, %v469
    %vm471 = vweird.f32 %v323
    %vm472 = vweird.f32 %v465
    %vm473 = vmor %vm471, %vm472
    %v474 = vsel %vm473, %v465, %v470
    %v475 = vrsqrt.pop %v324
    %v476 = vmul.f32 %v475, %v324
    %v477 = vmul.f32 %v476, %v475
    %v478 = vmul.f32 0.5, %v477
    %v479 = vsub.f32 1.5, %v478
    %v480 = vmul.f32 %v475, %v479
    %vm481 = vweird.f32 %v324
    %vm482 = vweird.f32 %v475
    %vm483 = vmor %vm481, %vm482
    %v484 = vsel %vm483, %v475, %v480
    %v485 = vmul.f32 %v293, %v334
    %v486 = vmul.f32 %v294, %v344
    %v487 = vmul.f32 %v295, %v354
    %v488 = vmul.f32 %v296, %v364
    %v489 = vmul.f32 %v297, %v374
    %v490 = vmul.f32 %v298, %v384
    %v491 = vmul.f32 %v299, %v394
    %v492 = vmul.f32 %v300, %v404
    %v493 = vmul.f32 %v301, %v414
    %v494 = vmul.f32 %v302, %v424
    %v495 = vmul.f32 %v303, %v434
    %v496 = vmul.f32 %v304, %v444
    %v497 = vmul.f32 %v305, %v454
    %v498 = vmul.f32 %v306, %v464
    %v499 = vmul.f32 %v307, %v474
    %v500 = vmul.f32 %v308, %v484
    %v501 = vpack.c.bf16 %v486, %v485
    %v502 = vpack.c.bf16 %v488, %v487
    %v503 = vpack.c.bf16 %v490, %v489
    %v504 = vpack.c.bf16 %v492, %v491
    %v505 = vpack.c.bf16 %v494, %v493
    %v506 = vpack.c.bf16 %v496, %v495
    %v507 = vpack.c.bf16 %v498, %v497
    %v508 = vpack.c.bf16 %v500, %v499
    %v509 = vld [vmem:[#allocation5] sm:$0xff]
    %v510 = vld [vmem:[#allocation5 + $0x8] sm:$0xf]
    %v511 = vld [vmem:[#allocation5 + $0xc] sm:$0xff]
    %v512 = vld [vmem:[#allocation5 + $0x14] sm:$0xf]
    %v513 = vld [vmem:[#allocation5 + $0x18] sm:$0xff]
    %v514 = vld [vmem:[#allocation5 + $0x20] sm:$0xf]
    %v515 = vld [vmem:[#allocation5 + $0x24] sm:$0xff]
    %v516 = vld [vmem:[#allocation5 + $0x2c] sm:$0xf]
    %v517 = vld [vmem:[#allocation5 + $0x30] sm:$0xff]
    %v518 = vld [vmem:[#allocation5 + $0x38] sm:$0xf]
    %v519 = vld [vmem:[#allocation5 + $0x3c] sm:$0xff]
    %v520 = vld [vmem:[#allocation5 + $0x44] sm:$0xf]
    %v521 = vld [vmem:[#allocation5 + $0x48] sm:$0xff]
    %v522 = vld [vmem:[#allocation5 + $0x50] sm:$0xf]
    %v523 = vld [vmem:[#allocation5 + $0x54] sm:$0xff]
    %v524 = vld [vmem:[#allocation5 + $0x5c] sm:$0xf]
    %v525 = vld [vmem:[#allocation5 + $0x60] sm:$0xff]
    %v526 = vld [vmem:[#allocation5 + $0x68] sm:$0xf]
    %v527 = vld [vmem:[#allocation5 + $0x6c] sm:$0xff]
    %v528 = vld [vmem:[#allocation5 + $0x74] sm:$0xf]
    %v529 = vld [vmem:[#allocation5 + $0x78] sm:$0xff]
    %v530 = vld [vmem:[#allocation5 + $0x80] sm:$0xf]
    %v531 = vld [vmem:[#allocation5 + $0x84] sm:$0xff]
    %v532 = vld [vmem:[#allocation5 + $0x8c] sm:$0xf]
    %v533 = vld [vmem:[#allocation5 + $0x90] sm:$0xff]
    %v534 = vld [vmem:[#allocation5 + $0x98] sm:$0xf]
    %v535 = vld [vmem:[#allocation5 + $0x9c] sm:$0xff]
    %v536 = vld [vmem:[#allocation5 + $0xa4] sm:$0xf]
    %v537 = vld [vmem:[#allocation5 + $0xa8] sm:$0xff]
    %v538 = vld [vmem:[#allocation5 + $0xb0] sm:$0xf]
    %v539 = vld [vmem:[#allocation5 + $0xb4] sm:$0xff]
    %v540 = vld [vmem:[#allocation5 + $0xbc] sm:$0xf]
    %v541 = vld [vmem:[#allocation7] sm:$0x7]
    %v543 = vperm.slane %v541, 0
    %v544 = vperm.slane %v541, 1
    %v545 = vperm.slane %v541, 2
    %v581 = vunpack.c.l.b16 %v509
    %v582 = vunpack.c.h.b16 %v509
    %v583 = vunpack.c.l.b16 %v510
    %v584 = vunpack.c.l.b16 %v511
    %v585 = vunpack.c.h.b16 %v511
    %v586 = vunpack.c.l.b16 %v512
    %v587 = vunpack.c.l.b16 %v513
    %v588 = vunpack.c.h.b16 %v513
    %v589 = vunpack.c.l.b16 %v514
    %v590 = vunpack.c.l.b16 %v515
    %v591 = vunpack.c.h.b16 %v515
    %v592 = vunpack.c.l.b16 %v516
    %v593 = vunpack.c.l.b16 %v517
    %v594 = vunpack.c.h.b16 %v517
    %v595 = vunpack.c.l.b16 %v518
    %v596 = vunpack.c.l.b16 %v519
    %v597 = vunpack.c.h.b16 %v519
    %v598 = vunpack.c.l.b16 %v520
    %v599 = vunpack.c.l.b16 %v521
    %v600 = vunpack.c.h.b16 %v521
    %v601 = vunpack.c.l.b16 %v522
    %v602 = vunpack.c.l.b16 %v523
    %v603 = vunpack.c.h.b16 %v523
    %v604 = vunpack.c.l.b16 %v524
    %v605 = vunpack.c.l.b16 %v525
    %v606 = vunpack.c.h.b16 %v525
    %v607 = vunpack.c.l.b16 %v526
    %v608 = vunpack.c.l.b16 %v527
    %v609 = vunpack.c.h.b16 %v527
    %v610 = vunpack.c.l.b16 %v528
    %v611 = vunpack.c.l.b16 %v529
    %v612 = vunpack.c.h.b16 %v529
    %v613 = vunpack.c.l.b16 %v530
    %v614 = vunpack.c.l.b16 %v531
    %v615 = vunpack.c.h.b16 %v531
    %v616 = vunpack.c.l.b16 %v532
    %v617 = vunpack.c.l.b16 %v533
    %v618 = vunpack.c.h.b16 %v533
    %v619 = vunpack.c.l.b16 %v534
    %v620 = vunpack.c.l.b16 %v535
    %v621 = vunpack.c.h.b16 %v535
    %v622 = vunpack.c.l.b16 %v536
    %v623 = vunpack.c.l.b16 %v537
    %v624 = vunpack.c.h.b16 %v537
    %v625 = vunpack.c.l.b16 %v538
    %v626 = vunpack.c.l.b16 %v539
    %v627 = vunpack.c.h.b16 %v539
    %v628 = vunpack.c.l.b16 %v540
    %v629 = vpack.c.b16 %v584, %v581
    %v630 = vpack.c.b16 %v585, %v582
    %v631 = vpack.c.b16 %v586, %v583
    %v632 = vpack.c.b16 %v590, %v587
    %v633 = vpack.c.b16 %v591, %v588
    %v634 = vpack.c.b16 %v592, %v589
    %v635 = vpack.c.b16 %v596, %v593
    %v636 = vpack.c.b16 %v597, %v594
    %v637 = vpack.c.b16 %v598, %v595
    %v638 = vpack.c.b16 %v602, %v599
    %v639 = vpack.c.b16 %v603, %v600
    %v640 = vpack.c.b16 %v604, %v601
    %v641 = vpack.c.b16 %v608, %v605
    %v642 = vpack.c.b16 %v609, %v606
    %v643 = vpack.c.b16 %v610, %v607
    %v644 = vpack.c.b16 %v614, %v611
    %v645 = vpack.c.b16 %v615, %v612
    %v646 = vpack.c.b16 %v616, %v613
    %v647 = vpack.c.b16 %v620, %v617
    %v648 = vpack.c.b16 %v621, %v618
    %v649 = vpack.c.b16 %v622, %v619
    %v650 = vpack.c.b16 %v626, %v623
    %v651 = vpack.c.b16 %v627, %v624
    %v652 = vpack.c.b16 %v628, %v625
    %677 = vmatpush.bf16.msra.mxu0 %v650
    %678 = vmatpush.bf16.msra.mxu0 %v647
    %679 = vmatpush.bf16.msra.mxu0 %v644
    %680 = vmatpush.bf16.msra.mxu0 %v641
    %681 = vmatpush.bf16.msra.mxu0 %v638
    %682 = vmatpush.bf16.msra.mxu0 %v635
    %683 = vmatpush.bf16.msra.mxu0 %v632
    %684 = vmatpush.bf16.msra.mxu0 %v629
    %685 = vmatmul.bf16.gmra.mxu0 %v501
    %v686 = vpop.f32.mrf.mxu0
    %v687 = vadd.f32 %v543, %v686
    %v688 = vpop.f32.mrf.mxu0
    %v689 = vadd.f32 %v543, %v688
    %690 = vmatmul.bf16.gmra.mxu0 %v502
    %v691 = vpop.f32.mrf.mxu0
    %v692 = vadd.f32 %v543, %v691
    %v693 = vpop.f32.mrf.mxu0
    %v694 = vadd.f32 %v543, %v693
    %695 = vmatmul.bf16.gmra.mxu0 %v503
    %v696 = vpop.f32.mrf.mxu0
    %v697 = vadd.f32 %v543, %v696
    %v698 = vpop.f32.mrf.mxu0
    %v699 = vadd.f32 %v543, %v698
    %700 = vmatmul.bf16.gmra.mxu0 %v504
    %v701 = vpop.f32.mrf.mxu0
    %v702 = vadd.f32 %v543, %v701
    %v703 = vpop.f32.mrf.mxu0
    %v704 = vadd.f32 %v543, %v703
    %705 = vmatmul.bf16.gmra.mxu0 %v505
    %v706 = vpop.f32.mrf.mxu0
    %v707 = vadd.f32 %v543, %v706
    %v708 = vpop.f32.mrf.mxu0
    %v709 = vadd.f32 %v543, %v708
    %710 = vmatmul.bf16.gmra.mxu0 %v506
    %v711 = vpop.f32.mrf.mxu0
    %v712 = vadd.f32 %v543, %v711
    %v713 = vpop.f32.mrf.mxu0
    %v714 = vadd.f32 %v543, %v713
    %715 = vmatmul.bf16.gmra.mxu0 %v507
    %v716 = vpop.f32.mrf.mxu0
    %v717 = vadd.f32 %v543, %v716
    %v718 = vpop.f32.mrf.mxu0
    %v719 = vadd.f32 %v543, %v718
    %720 = vmatmul.bf16.gmra.mxu0 %v508
    %v721 = vpop.f32.mrf.mxu0
    %v722 = vadd.f32 %v543, %v721
    %v723 = vpop.f32.mrf.mxu0
    %v724 = vadd.f32 %v543, %v723
    %725 = vdwg.mxu0
    %726 = vmatpush.bf16.msra.mxu0 %v651
    %727 = vmatpush.bf16.msra.mxu0 %v648
    %728 = vmatpush.bf16.msra.mxu0 %v645
    %729 = vmatpush.bf16.msra.mxu0 %v642
    %730 = vmatpush.bf16.msra.mxu0 %v639
    %731 = vmatpush.bf16.msra.mxu0 %v636
    %732 = vmatpush.bf16.msra.mxu0 %v633
    %733 = vmatpush.bf16.msra.mxu0 %v630
    %734 = vmatmul.bf16.gmra.mxu0 %v501
    %v735 = vpop.f32.mrf.mxu0
    %v736 = vadd.f32 %v544, %v735
    %v737 = vpop.f32.mrf.mxu0
    %v738 = vadd.f32 %v544, %v737
    %739 = vmatmul.bf16.gmra.mxu0 %v502
    %v740 = vpop.f32.mrf.mxu0
    %v741 = vadd.f32 %v544, %v740
    %v742 = vpop.f32.mrf.mxu0
    %v743 = vadd.f32 %v544, %v742
    %744 = vmatmul.bf16.gmra.mxu0 %v503
    %v745 = vpop.f32.mrf.mxu0
    %v746 = vadd.f32 %v544, %v745
    %v747 = vpop.f32.mrf.mxu0
    %v748 = vadd.f32 %v544, %v747
    %749 = vmatmul.bf16.gmra.mxu0 %v504
    %v750 = vpop.f32.mrf.mxu0
    %v751 = vadd.f32 %v544, %v750
    %v752 = vpop.f32.mrf.mxu0
    %v753 = vadd.f32 %v544, %v752
    %754 = vmatmul.bf16.gmra.mxu0 %v505
    %v755 = vpop.f32.mrf.mxu0
    %v756 = vadd.f32 %v544, %v755
    %v757 = vpop.f32.mrf.mxu0
    %v758 = vadd.f32 %v544, %v757
    %759 = vmatmul.bf16.gmra.mxu0 %v506
    %v760 = vpop.f32.mrf.mxu0
    %v761 = vadd.f32 %v544, %v760
    %v762 = vpop.f32.mrf.mxu0
    %v763 = vadd.f32 %v544, %v762
    %764 = vmatmul.bf16.gmra.mxu0 %v507
    %v765 = vpop.f32.mrf.mxu0
    %v766 = vadd.f32 %v544, %v765
    %v767 = vpop.f32.mrf.mxu0
    %v768 = vadd.f32 %v544, %v767
    %769 = vmatmul.bf16.gmra.mxu0 %v508
    %v770 = vpop.f32.mrf.mxu0
    %v771 = vadd.f32 %v544, %v770
    %v772 = vpop.f32.mrf.mxu0
    %v773 = vadd.f32 %v544, %v772
    %774 = vdwg.mxu0
    %775 = vmatpush.bf16.msra.mxu0 %v652
    %776 = vmatpush.bf16.msra.mxu0 %v649
    %777 = vmatpush.bf16.msra.mxu0 %v646
    %778 = vmatpush.bf16.msra.mxu0 %v643
    %779 = vmatpush.bf16.msra.mxu0 %v640
    %780 = vmatpush.bf16.msra.mxu0 %v637
    %781 = vmatpush.bf16.msra.mxu0 %v634
    %782 = vmatpush.bf16.msra.mxu0 %v631
    %783 = vmatmul.bf16.gmra.mxu0 %v501
    %v784 = vpop.f32.mrf.mxu0
    %v785 = vadd.f32 %v545, %v784
    %v786 = vpop.f32.mrf.mxu0
    %v787 = vadd.f32 %v545, %v786
    %788 = vmatmul.bf16.gmra.mxu0 %v502
    %v789 = vpop.f32.mrf.mxu0
    %v790 = vadd.f32 %v545, %v789
    %v791 = vpop.f32.mrf.mxu0
    %v792 = vadd.f32 %v545, %v791
    %793 = vmatmul.bf16.gmra.mxu0 %v503
    %v794 = vpop.f32.mrf.mxu0
    %v795 = vadd.f32 %v545, %v794
    %v796 = vpop.f32.mrf.mxu0
    %v797 = vadd.f32 %v545, %v796
    %798 = vmatmul.bf16.gmra.mxu0 %v504
    %v799 = vpop.f32.mrf.mxu0
    %v800 = vadd.f32 %v545, %v799
    %v801 = vpop.f32.mrf.mxu0
    %v802 = vadd.f32 %v545, %v801
    %803 = vmatmul.bf16.gmra.mxu0 %v505
    %v804 = vpop.f32.mrf.mxu0
    %v805 = vadd.f32 %v545, %v804
    %v806 = vpop.f32.mrf.mxu0
    %v807 = vadd.f32 %v545, %v806
    %808 = vmatmul.bf16.gmra.mxu0 %v506
    %v809 = vpop.f32.mrf.mxu0
    %v810 = vadd.f32 %v545, %v809
    %v811 = vpop.f32.mrf.mxu0
    %v812 = vadd.f32 %v545, %v811
    %813 = vmatmul.bf16.gmra.mxu0 %v507
    %v814 = vpop.f32.mrf.mxu0
    %v815 = vadd.f32 %v545, %v814
    %v816 = vpop.f32.mrf.mxu0
    %v817 = vadd.f32 %v545, %v816
    %818 = vmatmul.bf16.gmra.mxu0 %v508
    %v819 = vpop.f32.mrf.mxu0
    %v820 = vadd.f32 %v545, %v819
    %v821 = vpop.f32.mrf.mxu0
    %v822 = vadd.f32 %v545, %v821
    %823 = vdwg.mxu0
    %v824 = vpack.c.bf16 %v736, %v687
    %v825 = vpack.c.bf16 %v785, %v785
    %v826 = vpack.c.bf16 %v738, %v689
    %v827 = vpack.c.bf16 %v787, %v787
    %v828 = vpack.c.bf16 %v741, %v692
    %v829 = vpack.c.bf16 %v790, %v790
    %v830 = vpack.c.bf16 %v743, %v694
    %v831 = vpack.c.bf16 %v792, %v792
    %v832 = vpack.c.bf16 %v746, %v697
    %v833 = vpack.c.bf16 %v795, %v795
    %v834 = vpack.c.bf16 %v748, %v699
    %v835 = vpack.c.bf16 %v797, %v797
    %v836 = vpack.c.bf16 %v751, %v702
    %v837 = vpack.c.bf16 %v800, %v800
    %v838 = vpack.c.bf16 %v753, %v704
    %v839 = vpack.c.bf16 %v802, %v802
    %v840 = vpack.c.bf16 %v756, %v707
    %v841 = vpack.c.bf16 %v805, %v805
    %v842 = vpack.c.bf16 %v758, %v709
    %v843 = vpack.c.bf16 %v807, %v807
    %v844 = vpack.c.bf16 %v761, %v712
    %v845 = vpack.c.bf16 %v810, %v810
    %v846 = vpack.c.bf16 %v763, %v714
    %v847 = vpack.c.bf16 %v812, %v812
    %v848 = vpack.c.bf16 %v766, %v717
    %v849 = vpack.c.bf16 %v815, %v815
    %v850 = vpack.c.bf16 %v768, %v719
    %v851 = vpack.c.bf16 %v817, %v817
    %v852 = vpack.c.bf16 %v771, %v722
    %v853 = vpack.c.bf16 %v820, %v820
    %v854 = vpack.c.bf16 %v773, %v724
    %v855 = vpack.c.bf16 %v822, %v822
    %v856 = vld [vmem:[#allocation8] sm:$0xf]
    %v857 = vld [vmem:[#allocation8 + $0x4] sm:$0xf]
    %v858 = vld [vmem:[#allocation8 + $0x8] sm:$0xf]
    %v859 = vld [vmem:[#allocation8 + $0xc] sm:$0xf]
    %v860 = vld [vmem:[#allocation8 + $0x10] sm:$0xf]
    %v861 = vld [vmem:[#allocation8 + $0x14] sm:$0xf]
    %v862 = vld [vmem:[#allocation8 + $0x18] sm:$0xf]
    %v863 = vld [vmem:[#allocation8 + $0x1c] sm:$0xf]
    %v864 = vld [vmem:[#allocation8 + $0x20] sm:$0xf]
    %v865 = vld [vmem:[#allocation8 + $0x24] sm:$0xf]
    %v866 = vld [vmem:[#allocation8 + $0x28] sm:$0xf]
    %v867 = vld [vmem:[#allocation8 + $0x2c] sm:$0xf]
    %v868 = vld [vmem:[#allocation8 + $0x30] sm:$0xf]
    %v869 = vld [vmem:[#allocation8 + $0x34] sm:$0xf]
    %v870 = vld [vmem:[#allocation8 + $0x38] sm:$0xf]
    %v871 = vld [vmem:[#allocation8 + $0x3c] sm:$0xf]
    %v888 = vrot.slane %v824, 4
    %v889 = vrot.slane %v826, 4
    %v890 = vrot.slane %v828, 4
    %v891 = vrot.slane %v830, 4
    %v892 = vrot.slane %v832, 4
    %v893 = vrot.slane %v834, 4
    %v894 = vrot.slane %v836, 4
    %v895 = vrot.slane %v838, 4
    %v896 = vrot.slane %v840, 4
    %v897 = vrot.slane %v842, 4
    %v898 = vrot.slane %v844, 4
    %v899 = vrot.slane %v846, 4
    %v900 = vrot.slane %v848, 4
    %v901 = vrot.slane %v850, 4
    %v902 = vrot.slane %v852, 4
    %v903 = vrot.slane %v854, 4
    %v904 = vunpack.c.l.b16 %v824
    %v905 = vunpack.c.l.b16 %v826
    %v906 = vunpack.c.l.b16 %v828
    %v907 = vunpack.c.l.b16 %v830
    %v908 = vunpack.c.l.b16 %v832
    %v909 = vunpack.c.l.b16 %v834
    %v910 = vunpack.c.l.b16 %v836
    %v911 = vunpack.c.l.b16 %v838
    %v912 = vpack.c.b16 %v905, %v904
    %v913 = vpack.c.b16 %v907, %v906
    %v914 = vpack.c.b16 %v909, %v908
    %v915 = vpack.c.b16 %v911, %v910
    %v916 = vunpack.c.l.b16 %v888
    %v917 = vunpack.c.l.b16 %v889
    %v918 = vunpack.c.l.b16 %v890
    %v919 = vunpack.c.l.b16 %v891
    %v920 = vunpack.c.l.b16 %v892
    %v921 = vunpack.c.l.b16 %v893
    %v922 = vunpack.c.l.b16 %v894
    %v923 = vunpack.c.l.b16 %v895
    %v924 = vpack.c.b16 %v917, %v916
    %v925 = vpack.c.b16 %v919, %v918
    %v926 = vpack.c.b16 %v921, %v920
    %v927 = vpack.c.b16 %v923, %v922
    %vm928 = vcmask 261120
    %v930 = vsel %vm928, %v912, 0
    %v933 = vsel %vm928, %v913, 0
    %v936 = vsel %vm928, %v914, 0
    %v939 = vsel %vm928, %v915, 0
    %v942 = vsel %vm928, %v924, 0
    %v945 = vsel %vm928, %v925, 0
    %v948 = vsel %vm928, %v926, 0
    %v951 = vsel %vm928, %v927, 0
    %953 = vmatpush.bf16.xpose.msra.mxu0 0
    %954 = vmatpush.bf16.xpose.msra.mxu0 0
    %955 = vmatpush.bf16.xpose.msra.mxu0 0
    %956 = vmatpush.bf16.xpose.msra.mxu0 0
    %957 = vmatpush.bf16.xpose.msra.mxu0 %v951
    %958 = vmatpush.bf16.xpose.msra.mxu0 %v948
    %959 = vmatpush.bf16.xpose.msra.mxu0 %v945
    %960 = vmatpush.bf16.xpose.msra.mxu0 %v942
    %961 = vmatmul.bf16.gmra.mxu0 %v930
    %v962 = vpop.f32.mrf.mxu0
    %v963 = vadd.f32 0.0, %v962
    %v964 = vpop.f32.mrf.mxu0
    %v965 = vadd.f32 0.0, %v964
    %966 = vmatmul.bf16.gmra.mxu0 %v933
    %v967 = vpop.f32.mrf.mxu0
    %v968 = vadd.f32 0.0, %v967
    %v969 = vpop.f32.mrf.mxu0
    %v970 = vadd.f32 0.0, %v969
    %971 = vmatmul.bf16.gmra.mxu0 %v936
    %v972 = vpop.f32.mrf.mxu0
    %v973 = vadd.f32 0.0, %v972
    %v974 = vpop.f32.mrf.mxu0
    %v975 = vadd.f32 0.0, %v974
    %976 = vmatmul.bf16.gmra.mxu0 %v939
    %v977 = vpop.f32.mrf.mxu0
    %v978 = vadd.f32 0.0, %v977
    %v979 = vpop.f32.mrf.mxu0
    %v980 = vadd.f32 0.0, %v979
    %981 = vdwg.mxu0
    %v982 = vunpack.c.l.b16 %v840
    %v983 = vunpack.c.l.b16 %v842
    %v984 = vunpack.c.l.b16 %v844
    %v985 = vunpack.c.l.b16 %v846
    %v986 = vunpack.c.l.b16 %v848
    %v987 = vunpack.c.l.b16 %v850
    %v988 = vunpack.c.l.b16 %v852
    %v989 = vunpack.c.l.b16 %v854
    %v990 = vpack.c.b16 %v983, %v982
    %v991 = vpack.c.b16 %v985, %v984
    %v992 = vpack.c.b16 %v987, %v986
    %v993 = vpack.c.b16 %v989, %v988
    %v994 = vunpack.c.l.b16 %v896
    %v995 = vunpack.c.l.b16 %v897
    %v996 = vunpack.c.l.b16 %v898
    %v997 = vunpack.c.l.b16 %v899
    %v998 = vunpack.c.l.b16 %v900
    %v999 = vunpack.c.l.b16 %v901
    %v1000 = vunpack.c.l.b16 %v902
    %v1001 = vunpack.c.l.b16 %v903
    %v1002 = vpack.c.b16 %v995, %v994
    %v1003 = vpack.c.b16 %v997, %v996
    %v1004 = vpack.c.b16 %v999, %v998
    %v1005 = vpack.c.b16 %v1001, %v1000
    %v1007 = vsel %vm928, %v990, 0
    %v1010 = vsel %vm928, %v991, 0
    %v1013 = vsel %vm928, %v992, 0
    %v1016 = vsel %vm928, %v993, 0
    %v1019 = vsel %vm928, %v1002, 0
    %v1022 = vsel %vm928, %v1003, 0
    %v1025 = vsel %vm928, %v1004, 0
    %v1028 = vsel %vm928, %v1005, 0
    %1030 = vmatpush.bf16.xpose.msra.mxu0 0
    %1031 = vmatpush.bf16.xpose.msra.mxu0 0
    %1032 = vmatpush.bf16.xpose.msra.mxu0 0
    %1033 = vmatpush.bf16.xpose.msra.mxu0 0
    %1034 = vmatpush.bf16.xpose.msra.mxu0 %v1028
    %1035 = vmatpush.bf16.xpose.msra.mxu0 %v1025
    %1036 = vmatpush.bf16.xpose.msra.mxu0 %v1022
    %1037 = vmatpush.bf16.xpose.msra.mxu0 %v1019
    %1038 = vmatmul.bf16.gmra.mxu0 %v1007
    %v1039 = vpop.f32.mrf.mxu0
    %v1040 = vadd.f32 0.0, %v1039
    %v1041 = vpop.f32.mrf.mxu0
    %v1042 = vadd.f32 0.0, %v1041
    %1043 = vmatmul.bf16.gmra.mxu0 %v1010
    %v1044 = vpop.f32.mrf.mxu0
    %v1045 = vadd.f32 0.0, %v1044
    %v1046 = vpop.f32.mrf.mxu0
    %v1047 = vadd.f32 0.0, %v1046
    %1048 = vmatmul.bf16.gmra.mxu0 %v1013
    %v1049 = vpop.f32.mrf.mxu0
    %v1050 = vadd.f32 0.0, %v1049
    %v1051 = vpop.f32.mrf.mxu0
    %v1052 = vadd.f32 0.0, %v1051
    %1053 = vmatmul.bf16.gmra.mxu0 %v1016
    %v1054 = vpop.f32.mrf.mxu0
    %v1055 = vadd.f32 0.0, %v1054
    %v1056 = vpop.f32.mrf.mxu0
    %v1057 = vadd.f32 0.0, %v1056
    %1058 = vdwg.mxu0
    %vm1059 = vcmask 523264
    %v1060 = vsel %vm1059, %v963, -inf
    %1061 = vmax.xlane.f32.xlu0 %v1060
    %v1062 = vpop.xlane.xlu0 %1061
    %v1063 = vsel %vm1059, %v965, -inf
    %1064 = vmax.xlane.f32.xlu0 %v1063
    %v1065 = vpop.xlane.xlu0 %1064
    %v1066 = vsel %vm1059, %v968, -inf
    %1067 = vmax.xlane.f32.xlu0 %v1066
    %v1068 = vpop.xlane.xlu0 %1067
    %v1069 = vsel %vm1059, %v970, -inf
    %1070 = vmax.xlane.f32.xlu0 %v1069
    %v1071 = vpop.xlane.xlu0 %1070
    %v1072 = vsel %vm1059, %v973, -inf
    %1073 = vmax.xlane.f32.xlu0 %v1072
    %v1074 = vpop.xlane.xlu0 %1073
    %v1075 = vsel %vm1059, %v975, -inf
    %1076 = vmax.xlane.f32.xlu0 %v1075
    %v1077 = vpop.xlane.xlu0 %1076
    %v1078 = vsel %vm1059, %v978, -inf
    %1079 = vmax.xlane.f32.xlu0 %v1078
    %v1080 = vpop.xlane.xlu0 %1079
    %v1081 = vsel %vm1059, %v980, -inf
    %1082 = vmax.xlane.f32.xlu0 %v1081
    %v1083 = vpop.xlane.xlu0 %1082
    %v1084 = vsel %vm1059, %v1040, -inf
    %1085 = vmax.xlane.f32.xlu0 %v1084
    %v1086 = vpop.xlane.xlu0 %1085
    %v1087 = vsel %vm1059, %v1042, -inf
    %1088 = vmax.xlane.f32.xlu0 %v1087
    %v1089 = vpop.xlane.xlu0 %1088
    %v1090 = vsel %vm1059, %v1045, -inf
    %1091 = vmax.xlane.f32.xlu0 %v1090
    %v1092 = vpop.xlane.xlu0 %1091
    %v1093 = vsel %vm1059, %v1047, -inf
    %1094 = vmax.xlane.f32.xlu0 %v1093
    %v1095 = vpop.xlane.xlu0 %1094
    %v1096 = vsel %vm1059, %v1050, -inf
    %1097 = vmax.xlane.f32.xlu0 %v1096
    %v1098 = vpop.xlane.xlu0 %1097
    %v1099 = vsel %vm1059, %v1052, -inf
    %1100 = vmax.xlane.f32.xlu0 %v1099
    %v1101 = vpop.xlane.xlu0 %1100
    %v1102 = vsel %vm1059, %v1055, -inf
    %1103 = vmax.xlane.f32.xlu0 %v1102
    %v1104 = vpop.xlane.xlu0 %1103
    %v1105 = vsel %vm1059, %v1057, -inf
    %1106 = vmax.xlane.f32.xlu0 %v1105
    %v1107 = vpop.xlane.xlu0 %1106
    %v1108 = vsub.f32 %v963, %v1062
    %v1109 = vsub.f32 %v965, %v1065
    %v1110 = vsub.f32 %v968, %v1068
    %v1111 = vsub.f32 %v970, %v1071
    %v1112 = vsub.f32 %v973, %v1074
    %v1113 = vsub.f32 %v975, %v1077
    %v1114 = vsub.f32 %v978, %v1080
    %v1115 = vsub.f32 %v980, %v1083
    %v1116 = vsub.f32 %v1040, %v1086
    %v1117 = vsub.f32 %v1042, %v1089
    %v1118 = vsub.f32 %v1045, %v1092
    %v1119 = vsub.f32 %v1047, %v1095
    %v1120 = vsub.f32 %v1050, %v1098
    %v1121 = vsub.f32 %v1052, %v1101
    %v1122 = vsub.f32 %v1055, %v1104
    %v1123 = vsub.f32 %v1057, %v1107
    %v1124 = vmul.f32 %v1108, 1.442695
    %v1125 = vpow.pop %v1124
    %v1126 = vmul.f32 %v1109, 1.442695
    %v1127 = vpow.pop %v1126
    %v1128 = vmul.f32 %v1110, 1.442695
    %v1129 = vpow.pop %v1128
    %v1130 = vmul.f32 %v1111, 1.442695
    %v1131 = vpow.pop %v1130
    %v1132 = vmul.f32 %v1112, 1.442695
    %v1133 = vpow.pop %v1132
    %v1134 = vmul.f32 %v1113, 1.442695
    %v1135 = vpow.pop %v1134
    %v1136 = vmul.f32 %v1114, 1.442695
    %v1137 = vpow.pop %v1136
    %v1138 = vmul.f32 %v1115, 1.442695
    %v1139 = vpow.pop %v1138
    %v1140 = vmul.f32 %v1116, 1.442695
    %v1141 = vpow.pop %v1140
    %v1142 = vmul.f32 %v1117, 1.442695
    %v1143 = vpow.pop %v1142
    %v1144 = vmul.f32 %v1118, 1.442695
    %v1145 = vpow.pop %v1144
    %v1146 = vmul.f32 %v1119, 1.442695
    %v1147 = vpow.pop %v1146
    %v1148 = vmul.f32 %v1120, 1.442695
    %v1149 = vpow.pop %v1148
    %v1150 = vmul.f32 %v1121, 1.442695
    %v1151 = vpow.pop %v1150
    %v1152 = vmul.f32 %v1122, 1.442695
    %v1153 = vpow.pop %v1152
    %v1154 = vmul.f32 %v1123, 1.442695
    %v1155 = vpow.pop %v1154
    %v1156 = vsel %vm1059, %v1125, 0.0
    %1157 = vadd.xlane.f32.xlu0 %v1156
    %v1158 = vpop.xlane.xlu0 %1157
    %v1159 = vsel %vm1059, %v1127, 0.0
    %1160 = vadd.xlane.f32.xlu0 %v1159
    %v1161 = vpop.xlane.xlu0 %1160
    %v1162 = vsel %vm1059, %v1129, 0.0
    %1163 = vadd.xlane.f32.xlu0 %v1162
    %v1164 = vpop.xlane.xlu0 %1163
    %v1165 = vsel %vm1059, %v1131, 0.0
    %1166 = vadd.xlane.f32.xlu0 %v1165
    %v1167 = vpop.xlane.xlu0 %1166
    %v1168 = vsel %vm1059, %v1133, 0.0
    %1169 = vadd.xlane.f32.xlu0 %v1168
    %v1170 = vpop.xlane.xlu0 %1169
    %v1171 = vsel %vm1059, %v1135, 0.0
    %1172 = vadd.xlane.f32.xlu0 %v1171
    %v1173 = vpop.xlane.xlu0 %1172
    %v1174 = vsel %vm1059, %v1137, 0.0
    %1175 = vadd.xlane.f32.xlu0 %v1174
    %v1176 = vpop.xlane.xlu0 %1175
    %v1177 = vsel %vm1059, %v1139, 0.0
    %1178 = vadd.xlane.f32.xlu0 %v1177
    %v1179 = vpop.xlane.xlu0 %1178
    %v1180 = vsel %vm1059, %v1141, 0.0
    %1181 = vadd.xlane.f32.xlu0 %v1180
    %v1182 = vpop.xlane.xlu0 %1181
    %v1183 = vsel %vm1059, %v1143, 0.0
    %1184 = vadd.xlane.f32.xlu0 %v1183
    %v1185 = vpop.xlane.xlu0 %1184
    %v1186 = vsel %vm1059, %v1145, 0.0
    %1187 = vadd.xlane.f32.xlu0 %v1186
    %v1188 = vpop.xlane.xlu0 %1187
    %v1189 = vsel %vm1059, %v1147, 0.0
    %1190 = vadd.xlane.f32.xlu0 %v1189
    %v1191 = vpop.xlane.xlu0 %1190
    %v1192 = vsel %vm1059, %v1149, 0.0
    %1193 = vadd.xlane.f32.xlu0 %v1192
    %v1194 = vpop.xlane.xlu0 %1193
    %v1195 = vsel %vm1059, %v1151, 0.0
    %1196 = vadd.xlane.f32.xlu0 %v1195
    %v1197 = vpop.xlane.xlu0 %1196
    %v1198 = vsel %vm1059, %v1153, 0.0
    %1199 = vadd.xlane.f32.xlu0 %v1198
    %v1200 = vpop.xlane.xlu0 %1199
    %v1201 = vsel %vm1059, %v1155, 0.0
    %1202 = vadd.xlane.f32.xlu0 %v1201
    %v1203 = vpop.xlane.xlu0 %1202
    %v1204 = vrcp.pop %v1158
    %v1205 = vrcp.pop %v1161
    %v1206 = vrcp.pop %v1164
    %v1207 = vrcp.pop %v1167
    %v1208 = vrcp.pop %v1170
    %v1209 = vrcp.pop %v1173
    %v1210 = vrcp.pop %v1176
    %v1211 = vrcp.pop %v1179
    %v1212 = vrcp.pop %v1182
    %v1213 = vrcp.pop %v1185
    %v1214 = vrcp.pop %v1188
    %v1215 = vrcp.pop %v1191
    %v1216 = vrcp.pop %v1194
    %v1217 = vrcp.pop %v1197
    %v1218 = vrcp.pop %v1200
    %v1219 = vrcp.pop %v1203
    %v1220 = vmul.f32 %v1125, %v1204
    %v1221 = vmul.f32 %v1127, %v1205
    %v1222 = vmul.f32 %v1129, %v1206
    %v1223 = vmul.f32 %v1131, %v1207
    %v1224 = vmul.f32 %v1133, %v1208
    %v1225 = vmul.f32 %v1135, %v1209
    %v1226 = vmul.f32 %v1137, %v1210
    %v1227 = vmul.f32 %v1139, %v1211
    %v1228 = vmul.f32 %v1141, %v1212
    %v1229 = vmul.f32 %v1143, %v1213
    %v1230 = vmul.f32 %v1145, %v1214
    %v1231 = vmul.f32 %v1147, %v1215
    %v1232 = vmul.f32 %v1149, %v1216
    %v1233 = vmul.f32 %v1151, %v1217
    %v1234 = vmul.f32 %v1153, %v1218
    %v1235 = vmul.f32 %v1155, %v1219
    %v1236 = vpack.c.bf16 %v1220, %v1220
    %v1237 = vpack.c.bf16 %v1221, %v1221
    %v1238 = vpack.c.bf16 %v1222, %v1222
    %v1239 = vpack.c.bf16 %v1223, %v1223
    %v1240 = vpack.c.bf16 %v1224, %v1224
    %v1241 = vpack.c.bf16 %v1225, %v1225
    %v1242 = vpack.c.bf16 %v1226, %v1226
    %v1243 = vpack.c.bf16 %v1227, %v1227
    %v1244 = vpack.c.bf16 %v1228, %v1228
    %v1245 = vpack.c.bf16 %v1229, %v1229
    %v1246 = vpack.c.bf16 %v1230, %v1230
    %v1247 = vpack.c.bf16 %v1231, %v1231
    %v1248 = vpack.c.bf16 %v1232, %v1232
    %v1249 = vpack.c.bf16 %v1233, %v1233
    %v1250 = vpack.c.bf16 %v1234, %v1234
    %v1251 = vpack.c.bf16 %v1235, %v1235
    %v1260 = vunpack.c.l.b16 %v1236
    %v1261 = vunpack.c.l.b16 %v1237
    %v1262 = vunpack.c.l.b16 %v1238
    %v1263 = vunpack.c.l.b16 %v1239
    %v1264 = vunpack.c.l.b16 %v1240
    %v1265 = vunpack.c.l.b16 %v1241
    %v1266 = vunpack.c.l.b16 %v1242
    %v1267 = vunpack.c.l.b16 %v1243
    %v1268 = vpack.c.b16 %v1261, %v1260
    %v1269 = vpack.c.b16 %v1263, %v1262
    %v1270 = vpack.c.b16 %v1265, %v1264
    %v1271 = vpack.c.b16 %v1267, %v1266
    %v1280 = vunpack.c.l.b16 %v825
    %v1281 = vunpack.c.l.b16 %v827
    %v1282 = vunpack.c.l.b16 %v829
    %v1283 = vunpack.c.l.b16 %v831
    %v1284 = vunpack.c.l.b16 %v833
    %v1285 = vunpack.c.l.b16 %v835
    %v1286 = vunpack.c.l.b16 %v837
    %v1287 = vunpack.c.l.b16 %v839
    %v1288 = vpack.c.b16 %v1281, %v1280
    %v1289 = vpack.c.b16 %v1283, %v1282
    %v1290 = vpack.c.b16 %v1285, %v1284
    %v1291 = vpack.c.b16 %v1287, %v1286
    %v1297 = vsel %vm1059, %v1268, 0
    %v1300 = vsel %vm1059, %v1269, 0
    %v1303 = vsel %vm1059, %v1270, 0
    %v1306 = vsel %vm1059, %v1271, 0
    %1308 = vmatpush.bf16.msra.mxu0 0
    %1309 = vmatpush.bf16.msra.mxu0 0
    %1310 = vmatpush.bf16.msra.mxu0 0
    %1311 = vmatpush.bf16.msra.mxu0 0
    %1312 = vmatpush.bf16.msra.mxu0 %v1291
    %1313 = vmatpush.bf16.msra.mxu0 %v1290
    %1314 = vmatpush.bf16.msra.mxu0 %v1289
    %1315 = vmatpush.bf16.msra.mxu0 %v1288
    %1316 = vmatmul.bf16.gmra.mxu0 %v1297
    %v1317 = vpop.f32.mrf.mxu0
    %v1318 = vadd.f32 0.0, %v1317
    %v1319 = vpop.f32.mrf.mxu0
    %v1320 = vadd.f32 0.0, %v1319
    %1321 = vmatmul.bf16.gmra.mxu0 %v1300
    %v1322 = vpop.f32.mrf.mxu0
    %v1323 = vadd.f32 0.0, %v1322
    %v1324 = vpop.f32.mrf.mxu0
    %v1325 = vadd.f32 0.0, %v1324
    %1326 = vmatmul.bf16.gmra.mxu0 %v1303
    %v1327 = vpop.f32.mrf.mxu0
    %v1328 = vadd.f32 0.0, %v1327
    %v1329 = vpop.f32.mrf.mxu0
    %v1330 = vadd.f32 0.0, %v1329
    %1331 = vmatmul.bf16.gmra.mxu0 %v1306
    %v1332 = vpop.f32.mrf.mxu0
    %v1333 = vadd.f32 0.0, %v1332
    %v1334 = vpop.f32.mrf.mxu0
    %v1335 = vadd.f32 0.0, %v1334
    %1336 = vdwg.mxu0
    %v1345 = vunpack.c.l.b16 %v1244
    %v1346 = vunpack.c.l.b16 %v1245
    %v1347 = vunpack.c.l.b16 %v1246
    %v1348 = vunpack.c.l.b16 %v1247
    %v1349 = vunpack.c.l.b16 %v1248
    %v1350 = vunpack.c.l.b16 %v1249
    %v1351 = vunpack.c.l.b16 %v1250
    %v1352 = vunpack.c.l.b16 %v1251
    %v1353 = vpack.c.b16 %v1346, %v1345
    %v1354 = vpack.c.b16 %v1348, %v1347
    %v1355 = vpack.c.b16 %v1350, %v1349
    %v1356 = vpack.c.b16 %v1352, %v1351
    %v1365 = vunpack.c.l.b16 %v841
    %v1366 = vunpack.c.l.b16 %v843
    %v1367 = vunpack.c.l.b16 %v845
    %v1368 = vunpack.c.l.b16 %v847
    %v1369 = vunpack.c.l.b16 %v849
    %v1370 = vunpack.c.l.b16 %v851
    %v1371 = vunpack.c.l.b16 %v853
    %v1372 = vunpack.c.l.b16 %v855
    %v1373 = vpack.c.b16 %v1366, %v1365
    %v1374 = vpack.c.b16 %v1368, %v1367
    %v1375 = vpack.c.b16 %v1370, %v1369
    %v1376 = vpack.c.b16 %v1372, %v1371
    %v1382 = vsel %vm1059, %v1353, 0
    %v1385 = vsel %vm1059, %v1354, 0
    %v1388 = vsel %vm1059, %v1355, 0
    %v1391 = vsel %vm1059, %v1356, 0
    %1393 = vmatpush.bf16.msra.mxu0 0
    %1394 = vmatpush.bf16.msra.mxu0 0
    %1395 = vmatpush.bf16.msra.mxu0 0
    %1396 = vmatpush.bf16.msra.mxu0 0
    %1397 = vmatpush.bf16.msra.mxu0 %v1376
    %1398 = vmatpush.bf16.msra.mxu0 %v1375
    %1399 = vmatpush.bf16.msra.mxu0 %v1374
    %1400 = vmatpush.bf16.msra.mxu0 %v1373
    %1401 = vmatmul.bf16.gmra.mxu0 %v1382
    %v1402 = vpop.f32.mrf.mxu0
    %v1403 = vadd.f32 0.0, %v1402
    %v1404 = vpop.f32.mrf.mxu0
    %v1405 = vadd.f32 0.0, %v1404
    %1406 = vmatmul.bf16.gmra.mxu0 %v1385
    %v1407 = vpop.f32.mrf.mxu0
    %v1408 = vadd.f32 0.0, %v1407
    %v1409 = vpop.f32.mrf.mxu0
    %v1410 = vadd.f32 0.0, %v1409
    %1411 = vmatmul.bf16.gmra.mxu0 %v1388
    %v1412 = vpop.f32.mrf.mxu0
    %v1413 = vadd.f32 0.0, %v1412
    %v1414 = vpop.f32.mrf.mxu0
    %v1415 = vadd.f32 0.0, %v1414
    %1416 = vmatmul.bf16.gmra.mxu0 %v1391
    %v1417 = vpop.f32.mrf.mxu0
    %v1418 = vadd.f32 0.0, %v1417
    %v1419 = vpop.f32.mrf.mxu0
    %v1420 = vadd.f32 0.0, %v1419
    %1421 = vdwg.mxu0
    %v1422 = vpack.c.bf16 %v1320, %v1318
    %v1423 = vpack.c.bf16 %v1325, %v1323
    %v1424 = vpack.c.bf16 %v1330, %v1328
    %v1425 = vpack.c.bf16 %v1335, %v1333
    %v1426 = vpack.c.bf16 %v1405, %v1403
    %v1427 = vpack.c.bf16 %v1410, %v1408
    %v1428 = vpack.c.bf16 %v1415, %v1413
    %v1429 = vpack.c.bf16 %v1420, %v1418
    %1430 = vrot.lane.b32.xlu0 %v824, 96
    %v1431 = vpop.permute.xlu0 %1430
    %1432 = vrot.lane.b32.xlu0 %v826, 96
    %v1433 = vpop.permute.xlu0 %1432
    %1434 = vrot.lane.b32.xlu0 %v828, 96
    %v1435 = vpop.permute.xlu0 %1434
    %1436 = vrot.lane.b32.xlu0 %v830, 96
    %v1437 = vpop.permute.xlu0 %1436
    %1438 = vrot.lane.b32.xlu0 %v832, 96
    %v1439 = vpop.permute.xlu0 %1438
    %1440 = vrot.lane.b32.xlu0 %v834, 96
    %v1441 = vpop.permute.xlu0 %1440
    %1442 = vrot.lane.b32.xlu0 %v836, 96
    %v1443 = vpop.permute.xlu0 %1442
    %1444 = vrot.lane.b32.xlu0 %v838, 96
    %v1445 = vpop.permute.xlu0 %1444
    %1446 = vrot.lane.b32.xlu0 %v840, 96
    %v1447 = vpop.permute.xlu0 %1446
    %1448 = vrot.lane.b32.xlu0 %v842, 96
    %v1449 = vpop.permute.xlu0 %1448
    %1450 = vrot.lane.b32.xlu0 %v844, 96
    %v1451 = vpop.permute.xlu0 %1450
    %1452 = vrot.lane.b32.xlu0 %v846, 96
    %v1453 = vpop.permute.xlu0 %1452
    %1454 = vrot.lane.b32.xlu0 %v848, 96
    %v1455 = vpop.permute.xlu0 %1454
    %1456 = vrot.lane.b32.xlu0 %v850, 96
    %v1457 = vpop.permute.xlu0 %1456
    %1458 = vrot.lane.b32.xlu0 %v852, 96
    %v1459 = vpop.permute.xlu0 %1458
    %1460 = vrot.lane.b32.xlu0 %v854, 96
    %v1461 = vpop.permute.xlu0 %1460
    %v1462 = vrot.slane %v1431, 4
    %v1463 = vrot.slane %v1433, 4
    %v1464 = vrot.slane %v1435, 4
    %v1465 = vrot.slane %v1437, 4
    %v1466 = vrot.slane %v1439, 4
    %v1467 = vrot.slane %v1441, 4
    %v1468 = vrot.slane %v1443, 4
    %v1469 = vrot.slane %v1445, 4
    %v1470 = vrot.slane %v1447, 4
    %v1471 = vrot.slane %v1449, 4
    %v1472 = vrot.slane %v1451, 4
    %v1473 = vrot.slane %v1453, 4
    %v1474 = vrot.slane %v1455, 4
    %v1475 = vrot.slane %v1457, 4
    %v1476 = vrot.slane %v1459, 4
    %v1477 = vrot.slane %v1461, 4
    %1478 = vrot.lane.b32.xlu0 %v912, 96
    %v1479 = vpop.permute.xlu0 %1478
    %1480 = vrot.lane.b32.xlu0 %v913, 96
    %v1481 = vpop.permute.xlu0 %1480
    %1482 = vrot.lane.b32.xlu0 %v914, 96
    %v1483 = vpop.permute.xlu0 %1482
    %1484 = vrot.lane.b32.xlu0 %v915, 96
    %v1485 = vpop.permute.xlu0 %1484
    %v1486 = vunpack.c.l.b16 %v1462
    %v1487 = vunpack.c.l.b16 %v1463
    %v1488 = vunpack.c.l.b16 %v1464
    %v1489 = vunpack.c.l.b16 %v1465
    %v1490 = vunpack.c.l.b16 %v1466
    %v1491 = vunpack.c.l.b16 %v1467
    %v1492 = vunpack.c.l.b16 %v1468
    %v1493 = vunpack.c.l.b16 %v1469
    %v1494 = vpack.c.b16 %v1487, %v1486
    %v1495 = vpack.c.b16 %v1489, %v1488
    %v1496 = vpack.c.b16 %v1491, %v1490
    %v1497 = vpack.c.b16 %v1493, %v1492
    %v1499 = vsel %vm928, %v1479, 0
    %v1502 = vsel %vm928, %v1481, 0
    %v1505 = vsel %vm928, %v1483, 0
    %v1508 = vsel %vm928, %v1485, 0
    %v1511 = vsel %vm928, %v1494, 0
    %v1514 = vsel %vm928, %v1495, 0
    %v1517 = vsel %vm928, %v1496, 0
    %v1520 = vsel %vm928, %v1497, 0
    %1522 = vmatpush.bf16.xpose.msra.mxu0 0
    %1523 = vmatpush.bf16.xpose.msra.mxu0 0
    %1524 = vmatpush.bf16.xpose.msra.mxu0 0
    %1525 = vmatpush.bf16.xpose.msra.mxu0 0
    %1526 = vmatpush.bf16.xpose.msra.mxu0 %v1520
    %1527 = vmatpush.bf16.xpose.msra.mxu0 %v1517
    %1528 = vmatpush.bf16.xpose.msra.mxu0 %v1514
    %1529 = vmatpush.bf16.xpose.msra.mxu0 %v1511
    %1530 = vmatmul.bf16.gmra.mxu0 %v1499
    %v1531 = vpop.f32.mrf.mxu0
    %v1532 = vadd.f32 0.0, %v1531
    %v1533 = vpop.f32.mrf.mxu0
    %v1534 = vadd.f32 0.0, %v1533
    %1535 = vmatmul.bf16.gmra.mxu0 %v1502
    %v1536 = vpop.f32.mrf.mxu0
    %v1537 = vadd.f32 0.0, %v1536
    %v1538 = vpop.f32.mrf.mxu0
    %v1539 = vadd.f32 0.0, %v1538
    %1540 = vmatmul.bf16.gmra.mxu0 %v1505
    %v1541 = vpop.f32.mrf.mxu0
    %v1542 = vadd.f32 0.0, %v1541
    %v1543 = vpop.f32.mrf.mxu0
    %v1544 = vadd.f32 0.0, %v1543
    %1545 = vmatmul.bf16.gmra.mxu0 %v1508
    %v1546 = vpop.f32.mrf.mxu0
    %v1547 = vadd.f32 0.0, %v1546
    %v1548 = vpop.f32.mrf.mxu0
    %v1549 = vadd.f32 0.0, %v1548
    %1550 = vdwg.mxu0
    %1551 = vrot.lane.b32.xlu0 %v990, 96
    %v1552 = vpop.permute.xlu0 %1551
    %1553 = vrot.lane.b32.xlu0 %v991, 96
    %v1554 = vpop.permute.xlu0 %1553
    %1555 = vrot.lane.b32.xlu0 %v992, 96
    %v1556 = vpop.permute.xlu0 %1555
    %1557 = vrot.lane.b32.xlu0 %v993, 96
    %v1558 = vpop.permute.xlu0 %1557
    %v1559 = vunpack.c.l.b16 %v1470
    %v1560 = vunpack.c.l.b16 %v1471
    %v1561 = vunpack.c.l.b16 %v1472
    %v1562 = vunpack.c.l.b16 %v1473
    %v1563 = vunpack.c.l.b16 %v1474
    %v1564 = vunpack.c.l.b16 %v1475
    %v1565 = vunpack.c.l.b16 %v1476
    %v1566 = vunpack.c.l.b16 %v1477
    %v1567 = vpack.c.b16 %v1560, %v1559
    %v1568 = vpack.c.b16 %v1562, %v1561
    %v1569 = vpack.c.b16 %v1564, %v1563
    %v1570 = vpack.c.b16 %v1566, %v1565
    %v1572 = vsel %vm928, %v1552, 0
    %v1575 = vsel %vm928, %v1554, 0
    %v1578 = vsel %vm928, %v1556, 0
    %v1581 = vsel %vm928, %v1558, 0
    %v1584 = vsel %vm928, %v1567, 0
    %v1587 = vsel %vm928, %v1568, 0
    %v1590 = vsel %vm928, %v1569, 0
    %v1593 = vsel %vm928, %v1570, 0
    %1595 = vmatpush.bf16.xpose.msra.mxu0 0
    %1596 = vmatpush.bf16.xpose.msra.mxu0 0
    %1597 = vmatpush.bf16.xpose.msra.mxu0 0
    %1598 = vmatpush.bf16.xpose.msra.mxu0 0
    %1599 = vmatpush.bf16.xpose.msra.mxu0 %v1593
    %1600 = vmatpush.bf16.xpose.msra.mxu0 %v1590
    %1601 = vmatpush.bf16.xpose.msra.mxu0 %v1587
    %1602 = vmatpush.bf16.xpose.msra.mxu0 %v1584
    %1603 = vmatmul.bf16.gmra.mxu0 %v1572
    %v1604 = vpop.f32.mrf.mxu0
    %v1605 = vadd.f32 0.0, %v1604
    %v1606 = vpop.f32.mrf.mxu0
    %v1607 = vadd.f32 0.0, %v1606
    %1608 = vmatmul.bf16.gmra.mxu0 %v1575
    %v1609 = vpop.f32.mrf.mxu0
    %v1610 = vadd.f32 0.0, %v1609
    %v1611 = vpop.f32.mrf.mxu0
    %v1612 = vadd.f32 0.0, %v1611
    %1613 = vmatmul.bf16.gmra.mxu0 %v1578
    %v1614 = vpop.f32.mrf.mxu0
    %v1615 = vadd.f32 0.0, %v1614
    %v1616 = vpop.f32.mrf.mxu0
    %v1617 = vadd.f32 0.0, %v1616
    %1618 = vmatmul.bf16.gmra.mxu0 %v1581
    %v1619 = vpop.f32.mrf.mxu0
    %v1620 = vadd.f32 0.0, %v1619
    %v1621 = vpop.f32.mrf.mxu0
    %v1622 = vadd.f32 0.0, %v1621
    %1623 = vdwg.mxu0
    %v1624 = vsel %vm1059, %v1532, -inf
    %1625 = vmax.xlane.f32.xlu0 %v1624
    %v1626 = vpop.xlane.xlu0 %1625
    %v1627 = vsel %vm1059, %v1534, -inf
    %1628 = vmax.xlane.f32.xlu0 %v1627
    %v1629 = vpop.xlane.xlu0 %1628
    %v1630 = vsel %vm1059, %v1537, -inf
    %1631 = vmax.xlane.f32.xlu0 %v1630
    %v1632 = vpop.xlane.xlu0 %1631
    %v1633 = vsel %vm1059, %v1539, -inf
    %1634 = vmax.xlane.f32.xlu0 %v1633
    %v1635 = vpop.xlane.xlu0 %1634
    %v1636 = vsel %vm1059, %v1542, -inf
    %1637 = vmax.xlane.f32.xlu0 %v1636
    %v1638 = vpop.xlane.xlu0 %1637
    %v1639 = vsel %vm1059, %v1544, -inf
    %1640 = vmax.xlane.f32.xlu0 %v1639
    %v1641 = vpop.xlane.xlu0 %1640
    %v1642 = vsel %vm1059, %v1547, -inf
    %1643 = vmax.xlane.f32.xlu0 %v1642
    %v1644 = vpop.xlane.xlu0 %1643
    %v1645 = vsel %vm1059, %v1549, -inf
    %1646 = vmax.xlane.f32.xlu0 %v1645
    %v1647 = vpop.xlane.xlu0 %1646
    %v1648 = vsel %vm1059, %v1605, -inf
    %1649 = vmax.xlane.f32.xlu0 %v1648
    %v1650 = vpop.xlane.xlu0 %1649
    %v1651 = vsel %vm1059, %v1607, -inf
    %1652 = vmax.xlane.f32.xlu0 %v1651
    %v1653 = vpop.xlane.xlu0 %1652
    %v1654 = vsel %vm1059, %v1610, -inf
    %1655 = vmax.xlane.f32.xlu0 %v1654
    %v1656 = vpop.xlane.xlu0 %1655
    %v1657 = vsel %vm1059, %v1612, -inf
    %1658 = vmax.xlane.f32.xlu0 %v1657
    %v1659 = vpop.xlane.xlu0 %1658
    %v1660 = vsel %vm1059, %v1615, -inf
    %1661 = vmax.xlane.f32.xlu0 %v1660
    %v1662 = vpop.xlane.xlu0 %1661
    %v1663 = vsel %vm1059, %v1617, -inf
    %1664 = vmax.xlane.f32.xlu0 %v1663
    %v1665 = vpop.xlane.xlu0 %1664
    %v1666 = vsel %vm1059, %v1620, -inf
    %1667 = vmax.xlane.f32.xlu0 %v1666
    %v1668 = vpop.xlane.xlu0 %1667
    %v1669 = vsel %vm1059, %v1622, -inf
    %1670 = vmax.xlane.f32.xlu0 %v1669
    %v1671 = vpop.xlane.xlu0 %1670
    %v1672 = vsub.f32 %v1532, %v1626
    %v1673 = vsub.f32 %v1534, %v1629
    %v1674 = vsub.f32 %v1537, %v1632
    %v1675 = vsub.f32 %v1539, %v1635
    %v1676 = vsub.f32 %v1542, %v1638
    %v1677 = vsub.f32 %v1544, %v1641
    %v1678 = vsub.f32 %v1547, %v1644
    %v1679 = vsub.f32 %v1549, %v1647
    %v1680 = vsub.f32 %v1605, %v1650
    %v1681 = vsub.f32 %v1607, %v1653
    %v1682 = vsub.f32 %v1610, %v1656
    %v1683 = vsub.f32 %v1612, %v1659
    %v1684 = vsub.f32 %v1615, %v1662
    %v1685 = vsub.f32 %v1617, %v1665
    %v1686 = vsub.f32 %v1620, %v1668
    %v1687 = vsub.f32 %v1622, %v1671
    %v1688 = vmul.f32 %v1672, 1.442695
    %v1689 = vpow.pop %v1688
    %v1690 = vmul.f32 %v1673, 1.442695
    %v1691 = vpow.pop %v1690
    %v1692 = vmul.f32 %v1674, 1.442695
    %v1693 = vpow.pop %v1692
    %v1694 = vmul.f32 %v1675, 1.442695
    %v1695 = vpow.pop %v1694
    %v1696 = vmul.f32 %v1676, 1.442695
    %v1697 = vpow.pop %v1696
    %v1698 = vmul.f32 %v1677, 1.442695
    %v1699 = vpow.pop %v1698
    %v1700 = vmul.f32 %v1678, 1.442695
    %v1701 = vpow.pop %v1700
    %v1702 = vmul.f32 %v1679, 1.442695
    %v1703 = vpow.pop %v1702
    %v1704 = vmul.f32 %v1680, 1.442695
    %v1705 = vpow.pop %v1704
    %v1706 = vmul.f32 %v1681, 1.442695
    %v1707 = vpow.pop %v1706
    %v1708 = vmul.f32 %v1682, 1.442695
    %v1709 = vpow.pop %v1708
    %v1710 = vmul.f32 %v1683, 1.442695
    %v1711 = vpow.pop %v1710
    %v1712 = vmul.f32 %v1684, 1.442695
    %v1713 = vpow.pop %v1712
    %v1714 = vmul.f32 %v1685, 1.442695
    %v1715 = vpow.pop %v1714
    %v1716 = vmul.f32 %v1686, 1.442695
    %v1717 = vpow.pop %v1716
    %v1718 = vmul.f32 %v1687, 1.442695
    %v1719 = vpow.pop %v1718
    %v1720 = vsel %vm1059, %v1689, 0.0
    %1721 = vadd.xlane.f32.xlu0 %v1720
    %v1722 = vpop.xlane.xlu0 %1721
    %v1723 = vsel %vm1059, %v1691, 0.0
    %1724 = vadd.xlane.f32.xlu0 %v1723
    %v1725 = vpop.xlane.xlu0 %1724
    %v1726 = vsel %vm1059, %v1693, 0.0
    %1727 = vadd.xlane.f32.xlu0 %v1726
    %v1728 = vpop.xlane.xlu0 %1727
    %v1729 = vsel %vm1059, %v1695, 0.0
    %1730 = vadd.xlane.f32.xlu0 %v1729
    %v1731 = vpop.xlane.xlu0 %1730
    %v1732 = vsel %vm1059, %v1697, 0.0
    %1733 = vadd.xlane.f32.xlu0 %v1732
    %v1734 = vpop.xlane.xlu0 %1733
    %v1735 = vsel %vm1059, %v1699, 0.0
    %1736 = vadd.xlane.f32.xlu0 %v1735
    %v1737 = vpop.xlane.xlu0 %1736
    %v1738 = vsel %vm1059, %v1701, 0.0
    %1739 = vadd.xlane.f32.xlu0 %v1738
    %v1740 = vpop.xlane.xlu0 %1739
    %v1741 = vsel %vm1059, %v1703, 0.0
    %1742 = vadd.xlane.f32.xlu0 %v1741
    %v1743 = vpop.xlane.xlu0 %1742
    %v1744 = vsel %vm1059, %v1705, 0.0
    %1745 = vadd.xlane.f32.xlu0 %v1744
    %v1746 = vpop.xlane.xlu0 %1745
    %v1747 = vsel %vm1059, %v1707, 0.0
    %1748 = vadd.xlane.f32.xlu0 %v1747
    %v1749 = vpop.xlane.xlu0 %1748
    %v1750 = vsel %vm1059, %v1709, 0.0
    %1751 = vadd.xlane.f32.xlu0 %v1750
    %v1752 = vpop.xlane.xlu0 %1751
    %v1753 = vsel %vm1059, %v1711, 0.0
    %1754 = vadd.xlane.f32.xlu0 %v1753
    %v1755 = vpop.xlane.xlu0 %1754
    %v1756 = vsel %vm1059, %v1713, 0.0
    %1757 = vadd.xlane.f32.xlu0 %v1756
    %v1758 = vpop.xlane.xlu0 %1757
    %v1759 = vsel %vm1059, %v1715, 0.0
    %1760 = vadd.xlane.f32.xlu0 %v1759
    %v1761 = vpop.xlane.xlu0 %1760
    %v1762 = vsel %vm1059, %v1717, 0.0
    %1763 = vadd.xlane.f32.xlu0 %v1762
    %v1764 = vpop.xlane.xlu0 %1763
    %v1765 = vsel %vm1059, %v1719, 0.0
    %1766 = vadd.xlane.f32.xlu0 %v1765
    %v1767 = vpop.xlane.xlu0 %1766
    %v1768 = vrcp.pop %v1722
    %v1769 = vrcp.pop %v1725
    %v1770 = vrcp.pop %v1728
    %v1771 = vrcp.pop %v1731
    %v1772 = vrcp.pop %v1734
    %v1773 = vrcp.pop %v1737
    %v1774 = vrcp.pop %v1740
    %v1775 = vrcp.pop %v1743
    %v1776 = vrcp.pop %v1746
    %v1777 = vrcp.pop %v1749
    %v1778 = vrcp.pop %v1752
    %v1779 = vrcp.pop %v1755
    %v1780 = vrcp.pop %v1758
    %v1781 = vrcp.pop %v1761
    %v1782 = vrcp.pop %v1764
    %v1783 = vrcp.pop %v1767
    %v1784 = vmul.f32 %v1689, %v1768
    %v1785 = vmul.f32 %v1691, %v1769
    %v1786 = vmul.f32 %v1693, %v1770
    %v1787 = vmul.f32 %v1695, %v1771
    %v1788 = vmul.f32 %v1697, %v1772
    %v1789 = vmul.f32 %v1699, %v1773
    %v1790 = vmul.f32 %v1701, %v1774
    %v1791 = vmul.f32 %v1703, %v1775
    %v1792 = vmul.f32 %v1705, %v1776
    %v1793 = vmul.f32 %v1707, %v1777
    %v1794 = vmul.f32 %v1709, %v1778
    %v1795 = vmul.f32 %v1711, %v1779
    %v1796 = vmul.f32 %v1713, %v1780
    %v1797 = vmul.f32 %v1715, %v1781
    %v1798 = vmul.f32 %v1717, %v1782
    %v1799 = vmul.f32 %v1719, %v1783
    %v1800 = vpack.c.bf16 %v1784, %v1784
    %v1801 = vpack.c.bf16 %v1785, %v1785
    %v1802 = vpack.c.bf16 %v1786, %v1786
    %v1803 = vpack.c.bf16 %v1787, %v1787
    %v1804 = vpack.c.bf16 %v1788, %v1788
    %v1805 = vpack.c.bf16 %v1789, %v1789
    %v1806 = vpack.c.bf16 %v1790, %v1790
    %v1807 = vpack.c.bf16 %v1791, %v1791
    %v1808 = vpack.c.bf16 %v1792, %v1792
    %v1809 = vpack.c.bf16 %v1793, %v1793
    %v1810 = vpack.c.bf16 %v1794, %v1794
    %v1811 = vpack.c.bf16 %v1795, %v1795
    %v1812 = vpack.c.bf16 %v1796, %v1796
    %v1813 = vpack.c.bf16 %v1797, %v1797
    %v1814 = vpack.c.bf16 %v1798, %v1798
    %v1815 = vpack.c.bf16 %v1799, %v1799
    %v1824 = vunpack.c.l.b16 %v1800
    %v1825 = vunpack.c.l.b16 %v1801
    %v1826 = vunpack.c.l.b16 %v1802
    %v1827 = vunpack.c.l.b16 %v1803
    %v1828 = vunpack.c.l.b16 %v1804
    %v1829 = vunpack.c.l.b16 %v1805
    %v1830 = vunpack.c.l.b16 %v1806
    %v1831 = vunpack.c.l.b16 %v1807
    %v1832 = vpack.c.b16 %v1825, %v1824
    %v1833 = vpack.c.b16 %v1827, %v1826
    %v1834 = vpack.c.b16 %v1829, %v1828
    %v1835 = vpack.c.b16 %v1831, %v1830
    %1836 = vrot.lane.b32.xlu0 %v1288, 96
    %v1837 = vpop.permute.xlu0 %1836
    %1838 = vrot.lane.b32.xlu0 %v1289, 96
    %v1839 = vpop.permute.xlu0 %1838
    %1840 = vrot.lane.b32.xlu0 %v1290, 96
    %v1841 = vpop.permute.xlu0 %1840
    %1842 = vrot.lane.b32.xlu0 %v1291, 96
    %v1843 = vpop.permute.xlu0 %1842
    %v1849 = vsel %vm1059, %v1832, 0
    %v1852 = vsel %vm1059, %v1833, 0
    %v1855 = vsel %vm1059, %v1834, 0
    %v1858 = vsel %vm1059, %v1835, 0
    %1860 = vmatpush.bf16.msra.mxu0 0
    %1861 = vmatpush.bf16.msra.mxu0 0
    %1862 = vmatpush.bf16.msra.mxu0 0
    %1863 = vmatpush.bf16.msra.mxu0 0
    %1864 = vmatpush.bf16.msra.mxu0 %v1843
    %1865 = vmatpush.bf16.msra.mxu0 %v1841
    %1866 = vmatpush.bf16.msra.mxu0 %v1839
    %1867 = vmatpush.bf16.msra.mxu0 %v1837
    %1868 = vmatmul.bf16.gmra.mxu0 %v1849
    %v1869 = vpop.f32.mrf.mxu0
    %v1870 = vadd.f32 0.0, %v1869
    %v1871 = vpop.f32.mrf.mxu0
    %v1872 = vadd.f32 0.0, %v1871
    %1873 = vmatmul.bf16.gmra.mxu0 %v1852
    %v1874 = vpop.f32.mrf.mxu0
    %v1875 = vadd.f32 0.0, %v1874
    %v1876 = vpop.f32.mrf.mxu0
    %v1877 = vadd.f32 0.0, %v1876
    %1878 = vmatmul.bf16.gmra.mxu0 %v1855
    %v1879 = vpop.f32.mrf.mxu0
    %v1880 = vadd.f32 0.0, %v1879
    %v1881 = vpop.f32.mrf.mxu0
    %v1882 = vadd.f32 0.0, %v1881
    %1883 = vmatmul.bf16.gmra.mxu0 %v1858
    %v1884 = vpop.f32.mrf.mxu0
    %v1885 = vadd.f32 0.0, %v1884
    %v1886 = vpop.f32.mrf.mxu0
    %v1887 = vadd.f32 0.0, %v1886
    %1888 = vdwg.mxu0
    %v1897 = vunpack.c.l.b16 %v1808
    %v1898 = vunpack.c.l.b16 %v1809
    %v1899 = vunpack.c.l.b16 %v1810
    %v1900 = vunpack.c.l.b16 %v1811
    %v1901 = vunpack.c.l.b16 %v1812
    %v1902 = vunpack.c.l.b16 %v1813
    %v1903 = vunpack.c.l.b16 %v1814
    %v1904 = vunpack.c.l.b16 %v1815
    %v1905 = vpack.c.b16 %v1898, %v1897
    %v1906 = vpack.c.b16 %v1900, %v1899
    %v1907 = vpack.c.b16 %v1902, %v1901
    %v1908 = vpack.c.b16 %v1904, %v1903
    %1909 = vrot.lane.b32.xlu0 %v1373, 96
    %v1910 = vpop.permute.xlu0 %1909
    %1911 = vrot.lane.b32.xlu0 %v1374, 96
    %v1912 = vpop.permute.xlu0 %1911
    %1913 = vrot.lane.b32.xlu0 %v1375, 96
    %v1914 = vpop.permute.xlu0 %1913
    %1915 = vrot.lane.b32.xlu0 %v1376, 96
    %v1916 = vpop.permute.xlu0 %1915
    %v1922 = vsel %vm1059, %v1905, 0
    %v1925 = vsel %vm1059, %v1906, 0
    %v1928 = vsel %vm1059, %v1907, 0
    %v1931 = vsel %vm1059, %v1908, 0
    %1933 = vmatpush.bf16.msra.mxu0 0
    %1934 = vmatpush.bf16.msra.mxu0 0
    %1935 = vmatpush.bf16.msra.mxu0 0
    %1936 = vmatpush.bf16.msra.mxu0 0
    %1937 = vmatpush.bf16.msra.mxu0 %v1916
    %1938 = vmatpush.bf16.msra.mxu0 %v1914
    %1939 = vmatpush.bf16.msra.mxu0 %v1912
    %1940 = vmatpush.bf16.msra.mxu0 %v1910
    %1941 = vmatmul.bf16.gmra.mxu0 %v1922
    %v1942 = vpop.f32.mrf.mxu0
    %v1943 = vadd.f32 0.0, %v1942
    %v1944 = vpop.f32.mrf.mxu0
    %v1945 = vadd.f32 0.0, %v1944
    %1946 = vmatmul.bf16.gmra.mxu0 %v1925
    %v1947 = vpop.f32.mrf.mxu0
    %v1948 = vadd.f32 0.0, %v1947
    %v1949 = vpop.f32.mrf.mxu0
    %v1950 = vadd.f32 0.0, %v1949
    %1951 = vmatmul.bf16.gmra.mxu0 %v1928
    %v1952 = vpop.f32.mrf.mxu0
    %v1953 = vadd.f32 0.0, %v1952
    %v1954 = vpop.f32.mrf.mxu0
    %v1955 = vadd.f32 0.0, %v1954
    %1956 = vmatmul.bf16.gmra.mxu0 %v1931
    %v1957 = vpop.f32.mrf.mxu0
    %v1958 = vadd.f32 0.0, %v1957
    %v1959 = vpop.f32.mrf.mxu0
    %v1960 = vadd.f32 0.0, %v1959
    %1961 = vdwg.mxu0
    %v1962 = vpack.c.bf16 %v1872, %v1870
    %v1963 = vpack.c.bf16 %v1877, %v1875
    %v1964 = vpack.c.bf16 %v1882, %v1880
    %v1965 = vpack.c.bf16 %v1887, %v1885
    %v1966 = vpack.c.bf16 %v1945, %v1943
    %v1967 = vpack.c.bf16 %v1950, %v1948
    %v1968 = vpack.c.bf16 %v1955, %v1953
    %v1969 = vpack.c.bf16 %v1960, %v1958
    %v1974 = vunpack.c.l.b16 %v860
    %v1975 = vunpack.c.l.b16 %v861
    %v1976 = vunpack.c.l.b16 %v862
    %v1977 = vunpack.c.l.b16 %v863
    %v1978 = vpack.c.b16 %v1975, %v1974
    %v1979 = vpack.c.b16 %v1977, %v1976
    %v1983 = vsel %vm928, %v1962, 0
    %v1986 = vsel %vm928, %v1963, 0
    %v1989 = vsel %vm928, %v1964, 0
    %v1992 = vsel %vm928, %v1965, 0
    %v1995 = vsel %vm928, %v1966, 0
    %v1998 = vsel %vm928, %v1967, 0
    %v2001 = vsel %vm928, %v1968, 0
    %v2004 = vsel %vm928, %v1969, 0
    %2006 = vmatpush.bf16.msra.mxu0 0
    %2007 = vmatpush.bf16.msra.mxu0 0
    %2008 = vmatpush.bf16.msra.mxu0 0
    %2009 = vmatpush.bf16.msra.mxu0 0
    %2010 = vmatpush.bf16.msra.mxu0 0
    %2011 = vmatpush.bf16.msra.mxu0 0
    %2012 = vmatpush.bf16.msra.mxu0 %v1979
    %2013 = vmatpush.bf16.msra.mxu0 %v1978
    %2014 = vmatmul.bf16.gmra.mxu0 %v1983
    %v2015 = vpop.f32.mrf.mxu0
    %v2016 = vadd.f32 0.0, %v2015
    %v2017 = vpop.f32.mrf.mxu0
    %v2018 = vadd.f32 0.0, %v2017
    %2019 = vmatmul.bf16.gmra.mxu0 %v1986
    %v2020 = vpop.f32.mrf.mxu0
    %v2021 = vadd.f32 0.0, %v2020
    %v2022 = vpop.f32.mrf.mxu0
    %v2023 = vadd.f32 0.0, %v2022
    %2024 = vmatmul.bf16.gmra.mxu0 %v1989
    %v2025 = vpop.f32.mrf.mxu0
    %v2026 = vadd.f32 0.0, %v2025
    %v2027 = vpop.f32.mrf.mxu0
    %v2028 = vadd.f32 0.0, %v2027
    %2029 = vmatmul.bf16.gmra.mxu0 %v1992
    %v2030 = vpop.f32.mrf.mxu0
    %v2031 = vadd.f32 0.0, %v2030
    %v2032 = vpop.f32.mrf.mxu0
    %v2033 = vadd.f32 0.0, %v2032
    %2034 = vmatmul.bf16.gmra.mxu0 %v1995
    %v2035 = vpop.f32.mrf.mxu0
    %v2036 = vadd.f32 0.0, %v2035
    %v2037 = vpop.f32.mrf.mxu0
    %v2038 = vadd.f32 0.0, %v2037
    %2039 = vmatmul.bf16.gmra.mxu0 %v1998
    %v2040 = vpop.f32.mrf.mxu0
    %v2041 = vadd.f32 0.0, %v2040
    %v2042 = vpop.f32.mrf.mxu0
    %v2043 = vadd.f32 0.0, %v2042
    %2044 = vmatmul.bf16.gmra.mxu0 %v2001
    %v2045 = vpop.f32.mrf.mxu0
    %v2046 = vadd.f32 0.0, %v2045
    %v2047 = vpop.f32.mrf.mxu0
    %v2048 = vadd.f32 0.0, %v2047
    %2049 = vmatmul.bf16.gmra.mxu0 %v2004
    %v2050 = vpop.f32.mrf.mxu0
    %v2051 = vadd.f32 0.0, %v2050
    %v2052 = vpop.f32.mrf.mxu0
    %v2053 = vadd.f32 0.0, %v2052
    %2054 = vdwg.mxu0
    %v2059 = vunpack.c.l.b16 %v856
    %v2060 = vunpack.c.l.b16 %v857
    %v2061 = vunpack.c.l.b16 %v858
    %v2062 = vunpack.c.l.b16 %v859
    %v2063 = vpack.c.b16 %v2060, %v2059
    %v2064 = vpack.c.b16 %v2062, %v2061
    %v2068 = vsel %vm928, %v1422, 0
    %v2071 = vsel %vm928, %v1423, 0
    %v2074 = vsel %vm928, %v1424, 0
    %v2077 = vsel %vm928, %v1425, 0
    %v2080 = vsel %vm928, %v1426, 0
    %v2083 = vsel %vm928, %v1427, 0
    %v2086 = vsel %vm928, %v1428, 0
    %v2089 = vsel %vm928, %v1429, 0
    %2091 = vmatpush.bf16.msra.mxu0 0
    %2092 = vmatpush.bf16.msra.mxu0 0
    %2093 = vmatpush.bf16.msra.mxu0 0
    %2094 = vmatpush.bf16.msra.mxu0 0
    %2095 = vmatpush.bf16.msra.mxu0 0
    %2096 = vmatpush.bf16.msra.mxu0 0
    %2097 = vmatpush.bf16.msra.mxu0 %v2064
    %2098 = vmatpush.bf16.msra.mxu0 %v2063
    %2099 = vmatmul.bf16.gmra.mxu0 %v2068
    %v2100 = vpop.f32.mrf.mxu0
    %v2101 = vadd.f32 %v2016, %v2100
    %v2102 = vpop.f32.mrf.mxu0
    %v2103 = vadd.f32 %v2018, %v2102
    %2104 = vmatmul.bf16.gmra.mxu0 %v2071
    %v2105 = vpop.f32.mrf.mxu0
    %v2106 = vadd.f32 %v2021, %v2105
    %v2107 = vpop.f32.mrf.mxu0
    %v2108 = vadd.f32 %v2023, %v2107
    %2109 = vmatmul.bf16.gmra.mxu0 %v2074
    %v2110 = vpop.f32.mrf.mxu0
    %v2111 = vadd.f32 %v2026, %v2110
    %v2112 = vpop.f32.mrf.mxu0
    %v2113 = vadd.f32 %v2028, %v2112
    %2114 = vmatmul.bf16.gmra.mxu0 %v2077
    %v2115 = vpop.f32.mrf.mxu0
    %v2116 = vadd.f32 %v2031, %v2115
    %v2117 = vpop.f32.mrf.mxu0
    %v2118 = vadd.f32 %v2033, %v2117
    %2119 = vmatmul.bf16.gmra.mxu0 %v2080
    %v2120 = vpop.f32.mrf.mxu0
    %v2121 = vadd.f32 %v2036, %v2120
    %v2122 = vpop.f32.mrf.mxu0
    %v2123 = vadd.f32 %v2038, %v2122
    %2124 = vmatmul.bf16.gmra.mxu0 %v2083
    %v2125 = vpop.f32.mrf.mxu0
    %v2126 = vadd.f32 %v2041, %v2125
    %v2127 = vpop.f32.mrf.mxu0
    %v2128 = vadd.f32 %v2043, %v2127
    %2129 = vmatmul.bf16.gmra.mxu0 %v2086
    %v2130 = vpop.f32.mrf.mxu0
    %v2131 = vadd.f32 %v2046, %v2130
    %v2132 = vpop.f32.mrf.mxu0
    %v2133 = vadd.f32 %v2048, %v2132
    %2134 = vmatmul.bf16.gmra.mxu0 %v2089
    %v2135 = vpop.f32.mrf.mxu0
    %v2136 = vadd.f32 %v2051, %v2135
    %v2137 = vpop.f32.mrf.mxu0
    %v2138 = vadd.f32 %v2053, %v2137
    %2139 = vdwg.mxu0
    %2140 = vrot.lane.b32.xlu0 %v824, 64
    %v2141 = vpop.permute.xlu0 %2140
    %2142 = vrot.lane.b32.xlu0 %v826, 64
    %v2143 = vpop.permute.xlu0 %2142
    %2144 = vrot.lane.b32.xlu0 %v828, 64
    %v2145 = vpop.permute.xlu0 %2144
    %2146 = vrot.lane.b32.xlu0 %v830, 64
    %v2147 = vpop.permute.xlu0 %2146
    %2148 = vrot.lane.b32.xlu0 %v832, 64
    %v2149 = vpop.permute.xlu0 %2148
    %2150 = vrot.lane.b32.xlu0 %v834, 64
    %v2151 = vpop.permute.xlu0 %2150
    %2152 = vrot.lane.b32.xlu0 %v836, 64
    %v2153 = vpop.permute.xlu0 %2152
    %2154 = vrot.lane.b32.xlu0 %v838, 64
    %v2155 = vpop.permute.xlu0 %2154
    %2156 = vrot.lane.b32.xlu0 %v840, 64
    %v2157 = vpop.permute.xlu0 %2156
    %2158 = vrot.lane.b32.xlu0 %v842, 64
    %v2159 = vpop.permute.xlu0 %2158
    %2160 = vrot.lane.b32.xlu0 %v844, 64
    %v2161 = vpop.permute.xlu0 %2160
    %2162 = vrot.lane.b32.xlu0 %v846, 64
    %v2163 = vpop.permute.xlu0 %2162
    %2164 = vrot.lane.b32.xlu0 %v848, 64
    %v2165 = vpop.permute.xlu0 %2164
    %2166 = vrot.lane.b32.xlu0 %v850, 64
    %v2167 = vpop.permute.xlu0 %2166
    %2168 = vrot.lane.b32.xlu0 %v852, 64
    %v2169 = vpop.permute.xlu0 %2168
    %2170 = vrot.lane.b32.xlu0 %v854, 64
    %v2171 = vpop.permute.xlu0 %2170
    %v2172 = vrot.slane %v2141, 4
    %v2173 = vrot.slane %v2143, 4
    %v2174 = vrot.slane %v2145, 4
    %v2175 = vrot.slane %v2147, 4
    %v2176 = vrot.slane %v2149, 4
    %v2177 = vrot.slane %v2151, 4
    %v2178 = vrot.slane %v2153, 4
    %v2179 = vrot.slane %v2155, 4
    %v2180 = vrot.slane %v2157, 4
    %v2181 = vrot.slane %v2159, 4
    %v2182 = vrot.slane %v2161, 4
    %v2183 = vrot.slane %v2163, 4
    %v2184 = vrot.slane %v2165, 4
    %v2185 = vrot.slane %v2167, 4
    %v2186 = vrot.slane %v2169, 4
    %v2187 = vrot.slane %v2171, 4
    %2188 = vrot.lane.b32.xlu0 %v912, 64
    %v2189 = vpop.permute.xlu0 %2188
    %2190 = vrot.lane.b32.xlu0 %v913, 64
    %v2191 = vpop.permute.xlu0 %2190
    %2192 = vrot.lane.b32.xlu0 %v914, 64
    %v2193 = vpop.permute.xlu0 %2192
    %2194 = vrot.lane.b32.xlu0 %v915, 64
    %v2195 = vpop.permute.xlu0 %2194
    %v2196 = vunpack.c.l.b16 %v2172
    %v2197 = vunpack.c.l.b16 %v2173
    %v2198 = vunpack.c.l.b16 %v2174
    %v2199 = vunpack.c.l.b16 %v2175
    %v2200 = vunpack.c.l.b16 %v2176
    %v2201 = vunpack.c.l.b16 %v2177
    %v2202 = vunpack.c.l.b16 %v2178
    %v2203 = vunpack.c.l.b16 %v2179
    %v2204 = vpack.c.b16 %v2197, %v2196
    %v2205 = vpack.c.b16 %v2199, %v2198
    %v2206 = vpack.c.b16 %v2201, %v2200
    %v2207 = vpack.c.b16 %v2203, %v2202
    %v2209 = vsel %vm928, %v2189, 0
    %v2212 = vsel %vm928, %v2191, 0
    %v2215 = vsel %vm928, %v2193, 0
    %v2218 = vsel %vm928, %v2195, 0
    %v2221 = vsel %vm928, %v2204, 0
    %v2224 = vsel %vm928, %v2205, 0
    %v2227 = vsel %vm928, %v2206, 0
    %v2230 = vsel %vm928, %v2207, 0
    %2232 = vmatpush.bf16.xpose.msra.mxu0 0
    %2233 = vmatpush.bf16.xpose.msra.mxu0 0
    %2234 = vmatpush.bf16.xpose.msra.mxu0 0
    %2235 = vmatpush.bf16.xpose.msra.mxu0 0
    %2236 = vmatpush.bf16.xpose.msra.mxu0 %v2230
    %2237 = vmatpush.bf16.xpose.msra.mxu0 %v2227
    %2238 = vmatpush.bf16.xpose.msra.mxu0 %v2224
    %2239 = vmatpush.bf16.xpose.msra.mxu0 %v2221
    %2240 = vmatmul.bf16.gmra.mxu0 %v2209
    %v2241 = vpop.f32.mrf.mxu0
    %v2242 = vadd.f32 0.0, %v2241
    %v2243 = vpop.f32.mrf.mxu0
    %v2244 = vadd.f32 0.0, %v2243
    %2245 = vmatmul.bf16.gmra.mxu0 %v2212
    %v2246 = vpop.f32.mrf.mxu0
    %v2247 = vadd.f32 0.0, %v2246
    %v2248 = vpop.f32.mrf.mxu0
    %v2249 = vadd.f32 0.0, %v2248
    %2250 = vmatmul.bf16.gmra.mxu0 %v2215
    %v2251 = vpop.f32.mrf.mxu0
    %v2252 = vadd.f32 0.0, %v2251
    %v2253 = vpop.f32.mrf.mxu0
    %v2254 = vadd.f32 0.0, %v2253
    %2255 = vmatmul.bf16.gmra.mxu0 %v2218
    %v2256 = vpop.f32.mrf.mxu0
    %v2257 = vadd.f32 0.0, %v2256
    %v2258 = vpop.f32.mrf.mxu0
    %v2259 = vadd.f32 0.0, %v2258
    %2260 = vdwg.mxu0
    %2261 = vrot.lane.b32.xlu0 %v990, 64
    %v2262 = vpop.permute.xlu0 %2261
    %2263 = vrot.lane.b32.xlu0 %v991, 64
    %v2264 = vpop.permute.xlu0 %2263
    %2265 = vrot.lane.b32.xlu0 %v992, 64
    %v2266 = vpop.permute.xlu0 %2265
    %2267 = vrot.lane.b32.xlu0 %v993, 64
    %v2268 = vpop.permute.xlu0 %2267
    %v2269 = vunpack.c.l.b16 %v2180
    %v2270 = vunpack.c.l.b16 %v2181
    %v2271 = vunpack.c.l.b16 %v2182
    %v2272 = vunpack.c.l.b16 %v2183
    %v2273 = vunpack.c.l.b16 %v2184
    %v2274 = vunpack.c.l.b16 %v2185
    %v2275 = vunpack.c.l.b16 %v2186
    %v2276 = vunpack.c.l.b16 %v2187
    %v2277 = vpack.c.b16 %v2270, %v2269
    %v2278 = vpack.c.b16 %v2272, %v2271
    %v2279 = vpack.c.b16 %v2274, %v2273
    %v2280 = vpack.c.b16 %v2276, %v2275
    %v2282 = vsel %vm928, %v2262, 0
    %v2285 = vsel %vm928, %v2264, 0
    %v2288 = vsel %vm928, %v2266, 0
    %v2291 = vsel %vm928, %v2268, 0
    %v2294 = vsel %vm928, %v2277, 0
    %v2297 = vsel %vm928, %v2278, 0
    %v2300 = vsel %vm928, %v2279, 0
    %v2303 = vsel %vm928, %v2280, 0
    %2305 = vmatpush.bf16.xpose.msra.mxu0 0
    %2306 = vmatpush.bf16.xpose.msra.mxu0 0
    %2307 = vmatpush.bf16.xpose.msra.mxu0 0
    %2308 = vmatpush.bf16.xpose.msra.mxu0 0
    %2309 = vmatpush.bf16.xpose.msra.mxu0 %v2303
    %2310 = vmatpush.bf16.xpose.msra.mxu0 %v2300
    %2311 = vmatpush.bf16.xpose.msra.mxu0 %v2297
    %2312 = vmatpush.bf16.xpose.msra.mxu0 %v2294
    %2313 = vmatmul.bf16.gmra.mxu0 %v2282
    %v2314 = vpop.f32.mrf.mxu0
    %v2315 = vadd.f32 0.0, %v2314
    %v2316 = vpop.f32.mrf.mxu0
    %v2317 = vadd.f32 0.0, %v2316
    %2318 = vmatmul.bf16.gmra.mxu0 %v2285
    %v2319 = vpop.f32.mrf.mxu0
    %v2320 = vadd.f32 0.0, %v2319
    %v2321 = vpop.f32.mrf.mxu0
    %v2322 = vadd.f32 0.0, %v2321
    %2323 = vmatmul.bf16.gmra.mxu0 %v2288
    %v2324 = vpop.f32.mrf.mxu0
    %v2325 = vadd.f32 0.0, %v2324
    %v2326 = vpop.f32.mrf.mxu0
    %v2327 = vadd.f32 0.0, %v2326
    %2328 = vmatmul.bf16.gmra.mxu0 %v2291
    %v2329 = vpop.f32.mrf.mxu0
    %v2330 = vadd.f32 0.0, %v2329
    %v2331 = vpop.f32.mrf.mxu0
    %v2332 = vadd.f32 0.0, %v2331
    %2333 = vdwg.mxu0
    %v2334 = vsel %vm1059, %v2242, -inf
    %2335 = vmax.xlane.f32.xlu0 %v2334
    %v2336 = vpop.xlane.xlu0 %2335
    %v2337 = vsel %vm1059, %v2244, -inf
    %2338 = vmax.xlane.f32.xlu0 %v2337
    %v2339 = vpop.xlane.xlu0 %2338
    %v2340 = vsel %vm1059, %v2247, -inf
    %2341 = vmax.xlane.f32.xlu0 %v2340
    %v2342 = vpop.xlane.xlu0 %2341
    %v2343 = vsel %vm1059, %v2249, -inf
    %2344 = vmax.xlane.f32.xlu0 %v2343
    %v2345 = vpop.xlane.xlu0 %2344
    %v2346 = vsel %vm1059, %v2252, -inf
    %2347 = vmax.xlane.f32.xlu0 %v2346
    %v2348 = vpop.xlane.xlu0 %2347
    %v2349 = vsel %vm1059, %v2254, -inf
    %2350 = vmax.xlane.f32.xlu0 %v2349
    %v2351 = vpop.xlane.xlu0 %2350
    %v2352 = vsel %vm1059, %v2257, -inf
    %2353 = vmax.xlane.f32.xlu0 %v2352
    %v2354 = vpop.xlane.xlu0 %2353
    %v2355 = vsel %vm1059, %v2259, -inf
    %2356 = vmax.xlane.f32.xlu0 %v2355
    %v2357 = vpop.xlane.xlu0 %2356
    %v2358 = vsel %vm1059, %v2315, -inf
    %2359 = vmax.xlane.f32.xlu0 %v2358
    %v2360 = vpop.xlane.xlu0 %2359
    %v2361 = vsel %vm1059, %v2317, -inf
    %2362 = vmax.xlane.f32.xlu0 %v2361
    %v2363 = vpop.xlane.xlu0 %2362
    %v2364 = vsel %vm1059, %v2320, -inf
    %2365 = vmax.xlane.f32.xlu0 %v2364
    %v2366 = vpop.xlane.xlu0 %2365
    %v2367 = vsel %vm1059, %v2322, -inf
    %2368 = vmax.xlane.f32.xlu0 %v2367
    %v2369 = vpop.xlane.xlu0 %2368
    %v2370 = vsel %vm1059, %v2325, -inf
    %2371 = vmax.xlane.f32.xlu0 %v2370
    %v2372 = vpop.xlane.xlu0 %2371
    %v2373 = vsel %vm1059, %v2327, -inf
    %2374 = vmax.xlane.f32.xlu0 %v2373
    %v2375 = vpop.xlane.xlu0 %2374
    %v2376 = vsel %vm1059, %v2330, -inf
    %2377 = vmax.xlane.f32.xlu0 %v2376
    %v2378 = vpop.xlane.xlu0 %2377
    %v2379 = vsel %vm1059, %v2332, -inf
    %2380 = vmax.xlane.f32.xlu0 %v2379
    %v2381 = vpop.xlane.xlu0 %2380
    %v2382 = vsub.f32 %v2242, %v2336
    %v2383 = vsub.f32 %v2244, %v2339
    %v2384 = vsub.f32 %v2247, %v2342
    %v2385 = vsub.f32 %v2249, %v2345
    %v2386 = vsub.f32 %v2252, %v2348
    %v2387 = vsub.f32 %v2254, %v2351
    %v2388 = vsub.f32 %v2257, %v2354
    %v2389 = vsub.f32 %v2259, %v2357
    %v2390 = vsub.f32 %v2315, %v2360
    %v2391 = vsub.f32 %v2317, %v2363
    %v2392 = vsub.f32 %v2320, %v2366
    %v2393 = vsub.f32 %v2322, %v2369
    %v2394 = vsub.f32 %v2325, %v2372
    %v2395 = vsub.f32 %v2327, %v2375
    %v2396 = vsub.f32 %v2330, %v2378
    %v2397 = vsub.f32 %v2332, %v2381
    %v2398 = vmul.f32 %v2382, 1.442695
    %v2399 = vpow.pop %v2398
    %v2400 = vmul.f32 %v2383, 1.442695
    %v2401 = vpow.pop %v2400
    %v2402 = vmul.f32 %v2384, 1.442695
    %v2403 = vpow.pop %v2402
    %v2404 = vmul.f32 %v2385, 1.442695
    %v2405 = vpow.pop %v2404
    %v2406 = vmul.f32 %v2386, 1.442695
    %v2407 = vpow.pop %v2406
    %v2408 = vmul.f32 %v2387, 1.442695
    %v2409 = vpow.pop %v2408
    %v2410 = vmul.f32 %v2388, 1.442695
    %v2411 = vpow.pop %v2410
    %v2412 = vmul.f32 %v2389, 1.442695
    %v2413 = vpow.pop %v2412
    %v2414 = vmul.f32 %v2390, 1.442695
    %v2415 = vpow.pop %v2414
    %v2416 = vmul.f32 %v2391, 1.442695
    %v2417 = vpow.pop %v2416
    %v2418 = vmul.f32 %v2392, 1.442695
    %v2419 = vpow.pop %v2418
    %v2420 = vmul.f32 %v2393, 1.442695
    %v2421 = vpow.pop %v2420
    %v2422 = vmul.f32 %v2394, 1.442695
    %v2423 = vpow.pop %v2422
    %v2424 = vmul.f32 %v2395, 1.442695
    %v2425 = vpow.pop %v2424
    %v2426 = vmul.f32 %v2396, 1.442695
    %v2427 = vpow.pop %v2426
    %v2428 = vmul.f32 %v2397, 1.442695
    %v2429 = vpow.pop %v2428
    %v2430 = vsel %vm1059, %v2399, 0.0
    %2431 = vadd.xlane.f32.xlu0 %v2430
    %v2432 = vpop.xlane.xlu0 %2431
    %v2433 = vsel %vm1059, %v2401, 0.0
    %2434 = vadd.xlane.f32.xlu0 %v2433
    %v2435 = vpop.xlane.xlu0 %2434
    %v2436 = vsel %vm1059, %v2403, 0.0
    %2437 = vadd.xlane.f32.xlu0 %v2436
    %v2438 = vpop.xlane.xlu0 %2437
    %v2439 = vsel %vm1059, %v2405, 0.0
    %2440 = vadd.xlane.f32.xlu0 %v2439
    %v2441 = vpop.xlane.xlu0 %2440
    %v2442 = vsel %vm1059, %v2407, 0.0
    %2443 = vadd.xlane.f32.xlu0 %v2442
    %v2444 = vpop.xlane.xlu0 %2443
    %v2445 = vsel %vm1059, %v2409, 0.0
    %2446 = vadd.xlane.f32.xlu0 %v2445
    %v2447 = vpop.xlane.xlu0 %2446
    %v2448 = vsel %vm1059, %v2411, 0.0
    %2449 = vadd.xlane.f32.xlu0 %v2448
    %v2450 = vpop.xlane.xlu0 %2449
    %v2451 = vsel %vm1059, %v2413, 0.0
    %2452 = vadd.xlane.f32.xlu0 %v2451
    %v2453 = vpop.xlane.xlu0 %2452
    %v2454 = vsel %vm1059, %v2415, 0.0
    %2455 = vadd.xlane.f32.xlu0 %v2454
    %v2456 = vpop.xlane.xlu0 %2455
    %v2457 = vsel %vm1059, %v2417, 0.0
    %2458 = vadd.xlane.f32.xlu0 %v2457
    %v2459 = vpop.xlane.xlu0 %2458
    %v2460 = vsel %vm1059, %v2419, 0.0
    %2461 = vadd.xlane.f32.xlu0 %v2460
    %v2462 = vpop.xlane.xlu0 %2461
    %v2463 = vsel %vm1059, %v2421, 0.0
    %2464 = vadd.xlane.f32.xlu0 %v2463
    %v2465 = vpop.xlane.xlu0 %2464
    %v2466 = vsel %vm1059, %v2423, 0.0
    %2467 = vadd.xlane.f32.xlu0 %v2466
    %v2468 = vpop.xlane.xlu0 %2467
    %v2469 = vsel %vm1059, %v2425, 0.0
    %2470 = vadd.xlane.f32.xlu0 %v2469
    %v2471 = vpop.xlane.xlu0 %2470
    %v2472 = vsel %vm1059, %v2427, 0.0
    %2473 = vadd.xlane.f32.xlu0 %v2472
    %v2474 = vpop.xlane.xlu0 %2473
    %v2475 = vsel %vm1059, %v2429, 0.0
    %2476 = vadd.xlane.f32.xlu0 %v2475
    %v2477 = vpop.xlane.xlu0 %2476
    %v2478 = vrcp.pop %v2432
    %v2479 = vrcp.pop %v2435
    %v2480 = vrcp.pop %v2438
    %v2481 = vrcp.pop %v2441
    %v2482 = vrcp.pop %v2444
    %v2483 = vrcp.pop %v2447
    %v2484 = vrcp.pop %v2450
    %v2485 = vrcp.pop %v2453
    %v2486 = vrcp.pop %v2456
    %v2487 = vrcp.pop %v2459
    %v2488 = vrcp.pop %v2462
    %v2489 = vrcp.pop %v2465
    %v2490 = vrcp.pop %v2468
    %v2491 = vrcp.pop %v2471
    %v2492 = vrcp.pop %v2474
    %v2493 = vrcp.pop %v2477
    %v2494 = vmul.f32 %v2399, %v2478
    %v2495 = vmul.f32 %v2401, %v2479
    %v2496 = vmul.f32 %v2403, %v2480
    %v2497 = vmul.f32 %v2405, %v2481
    %v2498 = vmul.f32 %v2407, %v2482
    %v2499 = vmul.f32 %v2409, %v2483
    %v2500 = vmul.f32 %v2411, %v2484
    %v2501 = vmul.f32 %v2413, %v2485
    %v2502 = vmul.f32 %v2415, %v2486
    %v2503 = vmul.f32 %v2417, %v2487
    %v2504 = vmul.f32 %v2419, %v2488
    %v2505 = vmul.f32 %v2421, %v2489
    %v2506 = vmul.f32 %v2423, %v2490
    %v2507 = vmul.f32 %v2425, %v2491
    %v2508 = vmul.f32 %v2427, %v2492
    %v2509 = vmul.f32 %v2429, %v2493
    %v2510 = vpack.c.bf16 %v2494, %v2494
    %v2511 = vpack.c.bf16 %v2495, %v2495
    %v2512 = vpack.c.bf16 %v2496, %v2496
    %v2513 = vpack.c.bf16 %v2497, %v2497
    %v2514 = vpack.c.bf16 %v2498, %v2498
    %v2515 = vpack.c.bf16 %v2499, %v2499
    %v2516 = vpack.c.bf16 %v2500, %v2500
    %v2517 = vpack.c.bf16 %v2501, %v2501
    %v2518 = vpack.c.bf16 %v2502, %v2502
    %v2519 = vpack.c.bf16 %v2503, %v2503
    %v2520 = vpack.c.bf16 %v2504, %v2504
    %v2521 = vpack.c.bf16 %v2505, %v2505
    %v2522 = vpack.c.bf16 %v2506, %v2506
    %v2523 = vpack.c.bf16 %v2507, %v2507
    %v2524 = vpack.c.bf16 %v2508, %v2508
    %v2525 = vpack.c.bf16 %v2509, %v2509
    %v2534 = vunpack.c.l.b16 %v2510
    %v2535 = vunpack.c.l.b16 %v2511
    %v2536 = vunpack.c.l.b16 %v2512
    %v2537 = vunpack.c.l.b16 %v2513
    %v2538 = vunpack.c.l.b16 %v2514
    %v2539 = vunpack.c.l.b16 %v2515
    %v2540 = vunpack.c.l.b16 %v2516
    %v2541 = vunpack.c.l.b16 %v2517
    %v2542 = vpack.c.b16 %v2535, %v2534
    %v2543 = vpack.c.b16 %v2537, %v2536
    %v2544 = vpack.c.b16 %v2539, %v2538
    %v2545 = vpack.c.b16 %v2541, %v2540
    %2546 = vrot.lane.b32.xlu0 %v1288, 64
    %v2547 = vpop.permute.xlu0 %2546
    %2548 = vrot.lane.b32.xlu0 %v1289, 64
    %v2549 = vpop.permute.xlu0 %2548
    %2550 = vrot.lane.b32.xlu0 %v1290, 64
    %v2551 = vpop.permute.xlu0 %2550
    %2552 = vrot.lane.b32.xlu0 %v1291, 64
    %v2553 = vpop.permute.xlu0 %2552
    %v2559 = vsel %vm1059, %v2542, 0
    %v2562 = vsel %vm1059, %v2543, 0
    %v2565 = vsel %vm1059, %v2544, 0
    %v2568 = vsel %vm1059, %v2545, 0
    %2570 = vmatpush.bf16.msra.mxu0 0
    %2571 = vmatpush.bf16.msra.mxu0 0
    %2572 = vmatpush.bf16.msra.mxu0 0
    %2573 = vmatpush.bf16.msra.mxu0 0
    %2574 = vmatpush.bf16.msra.mxu0 %v2553
    %2575 = vmatpush.bf16.msra.mxu0 %v2551
    %2576 = vmatpush.bf16.msra.mxu0 %v2549
    %2577 = vmatpush.bf16.msra.mxu0 %v2547
    %2578 = vmatmul.bf16.gmra.mxu0 %v2559
    %v2579 = vpop.f32.mrf.mxu0
    %v2580 = vadd.f32 0.0, %v2579
    %v2581 = vpop.f32.mrf.mxu0
    %v2582 = vadd.f32 0.0, %v2581
    %2583 = vmatmul.bf16.gmra.mxu0 %v2562
    %v2584 = vpop.f32.mrf.mxu0
    %v2585 = vadd.f32 0.0, %v2584
    %v2586 = vpop.f32.mrf.mxu0
    %v2587 = vadd.f32 0.0, %v2586
    %2588 = vmatmul.bf16.gmra.mxu0 %v2565
    %v2589 = vpop.f32.mrf.mxu0
    %v2590 = vadd.f32 0.0, %v2589
    %v2591 = vpop.f32.mrf.mxu0
    %v2592 = vadd.f32 0.0, %v2591
    %2593 = vmatmul.bf16.gmra.mxu0 %v2568
    %v2594 = vpop.f32.mrf.mxu0
    %v2595 = vadd.f32 0.0, %v2594
    %v2596 = vpop.f32.mrf.mxu0
    %v2597 = vadd.f32 0.0, %v2596
    %2598 = vdwg.mxu0
    %v2607 = vunpack.c.l.b16 %v2518
    %v2608 = vunpack.c.l.b16 %v2519
    %v2609 = vunpack.c.l.b16 %v2520
    %v2610 = vunpack.c.l.b16 %v2521
    %v2611 = vunpack.c.l.b16 %v2522
    %v2612 = vunpack.c.l.b16 %v2523
    %v2613 = vunpack.c.l.b16 %v2524
    %v2614 = vunpack.c.l.b16 %v2525
    %v2615 = vpack.c.b16 %v2608, %v2607
    %v2616 = vpack.c.b16 %v2610, %v2609
    %v2617 = vpack.c.b16 %v2612, %v2611
    %v2618 = vpack.c.b16 %v2614, %v2613
    %2619 = vrot.lane.b32.xlu0 %v1373, 64
    %v2620 = vpop.permute.xlu0 %2619
    %2621 = vrot.lane.b32.xlu0 %v1374, 64
    %v2622 = vpop.permute.xlu0 %2621
    %2623 = vrot.lane.b32.xlu0 %v1375, 64
    %v2624 = vpop.permute.xlu0 %2623
    %2625 = vrot.lane.b32.xlu0 %v1376, 64
    %v2626 = vpop.permute.xlu0 %2625
    %v2632 = vsel %vm1059, %v2615, 0
    %v2635 = vsel %vm1059, %v2616, 0
    %v2638 = vsel %vm1059, %v2617, 0
    %v2641 = vsel %vm1059, %v2618, 0
    %2643 = vmatpush.bf16.msra.mxu0 0
    %2644 = vmatpush.bf16.msra.mxu0 0
    %2645 = vmatpush.bf16.msra.mxu0 0
    %2646 = vmatpush.bf16.msra.mxu0 0
    %2647 = vmatpush.bf16.msra.mxu0 %v2626
    %2648 = vmatpush.bf16.msra.mxu0 %v2624
    %2649 = vmatpush.bf16.msra.mxu0 %v2622
    %2650 = vmatpush.bf16.msra.mxu0 %v2620
    %2651 = vmatmul.bf16.gmra.mxu0 %v2632
    %v2652 = vpop.f32.mrf.mxu0
    %v2653 = vadd.f32 0.0, %v2652
    %v2654 = vpop.f32.mrf.mxu0
    %v2655 = vadd.f32 0.0, %v2654
    %2656 = vmatmul.bf16.gmra.mxu0 %v2635
    %v2657 = vpop.f32.mrf.mxu0
    %v2658 = vadd.f32 0.0, %v2657
    %v2659 = vpop.f32.mrf.mxu0
    %v2660 = vadd.f32 0.0, %v2659
    %2661 = vmatmul.bf16.gmra.mxu0 %v2638
    %v2662 = vpop.f32.mrf.mxu0
    %v2663 = vadd.f32 0.0, %v2662
    %v2664 = vpop.f32.mrf.mxu0
    %v2665 = vadd.f32 0.0, %v2664
    %2666 = vmatmul.bf16.gmra.mxu0 %v2641
    %v2667 = vpop.f32.mrf.mxu0
    %v2668 = vadd.f32 0.0, %v2667
    %v2669 = vpop.f32.mrf.mxu0
    %v2670 = vadd.f32 0.0, %v2669
    %2671 = vdwg.mxu0
    %v2672 = vpack.c.bf16 %v2582, %v2580
    %v2673 = vpack.c.bf16 %v2587, %v2585
    %v2674 = vpack.c.bf16 %v2592, %v2590
    %v2675 = vpack.c.bf16 %v2597, %v2595
    %v2676 = vpack.c.bf16 %v2655, %v2653
    %v2677 = vpack.c.bf16 %v2660, %v2658
    %v2678 = vpack.c.bf16 %v2665, %v2663
    %v2679 = vpack.c.bf16 %v2670, %v2668
    %v2684 = vunpack.c.l.b16 %v864
    %v2685 = vunpack.c.l.b16 %v865
    %v2686 = vunpack.c.l.b16 %v866
    %v2687 = vunpack.c.l.b16 %v867
    %v2688 = vpack.c.b16 %v2685, %v2684
    %v2689 = vpack.c.b16 %v2687, %v2686
    %v2693 = vsel %vm928, %v2672, 0
    %v2696 = vsel %vm928, %v2673, 0
    %v2699 = vsel %vm928, %v2674, 0
    %v2702 = vsel %vm928, %v2675, 0
    %v2705 = vsel %vm928, %v2676, 0
    %v2708 = vsel %vm928, %v2677, 0
    %v2711 = vsel %vm928, %v2678, 0
    %v2714 = vsel %vm928, %v2679, 0
    %2716 = vmatpush.bf16.msra.mxu0 0
    %2717 = vmatpush.bf16.msra.mxu0 0
    %2718 = vmatpush.bf16.msra.mxu0 0
    %2719 = vmatpush.bf16.msra.mxu0 0
    %2720 = vmatpush.bf16.msra.mxu0 0
    %2721 = vmatpush.bf16.msra.mxu0 0
    %2722 = vmatpush.bf16.msra.mxu0 %v2689
    %2723 = vmatpush.bf16.msra.mxu0 %v2688
    %2724 = vmatmul.bf16.gmra.mxu0 %v2693
    %v2725 = vpop.f32.mrf.mxu0
    %v2726 = vadd.f32 0.0, %v2725
    %v2727 = vpop.f32.mrf.mxu0
    %v2728 = vadd.f32 0.0, %v2727
    %2729 = vmatmul.bf16.gmra.mxu0 %v2696
    %v2730 = vpop.f32.mrf.mxu0
    %v2731 = vadd.f32 0.0, %v2730
    %v2732 = vpop.f32.mrf.mxu0
    %v2733 = vadd.f32 0.0, %v2732
    %2734 = vmatmul.bf16.gmra.mxu0 %v2699
    %v2735 = vpop.f32.mrf.mxu0
    %v2736 = vadd.f32 0.0, %v2735
    %v2737 = vpop.f32.mrf.mxu0
    %v2738 = vadd.f32 0.0, %v2737
    %2739 = vmatmul.bf16.gmra.mxu0 %v2702
    %v2740 = vpop.f32.mrf.mxu0
    %v2741 = vadd.f32 0.0, %v2740
    %v2742 = vpop.f32.mrf.mxu0
    %v2743 = vadd.f32 0.0, %v2742
    %2744 = vmatmul.bf16.gmra.mxu0 %v2705
    %v2745 = vpop.f32.mrf.mxu0
    %v2746 = vadd.f32 0.0, %v2745
    %v2747 = vpop.f32.mrf.mxu0
    %v2748 = vadd.f32 0.0, %v2747
    %2749 = vmatmul.bf16.gmra.mxu0 %v2708
    %v2750 = vpop.f32.mrf.mxu0
    %v2751 = vadd.f32 0.0, %v2750
    %v2752 = vpop.f32.mrf.mxu0
    %v2753 = vadd.f32 0.0, %v2752
    %2754 = vmatmul.bf16.gmra.mxu0 %v2711
    %v2755 = vpop.f32.mrf.mxu0
    %v2756 = vadd.f32 0.0, %v2755
    %v2757 = vpop.f32.mrf.mxu0
    %v2758 = vadd.f32 0.0, %v2757
    %2759 = vmatmul.bf16.gmra.mxu0 %v2714
    %v2760 = vpop.f32.mrf.mxu0
    %v2761 = vadd.f32 0.0, %v2760
    %v2762 = vpop.f32.mrf.mxu0
    %v2763 = vadd.f32 0.0, %v2762
    %2764 = vdwg.mxu0
    %v2765 = vadd.f32 %v2101, %v2726
    %v2766 = vadd.f32 %v2103, %v2728
    %v2767 = vadd.f32 %v2106, %v2731
    %v2768 = vadd.f32 %v2108, %v2733
    %v2769 = vadd.f32 %v2111, %v2736
    %v2770 = vadd.f32 %v2113, %v2738
    %v2771 = vadd.f32 %v2116, %v2741
    %v2772 = vadd.f32 %v2118, %v2743
    %v2773 = vadd.f32 %v2121, %v2746
    %v2774 = vadd.f32 %v2123, %v2748
    %v2775 = vadd.f32 %v2126, %v2751
    %v2776 = vadd.f32 %v2128, %v2753
    %v2777 = vadd.f32 %v2131, %v2756
    %v2778 = vadd.f32 %v2133, %v2758
    %v2779 = vadd.f32 %v2136, %v2761
    %v2780 = vadd.f32 %v2138, %v2763
    %2781 = vrot.lane.b32.xlu0 %v824, 32
    %v2782 = vpop.permute.xlu0 %2781
    %2783 = vrot.lane.b32.xlu0 %v826, 32
    %v2784 = vpop.permute.xlu0 %2783
    %2785 = vrot.lane.b32.xlu0 %v828, 32
    %v2786 = vpop.permute.xlu0 %2785
    %2787 = vrot.lane.b32.xlu0 %v830, 32
    %v2788 = vpop.permute.xlu0 %2787
    %2789 = vrot.lane.b32.xlu0 %v832, 32
    %v2790 = vpop.permute.xlu0 %2789
    %2791 = vrot.lane.b32.xlu0 %v834, 32
    %v2792 = vpop.permute.xlu0 %2791
    %2793 = vrot.lane.b32.xlu0 %v836, 32
    %v2794 = vpop.permute.xlu0 %2793
    %2795 = vrot.lane.b32.xlu0 %v838, 32
    %v2796 = vpop.permute.xlu0 %2795
    %2797 = vrot.lane.b32.xlu0 %v840, 32
    %v2798 = vpop.permute.xlu0 %2797
    %2799 = vrot.lane.b32.xlu0 %v842, 32
    %v2800 = vpop.permute.xlu0 %2799
    %2801 = vrot.lane.b32.xlu0 %v844, 32
    %v2802 = vpop.permute.xlu0 %2801
    %2803 = vrot.lane.b32.xlu0 %v846, 32
    %v2804 = vpop.permute.xlu0 %2803
    %2805 = vrot.lane.b32.xlu0 %v848, 32
    %v2806 = vpop.permute.xlu0 %2805
    %2807 = vrot.lane.b32.xlu0 %v850, 32
    %v2808 = vpop.permute.xlu0 %2807
    %2809 = vrot.lane.b32.xlu0 %v852, 32
    %v2810 = vpop.permute.xlu0 %2809
    %2811 = vrot.lane.b32.xlu0 %v854, 32
    %v2812 = vpop.permute.xlu0 %2811
    %v2813 = vrot.slane %v2782, 4
    %v2814 = vrot.slane %v2784, 4
    %v2815 = vrot.slane %v2786, 4
    %v2816 = vrot.slane %v2788, 4
    %v2817 = vrot.slane %v2790, 4
    %v2818 = vrot.slane %v2792, 4
    %v2819 = vrot.slane %v2794, 4
    %v2820 = vrot.slane %v2796, 4
    %v2821 = vrot.slane %v2798, 4
    %v2822 = vrot.slane %v2800, 4
    %v2823 = vrot.slane %v2802, 4
    %v2824 = vrot.slane %v2804, 4
    %v2825 = vrot.slane %v2806, 4
    %v2826 = vrot.slane %v2808, 4
    %v2827 = vrot.slane %v2810, 4
    %v2828 = vrot.slane %v2812, 4
    %2829 = vrot.lane.b32.xlu0 %v912, 32
    %v2830 = vpop.permute.xlu0 %2829
    %2831 = vrot.lane.b32.xlu0 %v913, 32
    %v2832 = vpop.permute.xlu0 %2831
    %2833 = vrot.lane.b32.xlu0 %v914, 32
    %v2834 = vpop.permute.xlu0 %2833
    %2835 = vrot.lane.b32.xlu0 %v915, 32
    %v2836 = vpop.permute.xlu0 %2835
    %v2837 = vunpack.c.l.b16 %v2813
    %v2838 = vunpack.c.l.b16 %v2814
    %v2839 = vunpack.c.l.b16 %v2815
    %v2840 = vunpack.c.l.b16 %v2816
    %v2841 = vunpack.c.l.b16 %v2817
    %v2842 = vunpack.c.l.b16 %v2818
    %v2843 = vunpack.c.l.b16 %v2819
    %v2844 = vunpack.c.l.b16 %v2820
    %v2845 = vpack.c.b16 %v2838, %v2837
    %v2846 = vpack.c.b16 %v2840, %v2839
    %v2847 = vpack.c.b16 %v2842, %v2841
    %v2848 = vpack.c.b16 %v2844, %v2843
    %v2850 = vsel %vm928, %v2830, 0
    %v2853 = vsel %vm928, %v2832, 0
    %v2856 = vsel %vm928, %v2834, 0
    %v2859 = vsel %vm928, %v2836, 0
    %v2862 = vsel %vm928, %v2845, 0
    %v2865 = vsel %vm928, %v2846, 0
    %v2868 = vsel %vm928, %v2847, 0
    %v2871 = vsel %vm928, %v2848, 0
    %2873 = vmatpush.bf16.xpose.msra.mxu0 0
    %2874 = vmatpush.bf16.xpose.msra.mxu0 0
    %2875 = vmatpush.bf16.xpose.msra.mxu0 0
    %2876 = vmatpush.bf16.xpose.msra.mxu0 0
    %2877 = vmatpush.bf16.xpose.msra.mxu0 %v2871
    %2878 = vmatpush.bf16.xpose.msra.mxu0 %v2868
    %2879 = vmatpush.bf16.xpose.msra.mxu0 %v2865
    %2880 = vmatpush.bf16.xpose.msra.mxu0 %v2862
    %2881 = vmatmul.bf16.gmra.mxu0 %v2850
    %v2882 = vpop.f32.mrf.mxu0
    %v2883 = vadd.f32 0.0, %v2882
    %v2884 = vpop.f32.mrf.mxu0
    %v2885 = vadd.f32 0.0, %v2884
    %2886 = vmatmul.bf16.gmra.mxu0 %v2853
    %v2887 = vpop.f32.mrf.mxu0
    %v2888 = vadd.f32 0.0, %v2887
    %v2889 = vpop.f32.mrf.mxu0
    %v2890 = vadd.f32 0.0, %v2889
    %2891 = vmatmul.bf16.gmra.mxu0 %v2856
    %v2892 = vpop.f32.mrf.mxu0
    %v2893 = vadd.f32 0.0, %v2892
    %v2894 = vpop.f32.mrf.mxu0
    %v2895 = vadd.f32 0.0, %v2894
    %2896 = vmatmul.bf16.gmra.mxu0 %v2859
    %v2897 = vpop.f32.mrf.mxu0
    %v2898 = vadd.f32 0.0, %v2897
    %v2899 = vpop.f32.mrf.mxu0
    %v2900 = vadd.f32 0.0, %v2899
    %2901 = vdwg.mxu0
    %2902 = vrot.lane.b32.xlu0 %v990, 32
    %v2903 = vpop.permute.xlu0 %2902
    %2904 = vrot.lane.b32.xlu0 %v991, 32
    %v2905 = vpop.permute.xlu0 %2904
    %2906 = vrot.lane.b32.xlu0 %v992, 32
    %v2907 = vpop.permute.xlu0 %2906
    %2908 = vrot.lane.b32.xlu0 %v993, 32
    %v2909 = vpop.permute.xlu0 %2908
    %v2910 = vunpack.c.l.b16 %v2821
    %v2911 = vunpack.c.l.b16 %v2822
    %v2912 = vunpack.c.l.b16 %v2823
    %v2913 = vunpack.c.l.b16 %v2824
    %v2914 = vunpack.c.l.b16 %v2825
    %v2915 = vunpack.c.l.b16 %v2826
    %v2916 = vunpack.c.l.b16 %v2827
    %v2917 = vunpack.c.l.b16 %v2828
    %v2918 = vpack.c.b16 %v2911, %v2910
    %v2919 = vpack.c.b16 %v2913, %v2912
    %v2920 = vpack.c.b16 %v2915, %v2914
    %v2921 = vpack.c.b16 %v2917, %v2916
    %v2923 = vsel %vm928, %v2903, 0
    %v2926 = vsel %vm928, %v2905, 0
    %v2929 = vsel %vm928, %v2907, 0
    %v2932 = vsel %vm928, %v2909, 0
    %v2935 = vsel %vm928, %v2918, 0
    %v2938 = vsel %vm928, %v2919, 0
    %v2941 = vsel %vm928, %v2920, 0
    %v2944 = vsel %vm928, %v2921, 0
    %2946 = vmatpush.bf16.xpose.msra.mxu0 0
    %2947 = vmatpush.bf16.xpose.msra.mxu0 0
    %2948 = vmatpush.bf16.xpose.msra.mxu0 0
    %2949 = vmatpush.bf16.xpose.msra.mxu0 0
    %2950 = vmatpush.bf16.xpose.msra.mxu0 %v2944
    %2951 = vmatpush.bf16.xpose.msra.mxu0 %v2941
    %2952 = vmatpush.bf16.xpose.msra.mxu0 %v2938
    %2953 = vmatpush.bf16.xpose.msra.mxu0 %v2935
    %2954 = vmatmul.bf16.gmra.mxu0 %v2923
    %v2955 = vpop.f32.mrf.mxu0
    %v2956 = vadd.f32 0.0, %v2955
    %v2957 = vpop.f32.mrf.mxu0
    %v2958 = vadd.f32 0.0, %v2957
    %2959 = vmatmul.bf16.gmra.mxu0 %v2926
    %v2960 = vpop.f32.mrf.mxu0
    %v2961 = vadd.f32 0.0, %v2960
    %v2962 = vpop.f32.mrf.mxu0
    %v2963 = vadd.f32 0.0, %v2962
    %2964 = vmatmul.bf16.gmra.mxu0 %v2929
    %v2965 = vpop.f32.mrf.mxu0
    %v2966 = vadd.f32 0.0, %v2965
    %v2967 = vpop.f32.mrf.mxu0
    %v2968 = vadd.f32 0.0, %v2967
    %2969 = vmatmul.bf16.gmra.mxu0 %v2932
    %v2970 = vpop.f32.mrf.mxu0
    %v2971 = vadd.f32 0.0, %v2970
    %v2972 = vpop.f32.mrf.mxu0
    %v2973 = vadd.f32 0.0, %v2972
    %2974 = vdwg.mxu0
    %v2975 = vsel %vm1059, %v2883, -inf
    %2976 = vmax.xlane.f32.xlu0 %v2975
    %v2977 = vpop.xlane.xlu0 %2976
    %v2978 = vsel %vm1059, %v2885, -inf
    %2979 = vmax.xlane.f32.xlu0 %v2978
    %v2980 = vpop.xlane.xlu0 %2979
    %v2981 = vsel %vm1059, %v2888, -inf
    %2982 = vmax.xlane.f32.xlu0 %v2981
    %v2983 = vpop.xlane.xlu0 %2982
    %v2984 = vsel %vm1059, %v2890, -inf
    %2985 = vmax.xlane.f32.xlu0 %v2984
    %v2986 = vpop.xlane.xlu0 %2985
    %v2987 = vsel %vm1059, %v2893, -inf
    %2988 = vmax.xlane.f32.xlu0 %v2987
    %v2989 = vpop.xlane.xlu0 %2988
    %v2990 = vsel %vm1059, %v2895, -inf
    %2991 = vmax.xlane.f32.xlu0 %v2990
    %v2992 = vpop.xlane.xlu0 %2991
    %v2993 = vsel %vm1059, %v2898, -inf
    %2994 = vmax.xlane.f32.xlu0 %v2993
    %v2995 = vpop.xlane.xlu0 %2994
    %v2996 = vsel %vm1059, %v2900, -inf
    %2997 = vmax.xlane.f32.xlu0 %v2996
    %v2998 = vpop.xlane.xlu0 %2997
    %v2999 = vsel %vm1059, %v2956, -inf
    %3000 = vmax.xlane.f32.xlu0 %v2999
    %v3001 = vpop.xlane.xlu0 %3000
    %v3002 = vsel %vm1059, %v2958, -inf
    %3003 = vmax.xlane.f32.xlu0 %v3002
    %v3004 = vpop.xlane.xlu0 %3003
    %v3005 = vsel %vm1059, %v2961, -inf
    %3006 = vmax.xlane.f32.xlu0 %v3005
    %v3007 = vpop.xlane.xlu0 %3006
    %v3008 = vsel %vm1059, %v2963, -inf
    %3009 = vmax.xlane.f32.xlu0 %v3008
    %v3010 = vpop.xlane.xlu0 %3009
    %v3011 = vsel %vm1059, %v2966, -inf
    %3012 = vmax.xlane.f32.xlu0 %v3011
    %v3013 = vpop.xlane.xlu0 %3012
    %v3014 = vsel %vm1059, %v2968, -inf
    %3015 = vmax.xlane.f32.xlu0 %v3014
    %v3016 = vpop.xlane.xlu0 %3015
    %v3017 = vsel %vm1059, %v2971, -inf
    %3018 = vmax.xlane.f32.xlu0 %v3017
    %v3019 = vpop.xlane.xlu0 %3018
    %v3020 = vsel %vm1059, %v2973, -inf
    %3021 = vmax.xlane.f32.xlu0 %v3020
    %v3022 = vpop.xlane.xlu0 %3021
    %v3023 = vsub.f32 %v2883, %v2977
    %v3024 = vsub.f32 %v2885, %v2980
    %v3025 = vsub.f32 %v2888, %v2983
    %v3026 = vsub.f32 %v2890, %v2986
    %v3027 = vsub.f32 %v2893, %v2989
    %v3028 = vsub.f32 %v2895, %v2992
    %v3029 = vsub.f32 %v2898, %v2995
    %v3030 = vsub.f32 %v2900, %v2998
    %v3031 = vsub.f32 %v2956, %v3001
    %v3032 = vsub.f32 %v2958, %v3004
    %v3033 = vsub.f32 %v2961, %v3007
    %v3034 = vsub.f32 %v2963, %v3010
    %v3035 = vsub.f32 %v2966, %v3013
    %v3036 = vsub.f32 %v2968, %v3016
    %v3037 = vsub.f32 %v2971, %v3019
    %v3038 = vsub.f32 %v2973, %v3022
    %v3039 = vmul.f32 %v3023, 1.442695
    %v3040 = vpow.pop %v3039
    %v3041 = vmul.f32 %v3024, 1.442695
    %v3042 = vpow.pop %v3041
    %v3043 = vmul.f32 %v3025, 1.442695
    %v3044 = vpow.pop %v3043
    %v3045 = vmul.f32 %v3026, 1.442695
    %v3046 = vpow.pop %v3045
    %v3047 = vmul.f32 %v3027, 1.442695
    %v3048 = vpow.pop %v3047
    %v3049 = vmul.f32 %v3028, 1.442695
    %v3050 = vpow.pop %v3049
    %v3051 = vmul.f32 %v3029, 1.442695
    %v3052 = vpow.pop %v3051
    %v3053 = vmul.f32 %v3030, 1.442695
    %v3054 = vpow.pop %v3053
    %v3055 = vmul.f32 %v3031, 1.442695
    %v3056 = vpow.pop %v3055
    %v3057 = vmul.f32 %v3032, 1.442695
    %v3058 = vpow.pop %v3057
    %v3059 = vmul.f32 %v3033, 1.442695
    %v3060 = vpow.pop %v3059
    %v3061 = vmul.f32 %v3034, 1.442695
    %v3062 = vpow.pop %v3061
    %v3063 = vmul.f32 %v3035, 1.442695
    %v3064 = vpow.pop %v3063
    %v3065 = vmul.f32 %v3036, 1.442695
    %v3066 = vpow.pop %v3065
    %v3067 = vmul.f32 %v3037, 1.442695
    %v3068 = vpow.pop %v3067
    %v3069 = vmul.f32 %v3038, 1.442695
    %v3070 = vpow.pop %v3069
    %v3071 = vsel %vm1059, %v3040, 0.0
    %3072 = vadd.xlane.f32.xlu0 %v3071
    %v3073 = vpop.xlane.xlu0 %3072
    %v3074 = vsel %vm1059, %v3042, 0.0
    %3075 = vadd.xlane.f32.xlu0 %v3074
    %v3076 = vpop.xlane.xlu0 %3075
    %v3077 = vsel %vm1059, %v3044, 0.0
    %3078 = vadd.xlane.f32.xlu0 %v3077
    %v3079 = vpop.xlane.xlu0 %3078
    %v3080 = vsel %vm1059, %v3046, 0.0
    %3081 = vadd.xlane.f32.xlu0 %v3080
    %v3082 = vpop.xlane.xlu0 %3081
    %v3083 = vsel %vm1059, %v3048, 0.0
    %3084 = vadd.xlane.f32.xlu0 %v3083
    %v3085 = vpop.xlane.xlu0 %3084
    %v3086 = vsel %vm1059, %v3050, 0.0
    %3087 = vadd.xlane.f32.xlu0 %v3086
    %v3088 = vpop.xlane.xlu0 %3087
    %v3089 = vsel %vm1059, %v3052, 0.0
    %3090 = vadd.xlane.f32.xlu0 %v3089
    %v3091 = vpop.xlane.xlu0 %3090
    %v3092 = vsel %vm1059, %v3054, 0.0
    %3093 = vadd.xlane.f32.xlu0 %v3092
    %v3094 = vpop.xlane.xlu0 %3093
    %v3095 = vsel %vm1059, %v3056, 0.0
    %3096 = vadd.xlane.f32.xlu0 %v3095
    %v3097 = vpop.xlane.xlu0 %3096
    %v3098 = vsel %vm1059, %v3058, 0.0
    %3099 = vadd.xlane.f32.xlu0 %v3098
    %v3100 = vpop.xlane.xlu0 %3099
    %v3101 = vsel %vm1059, %v3060, 0.0
    %3102 = vadd.xlane.f32.xlu0 %v3101
    %v3103 = vpop.xlane.xlu0 %3102
    %v3104 = vsel %vm1059, %v3062, 0.0
    %3105 = vadd.xlane.f32.xlu0 %v3104
    %v3106 = vpop.xlane.xlu0 %3105
    %v3107 = vsel %vm1059, %v3064, 0.0
    %3108 = vadd.xlane.f32.xlu0 %v3107
    %v3109 = vpop.xlane.xlu0 %3108
    %v3110 = vsel %vm1059, %v3066, 0.0
    %3111 = vadd.xlane.f32.xlu0 %v3110
    %v3112 = vpop.xlane.xlu0 %3111
    %v3113 = vsel %vm1059, %v3068, 0.0
    %3114 = vadd.xlane.f32.xlu0 %v3113
    %v3115 = vpop.xlane.xlu0 %3114
    %v3116 = vsel %vm1059, %v3070, 0.0
    %3117 = vadd.xlane.f32.xlu0 %v3116
    %v3118 = vpop.xlane.xlu0 %3117
    %v3119 = vrcp.pop %v3073
    %v3120 = vrcp.pop %v3076
    %v3121 = vrcp.pop %v3079
    %v3122 = vrcp.pop %v3082
    %v3123 = vrcp.pop %v3085
    %v3124 = vrcp.pop %v3088
    %v3125 = vrcp.pop %v3091
    %v3126 = vrcp.pop %v3094
    %v3127 = vrcp.pop %v3097
    %v3128 = vrcp.pop %v3100
    %v3129 = vrcp.pop %v3103
    %v3130 = vrcp.pop %v3106
    %v3131 = vrcp.pop %v3109
    %v3132 = vrcp.pop %v3112
    %v3133 = vrcp.pop %v3115
    %v3134 = vrcp.pop %v3118
    %v3135 = vmul.f32 %v3040, %v3119
    %v3136 = vmul.f32 %v3042, %v3120
    %v3137 = vmul.f32 %v3044, %v3121
    %v3138 = vmul.f32 %v3046, %v3122
    %v3139 = vmul.f32 %v3048, %v3123
    %v3140 = vmul.f32 %v3050, %v3124
    %v3141 = vmul.f32 %v3052, %v3125
    %v3142 = vmul.f32 %v3054, %v3126
    %v3143 = vmul.f32 %v3056, %v3127
    %v3144 = vmul.f32 %v3058, %v3128
    %v3145 = vmul.f32 %v3060, %v3129
    %v3146 = vmul.f32 %v3062, %v3130
    %v3147 = vmul.f32 %v3064, %v3131
    %v3148 = vmul.f32 %v3066, %v3132
    %v3149 = vmul.f32 %v3068, %v3133
    %v3150 = vmul.f32 %v3070, %v3134
    %v3151 = vpack.c.bf16 %v3135, %v3135
    %v3152 = vpack.c.bf16 %v3136, %v3136
    %v3153 = vpack.c.bf16 %v3137, %v3137
    %v3154 = vpack.c.bf16 %v3138, %v3138
    %v3155 = vpack.c.bf16 %v3139, %v3139
    %v3156 = vpack.c.bf16 %v3140, %v3140
    %v3157 = vpack.c.bf16 %v3141, %v3141
    %v3158 = vpack.c.bf16 %v3142, %v3142
    %v3159 = vpack.c.bf16 %v3143, %v3143
    %v3160 = vpack.c.bf16 %v3144, %v3144
    %v3161 = vpack.c.bf16 %v3145, %v3145
    %v3162 = vpack.c.bf16 %v3146, %v3146
    %v3163 = vpack.c.bf16 %v3147, %v3147
    %v3164 = vpack.c.bf16 %v3148, %v3148
    %v3165 = vpack.c.bf16 %v3149, %v3149
    %v3166 = vpack.c.bf16 %v3150, %v3150
    %v3175 = vunpack.c.l.b16 %v3151
    %v3176 = vunpack.c.l.b16 %v3152
    %v3177 = vunpack.c.l.b16 %v3153
    %v3178 = vunpack.c.l.b16 %v3154
    %v3179 = vunpack.c.l.b16 %v3155
    %v3180 = vunpack.c.l.b16 %v3156
    %v3181 = vunpack.c.l.b16 %v3157
    %v3182 = vunpack.c.l.b16 %v3158
    %v3183 = vpack.c.b16 %v3176, %v3175
    %v3184 = vpack.c.b16 %v3178, %v3177
    %v3185 = vpack.c.b16 %v3180, %v3179
    %v3186 = vpack.c.b16 %v3182, %v3181
    %3187 = vrot.lane.b32.xlu0 %v1288, 32
    %v3188 = vpop.permute.xlu0 %3187
    %3189 = vrot.lane.b32.xlu0 %v1289, 32
    %v3190 = vpop.permute.xlu0 %3189
    %3191 = vrot.lane.b32.xlu0 %v1290, 32
    %v3192 = vpop.permute.xlu0 %3191
    %3193 = vrot.lane.b32.xlu0 %v1291, 32
    %v3194 = vpop.permute.xlu0 %3193
    %v3200 = vsel %vm1059, %v3183, 0
    %v3203 = vsel %vm1059, %v3184, 0
    %v3206 = vsel %vm1059, %v3185, 0
    %v3209 = vsel %vm1059, %v3186, 0
    %3211 = vmatpush.bf16.msra.mxu0 0
    %3212 = vmatpush.bf16.msra.mxu0 0
    %3213 = vmatpush.bf16.msra.mxu0 0
    %3214 = vmatpush.bf16.msra.mxu0 0
    %3215 = vmatpush.bf16.msra.mxu0 %v3194
    %3216 = vmatpush.bf16.msra.mxu0 %v3192
    %3217 = vmatpush.bf16.msra.mxu0 %v3190
    %3218 = vmatpush.bf16.msra.mxu0 %v3188
    %3219 = vmatmul.bf16.gmra.mxu0 %v3200
    %v3220 = vpop.f32.mrf.mxu0
    %v3221 = vadd.f32 0.0, %v3220
    %v3222 = vpop.f32.mrf.mxu0
    %v3223 = vadd.f32 0.0, %v3222
    %3224 = vmatmul.bf16.gmra.mxu0 %v3203
    %v3225 = vpop.f32.mrf.mxu0
    %v3226 = vadd.f32 0.0, %v3225
    %v3227 = vpop.f32.mrf.mxu0
    %v3228 = vadd.f32 0.0, %v3227
    %3229 = vmatmul.bf16.gmra.mxu0 %v3206
    %v3230 = vpop.f32.mrf.mxu0
    %v3231 = vadd.f32 0.0, %v3230
    %v3232 = vpop.f32.mrf.mxu0
    %v3233 = vadd.f32 0.0, %v3232
    %3234 = vmatmul.bf16.gmra.mxu0 %v3209
    %v3235 = vpop.f32.mrf.mxu0
    %v3236 = vadd.f32 0.0, %v3235
    %v3237 = vpop.f32.mrf.mxu0
    %v3238 = vadd.f32 0.0, %v3237
    %3239 = vdwg.mxu0
    %v3248 = vunpack.c.l.b16 %v3159
    %v3249 = vunpack.c.l.b16 %v3160
    %v3250 = vunpack.c.l.b16 %v3161
    %v3251 = vunpack.c.l.b16 %v3162
    %v3252 = vunpack.c.l.b16 %v3163
    %v3253 = vunpack.c.l.b16 %v3164
    %v3254 = vunpack.c.l.b16 %v3165
    %v3255 = vunpack.c.l.b16 %v3166
    %v3256 = vpack.c.b16 %v3249, %v3248
    %v3257 = vpack.c.b16 %v3251, %v3250
    %v3258 = vpack.c.b16 %v3253, %v3252
    %v3259 = vpack.c.b16 %v3255, %v3254
    %3260 = vrot.lane.b32.xlu0 %v1373, 32
    %v3261 = vpop.permute.xlu0 %3260
    %3262 = vrot.lane.b32.xlu0 %v1374, 32
    %v3263 = vpop.permute.xlu0 %3262
    %3264 = vrot.lane.b32.xlu0 %v1375, 32
    %v3265 = vpop.permute.xlu0 %3264
    %3266 = vrot.lane.b32.xlu0 %v1376, 32
    %v3267 = vpop.permute.xlu0 %3266
    %v3273 = vsel %vm1059, %v3256, 0
    %v3276 = vsel %vm1059, %v3257, 0
    %v3279 = vsel %vm1059, %v3258, 0
    %v3282 = vsel %vm1059, %v3259, 0
    %3284 = vmatpush.bf16.msra.mxu0 0
    %3285 = vmatpush.bf16.msra.mxu0 0
    %3286 = vmatpush.bf16.msra.mxu0 0
    %3287 = vmatpush.bf16.msra.mxu0 0
    %3288 = vmatpush.bf16.msra.mxu0 %v3267
    %3289 = vmatpush.bf16.msra.mxu0 %v3265
    %3290 = vmatpush.bf16.msra.mxu0 %v3263
    %3291 = vmatpush.bf16.msra.mxu0 %v3261
    %3292 = vmatmul.bf16.gmra.mxu0 %v3273
    %v3293 = vpop.f32.mrf.mxu0
    %v3294 = vadd.f32 0.0, %v3293
    %v3295 = vpop.f32.mrf.mxu0
    %v3296 = vadd.f32 0.0, %v3295
    %3297 = vmatmul.bf16.gmra.mxu0 %v3276
    %v3298 = vpop.f32.mrf.mxu0
    %v3299 = vadd.f32 0.0, %v3298
    %v3300 = vpop.f32.mrf.mxu0
    %v3301 = vadd.f32 0.0, %v3300
    %3302 = vmatmul.bf16.gmra.mxu0 %v3279
    %v3303 = vpop.f32.mrf.mxu0
    %v3304 = vadd.f32 0.0, %v3303
    %v3305 = vpop.f32.mrf.mxu0
    %v3306 = vadd.f32 0.0, %v3305
    %3307 = vmatmul.bf16.gmra.mxu0 %v3282
    %v3308 = vpop.f32.mrf.mxu0
    %v3309 = vadd.f32 0.0, %v3308
    %v3310 = vpop.f32.mrf.mxu0
    %v3311 = vadd.f32 0.0, %v3310
    %3312 = vdwg.mxu0
    %v3313 = vpack.c.bf16 %v3223, %v3221
    %v3314 = vpack.c.bf16 %v3228, %v3226
    %v3315 = vpack.c.bf16 %v3233, %v3231
    %v3316 = vpack.c.bf16 %v3238, %v3236
    %v3317 = vpack.c.bf16 %v3296, %v3294
    %v3318 = vpack.c.bf16 %v3301, %v3299
    %v3319 = vpack.c.bf16 %v3306, %v3304
    %v3320 = vpack.c.bf16 %v3311, %v3309
    %v3325 = vunpack.c.l.b16 %v868
    %v3326 = vunpack.c.l.b16 %v869
    %v3327 = vunpack.c.l.b16 %v870
    %v3328 = vunpack.c.l.b16 %v871
    %v3329 = vpack.c.b16 %v3326, %v3325
    %v3330 = vpack.c.b16 %v3328, %v3327
    %v3334 = vsel %vm928, %v3313, 0
    %v3337 = vsel %vm928, %v3314, 0
    %v3340 = vsel %vm928, %v3315, 0
    %v3343 = vsel %vm928, %v3316, 0
    %v3346 = vsel %vm928, %v3317, 0
    %v3349 = vsel %vm928, %v3318, 0
    %v3352 = vsel %vm928, %v3319, 0
    %v3355 = vsel %vm928, %v3320, 0
    %3357 = vmatpush.bf16.msra.mxu0 0
    %3358 = vmatpush.bf16.msra.mxu0 0
    %3359 = vmatpush.bf16.msra.mxu0 0
    %3360 = vmatpush.bf16.msra.mxu0 0
    %3361 = vmatpush.bf16.msra.mxu0 0
    %3362 = vmatpush.bf16.msra.mxu0 0
    %3363 = vmatpush.bf16.msra.mxu0 %v3330
    %3364 = vmatpush.bf16.msra.mxu0 %v3329
    %3365 = vmatmul.bf16.gmra.mxu0 %v3334
    %v3366 = vpop.f32.mrf.mxu0
    %v3367 = vadd.f32 0.0, %v3366
    %v3368 = vpop.f32.mrf.mxu0
    %v3369 = vadd.f32 0.0, %v3368
    %3370 = vmatmul.bf16.gmra.mxu0 %v3337
    %v3371 = vpop.f32.mrf.mxu0
    %v3372 = vadd.f32 0.0, %v3371
    %v3373 = vpop.f32.mrf.mxu0
    %v3374 = vadd.f32 0.0, %v3373
    %3375 = vmatmul.bf16.gmra.mxu0 %v3340
    %v3376 = vpop.f32.mrf.mxu0
    %v3377 = vadd.f32 0.0, %v3376
    %v3378 = vpop.f32.mrf.mxu0
    %v3379 = vadd.f32 0.0, %v3378
    %3380 = vmatmul.bf16.gmra.mxu0 %v3343
    %v3381 = vpop.f32.mrf.mxu0
    %v3382 = vadd.f32 0.0, %v3381
    %v3383 = vpop.f32.mrf.mxu0
    %v3384 = vadd.f32 0.0, %v3383
    %3385 = vmatmul.bf16.gmra.mxu0 %v3346
    %v3386 = vpop.f32.mrf.mxu0
    %v3387 = vadd.f32 0.0, %v3386
    %v3388 = vpop.f32.mrf.mxu0
    %v3389 = vadd.f32 0.0, %v3388
    %3390 = vmatmul.bf16.gmra.mxu0 %v3349
    %v3391 = vpop.f32.mrf.mxu0
    %v3392 = vadd.f32 0.0, %v3391
    %v3393 = vpop.f32.mrf.mxu0
    %v3394 = vadd.f32 0.0, %v3393
    %3395 = vmatmul.bf16.gmra.mxu0 %v3352
    %v3396 = vpop.f32.mrf.mxu0
    %v3397 = vadd.f32 0.0, %v3396
    %v3398 = vpop.f32.mrf.mxu0
    %v3399 = vadd.f32 0.0, %v3398
    %3400 = vmatmul.bf16.gmra.mxu0 %v3355
    %v3401 = vpop.f32.mrf.mxu0
    %v3402 = vadd.f32 0.0, %v3401
    %v3403 = vpop.f32.mrf.mxu0
    %v3404 = vadd.f32 0.0, %v3403
    %3405 = vdwg.mxu0
    %v3406 = vadd.f32 %v2765, %v3367
    %v3407 = vadd.f32 %v2766, %v3369
    %v3408 = vadd.f32 %v2767, %v3372
    %v3409 = vadd.f32 %v2768, %v3374
    %v3410 = vadd.f32 %v2769, %v3377
    %v3411 = vadd.f32 %v2770, %v3379
    %v3412 = vadd.f32 %v2771, %v3382
    %v3413 = vadd.f32 %v2772, %v3384
    %v3414 = vadd.f32 %v2773, %v3387
    %v3415 = vadd.f32 %v2774, %v3389
    %v3416 = vadd.f32 %v2775, %v3392
    %v3417 = vadd.f32 %v2776, %v3394
    %v3418 = vadd.f32 %v2777, %v3397
    %v3419 = vadd.f32 %v2778, %v3399
    %v3420 = vadd.f32 %v2779, %v3402
    %v3421 = vadd.f32 %v2780, %v3404
    %v3422 = vadd.f32 %v126, %v3406
    %v3423 = vadd.f32 %v127, %v3407
    %v3424 = vadd.f32 %v128, %v3408
    %v3425 = vadd.f32 %v129, %v3409
    %v3426 = vadd.f32 %v130, %v3410
    %v3427 = vadd.f32 %v131, %v3411
    %v3428 = vadd.f32 %v132, %v3412
    %v3429 = vadd.f32 %v133, %v3413
    %v3430 = vadd.f32 %v134, %v3414
    %v3431 = vadd.f32 %v135, %v3415
    %v3432 = vadd.f32 %v136, %v3416
    %v3433 = vadd.f32 %v137, %v3417
    %v3434 = vadd.f32 %v138, %v3418
    %v3435 = vadd.f32 %v139, %v3419
    %v3436 = vadd.f32 %v140, %v3420
    %v3437 = vadd.f32 %v141, %v3421
    %v3438 = vld [vmem:[%s4] sm:$0x1]
    %v3440 = vperm.slane %v3438, 0
    %v3442 = vadd.f32 %v3422, %v3440
    %v3443 = vadd.f32 %v3423, %v3440
    %v3444 = vadd.f32 %v3424, %v3440
    %v3445 = vadd.f32 %v3425, %v3440
    %v3446 = vadd.f32 %v3426, %v3440
    %v3447 = vadd.f32 %v3427, %v3440
    %v3448 = vadd.f32 %v3428, %v3440
    %v3449 = vadd.f32 %v3429, %v3440
    %v3450 = vadd.f32 %v3430, %v3440
    %v3451 = vadd.f32 %v3431, %v3440
    %v3452 = vadd.f32 %v3432, %v3440
    %v3453 = vadd.f32 %v3433, %v3440
    %v3454 = vadd.f32 %v3434, %v3440
    %v3455 = vadd.f32 %v3435, %v3440
    %v3456 = vadd.f32 %v3436, %v3440
    %v3457 = vadd.f32 %v3437, %v3440
    %3458 = vadd.xlane.f32.xlu0 %v3442
    %v3459 = vpop.xlane.xlu0 %3458
    %3460 = vadd.xlane.f32.xlu0 %v3443
    %v3461 = vpop.xlane.xlu0 %3460
    %3462 = vadd.xlane.f32.xlu0 %v3444
    %v3463 = vpop.xlane.xlu0 %3462
    %3464 = vadd.xlane.f32.xlu0 %v3445
    %v3465 = vpop.xlane.xlu0 %3464
    %3466 = vadd.xlane.f32.xlu0 %v3446
    %v3467 = vpop.xlane.xlu0 %3466
    %3468 = vadd.xlane.f32.xlu0 %v3447
    %v3469 = vpop.xlane.xlu0 %3468
    %3470 = vadd.xlane.f32.xlu0 %v3448
    %v3471 = vpop.xlane.xlu0 %3470
    %3472 = vadd.xlane.f32.xlu0 %v3449
    %v3473 = vpop.xlane.xlu0 %3472
    %3474 = vadd.xlane.f32.xlu0 %v3450
    %v3475 = vpop.xlane.xlu0 %3474
    %3476 = vadd.xlane.f32.xlu0 %v3451
    %v3477 = vpop.xlane.xlu0 %3476
    %3478 = vadd.xlane.f32.xlu0 %v3452
    %v3479 = vpop.xlane.xlu0 %3478
    %3480 = vadd.xlane.f32.xlu0 %v3453
    %v3481 = vpop.xlane.xlu0 %3480
    %3482 = vadd.xlane.f32.xlu0 %v3454
    %v3483 = vpop.xlane.xlu0 %3482
    %3484 = vadd.xlane.f32.xlu0 %v3455
    %v3485 = vpop.xlane.xlu0 %3484
    %3486 = vadd.xlane.f32.xlu0 %v3456
    %v3487 = vpop.xlane.xlu0 %3486
    %3488 = vadd.xlane.f32.xlu0 %v3457
    %v3489 = vpop.xlane.xlu0 %3488
    %v3490 = vmul.f32 %v3459, %v180
    %v3491 = vmul.f32 %v3461, %v180
    %v3492 = vmul.f32 %v3463, %v180
    %v3493 = vmul.f32 %v3465, %v180
    %v3494 = vmul.f32 %v3467, %v180
    %v3495 = vmul.f32 %v3469, %v180
    %v3496 = vmul.f32 %v3471, %v180
    %v3497 = vmul.f32 %v3473, %v180
    %v3498 = vmul.f32 %v3475, %v180
    %v3499 = vmul.f32 %v3477, %v180
    %v3500 = vmul.f32 %v3479, %v180
    %v3501 = vmul.f32 %v3481, %v180
    %v3502 = vmul.f32 %v3483, %v180
    %v3503 = vmul.f32 %v3485, %v180
    %v3504 = vmul.f32 %v3487, %v180
    %v3505 = vmul.f32 %v3489, %v180
    %v3506 = vmul.f32 %v3442, %v3442
    %v3507 = vmul.f32 %v3443, %v3443
    %v3508 = vmul.f32 %v3444, %v3444
    %v3509 = vmul.f32 %v3445, %v3445
    %v3510 = vmul.f32 %v3446, %v3446
    %v3511 = vmul.f32 %v3447, %v3447
    %v3512 = vmul.f32 %v3448, %v3448
    %v3513 = vmul.f32 %v3449, %v3449
    %v3514 = vmul.f32 %v3450, %v3450
    %v3515 = vmul.f32 %v3451, %v3451
    %v3516 = vmul.f32 %v3452, %v3452
    %v3517 = vmul.f32 %v3453, %v3453
    %v3518 = vmul.f32 %v3454, %v3454
    %v3519 = vmul.f32 %v3455, %v3455
    %v3520 = vmul.f32 %v3456, %v3456
    %v3521 = vmul.f32 %v3457, %v3457
    %3522 = vadd.xlane.f32.xlu0 %v3506
    %v3523 = vpop.xlane.xlu0 %3522
    %3524 = vadd.xlane.f32.xlu0 %v3507
    %v3525 = vpop.xlane.xlu0 %3524
    %3526 = vadd.xlane.f32.xlu0 %v3508
    %v3527 = vpop.xlane.xlu0 %3526
    %3528 = vadd.xlane.f32.xlu0 %v3509
    %v3529 = vpop.xlane.xlu0 %3528
    %3530 = vadd.xlane.f32.xlu0 %v3510
    %v3531 = vpop.xlane.xlu0 %3530
    %3532 = vadd.xlane.f32.xlu0 %v3511
    %v3533 = vpop.xlane.xlu0 %3532
    %3534 = vadd.xlane.f32.xlu0 %v3512
    %v3535 = vpop.xlane.xlu0 %3534
    %3536 = vadd.xlane.f32.xlu0 %v3513
    %v3537 = vpop.xlane.xlu0 %3536
    %3538 = vadd.xlane.f32.xlu0 %v3514
    %v3539 = vpop.xlane.xlu0 %3538
    %3540 = vadd.xlane.f32.xlu0 %v3515
    %v3541 = vpop.xlane.xlu0 %3540
    %3542 = vadd.xlane.f32.xlu0 %v3516
    %v3543 = vpop.xlane.xlu0 %3542
    %3544 = vadd.xlane.f32.xlu0 %v3517
    %v3545 = vpop.xlane.xlu0 %3544
    %3546 = vadd.xlane.f32.xlu0 %v3518
    %v3547 = vpop.xlane.xlu0 %3546
    %3548 = vadd.xlane.f32.xlu0 %v3519
    %v3549 = vpop.xlane.xlu0 %3548
    %3550 = vadd.xlane.f32.xlu0 %v3520
    %v3551 = vpop.xlane.xlu0 %3550
    %3552 = vadd.xlane.f32.xlu0 %v3521
    %v3553 = vpop.xlane.xlu0 %3552
    %v3554 = vmul.f32 %v3523, %v180
    %v3555 = vmul.f32 %v3525, %v180
    %v3556 = vmul.f32 %v3527, %v180
    %v3557 = vmul.f32 %v3529, %v180
    %v3558 = vmul.f32 %v3531, %v180
    %v3559 = vmul.f32 %v3533, %v180
    %v3560 = vmul.f32 %v3535, %v180
    %v3561 = vmul.f32 %v3537, %v180
    %v3562 = vmul.f32 %v3539, %v180
    %v3563 = vmul.f32 %v3541, %v180
    %v3564 = vmul.f32 %v3543, %v180
    %v3565 = vmul.f32 %v3545, %v180
    %v3566 = vmul.f32 %v3547, %v180
    %v3567 = vmul.f32 %v3549, %v180
    %v3568 = vmul.f32 %v3551, %v180
    %v3569 = vmul.f32 %v3553, %v180
    %v3570 = vmul.f32 %v3490, %v3490
    %v3571 = vmul.f32 %v3491, %v3491
    %v3572 = vmul.f32 %v3492, %v3492
    %v3573 = vmul.f32 %v3493, %v3493
    %v3574 = vmul.f32 %v3494, %v3494
    %v3575 = vmul.f32 %v3495, %v3495
    %v3576 = vmul.f32 %v3496, %v3496
    %v3577 = vmul.f32 %v3497, %v3497
    %v3578 = vmul.f32 %v3498, %v3498
    %v3579 = vmul.f32 %v3499, %v3499
    %v3580 = vmul.f32 %v3500, %v3500
    %v3581 = vmul.f32 %v3501, %v3501
    %v3582 = vmul.f32 %v3502, %v3502
    %v3583 = vmul.f32 %v3503, %v3503
    %v3584 = vmul.f32 %v3504, %v3504
    %v3585 = vmul.f32 %v3505, %v3505
    %v3586 = vsub.f32 %v3554, %v3570
    %v3587 = vsub.f32 %v3555, %v3571
    %v3588 = vsub.f32 %v3556, %v3572
    %v3589 = vsub.f32 %v3557, %v3573
    %v3590 = vsub.f32 %v3558, %v3574
    %v3591 = vsub.f32 %v3559, %v3575
    %v3592 = vsub.f32 %v3560, %v3576
    %v3593 = vsub.f32 %v3561, %v3577
    %v3594 = vsub.f32 %v3562, %v3578
    %v3595 = vsub.f32 %v3563, %v3579
    %v3596 = vsub.f32 %v3564, %v3580
    %v3597 = vsub.f32 %v3565, %v3581
    %v3598 = vsub.f32 %v3566, %v3582
    %v3599 = vsub.f32 %v3567, %v3583
    %v3600 = vsub.f32 %v3568, %v3584
    %v3601 = vsub.f32 %v3569, %v3585
    %v3602 = vsub.f32 %v3442, %v3490
    %v3603 = vsub.f32 %v3443, %v3491
    %v3604 = vsub.f32 %v3444, %v3492
    %v3605 = vsub.f32 %v3445, %v3493
    %v3606 = vsub.f32 %v3446, %v3494
    %v3607 = vsub.f32 %v3447, %v3495
    %v3608 = vsub.f32 %v3448, %v3496
    %v3609 = vsub.f32 %v3449, %v3497
    %v3610 = vsub.f32 %v3450, %v3498
    %v3611 = vsub.f32 %v3451, %v3499
    %v3612 = vsub.f32 %v3452, %v3500
    %v3613 = vsub.f32 %v3453, %v3501
    %v3614 = vsub.f32 %v3454, %v3502
    %v3615 = vsub.f32 %v3455, %v3503
    %v3616 = vsub.f32 %v3456, %v3504
    %v3617 = vsub.f32 %v3457, %v3505
    %v3618 = vadd.f32 %v3586, 1e-06
    %v3619 = vadd.f32 %v3587, 1e-06
    %v3620 = vadd.f32 %v3588, 1e-06
    %v3621 = vadd.f32 %v3589, 1e-06
    %v3622 = vadd.f32 %v3590, 1e-06
    %v3623 = vadd.f32 %v3591, 1e-06
    %v3624 = vadd.f32 %v3592, 1e-06
    %v3625 = vadd.f32 %v3593, 1e-06
    %v3626 = vadd.f32 %v3594, 1e-06
    %v3627 = vadd.f32 %v3595, 1e-06
    %v3628 = vadd.f32 %v3596, 1e-06
    %v3629 = vadd.f32 %v3597, 1e-06
    %v3630 = vadd.f32 %v3598, 1e-06
    %v3631 = vadd.f32 %v3599, 1e-06
    %v3632 = vadd.f32 %v3600, 1e-06
    %v3633 = vadd.f32 %v3601, 1e-06
    %v3634 = vrsqrt.pop %v3618
    %v3635 = vmul.f32 %v3634, %v3618
    %v3636 = vmul.f32 %v3635, %v3634
    %v3637 = vmul.f32 0.5, %v3636
    %v3638 = vsub.f32 1.5, %v3637
    %v3639 = vmul.f32 %v3634, %v3638
    %vm3640 = vweird.f32 %v3618
    %vm3641 = vweird.f32 %v3634
    %vm3642 = vmor %vm3640, %vm3641
    %v3643 = vsel %vm3642, %v3634, %v3639
    %v3644 = vrsqrt.pop %v3619
    %v3645 = vmul.f32 %v3644, %v3619
    %v3646 = vmul.f32 %v3645, %v3644
    %v3647 = vmul.f32 0.5, %v3646
    %v3648 = vsub.f32 1.5, %v3647
    %v3649 = vmul.f32 %v3644, %v3648
    %vm3650 = vweird.f32 %v3619
    %vm3651 = vweird.f32 %v3644
    %vm3652 = vmor %vm3650, %vm3651
    %v3653 = vsel %vm3652, %v3644, %v3649
    %v3654 = vrsqrt.pop %v3620
    %v3655 = vmul.f32 %v3654, %v3620
    %v3656 = vmul.f32 %v3655, %v3654
    %v3657 = vmul.f32 0.5, %v3656
    %v3658 = vsub.f32 1.5, %v3657
    %v3659 = vmul.f32 %v3654, %v3658
    %vm3660 = vweird.f32 %v3620
    %vm3661 = vweird.f32 %v3654
    %vm3662 = vmor %vm3660, %vm3661
    %v3663 = vsel %vm3662, %v3654, %v3659
    %v3664 = vrsqrt.pop %v3621
    %v3665 = vmul.f32 %v3664, %v3621
    %v3666 = vmul.f32 %v3665, %v3664
    %v3667 = vmul.f32 0.5, %v3666
    %v3668 = vsub.f32 1.5, %v3667
    %v3669 = vmul.f32 %v3664, %v3668
    %vm3670 = vweird.f32 %v3621
    %vm3671 = vweird.f32 %v3664
    %vm3672 = vmor %vm3670, %vm3671
    %v3673 = vsel %vm3672, %v3664, %v3669
    %v3674 = vrsqrt.pop %v3622
    %v3675 = vmul.f32 %v3674, %v3622
    %v3676 = vmul.f32 %v3675, %v3674
    %v3677 = vmul.f32 0.5, %v3676
    %v3678 = vsub.f32 1.5, %v3677
    %v3679 = vmul.f32 %v3674, %v3678
    %vm3680 = vweird.f32 %v3622
    %vm3681 = vweird.f32 %v3674
    %vm3682 = vmor %vm3680, %vm3681
    %v3683 = vsel %vm3682, %v3674, %v3679
    %v3684 = vrsqrt.pop %v3623
    %v3685 = vmul.f32 %v3684, %v3623
    %v3686 = vmul.f32 %v3685, %v3684
    %v3687 = vmul.f32 0.5, %v3686
    %v3688 = vsub.f32 1.5, %v3687
    %v3689 = vmul.f32 %v3684, %v3688
    %vm3690 = vweird.f32 %v3623
    %vm3691 = vweird.f32 %v3684
    %vm3692 = vmor %vm3690, %vm3691
    %v3693 = vsel %vm3692, %v3684, %v3689
    %v3694 = vrsqrt.pop %v3624
    %v3695 = vmul.f32 %v3694, %v3624
    %v3696 = vmul.f32 %v3695, %v3694
    %v3697 = vmul.f32 0.5, %v3696
    %v3698 = vsub.f32 1.5, %v3697
    %v3699 = vmul.f32 %v3694, %v3698
    %vm3700 = vweird.f32 %v3624
    %vm3701 = vweird.f32 %v3694
    %vm3702 = vmor %vm3700, %vm3701
    %v3703 = vsel %vm3702, %v3694, %v3699
    %v3704 = vrsqrt.pop %v3625
    %v3705 = vmul.f32 %v3704, %v3625
    %v3706 = vmul.f32 %v3705, %v3704
    %v3707 = vmul.f32 0.5, %v3706
    %v3708 = vsub.f32 1.5, %v3707
    %v3709 = vmul.f32 %v3704, %v3708
    %vm3710 = vweird.f32 %v3625
    %vm3711 = vweird.f32 %v3704
    %vm3712 = vmor %vm3710, %vm3711
    %v3713 = vsel %vm3712, %v3704, %v3709
    %v3714 = vrsqrt.pop %v3626
    %v3715 = vmul.f32 %v3714, %v3626
    %v3716 = vmul.f32 %v3715, %v3714
    %v3717 = vmul.f32 0.5, %v3716
    %v3718 = vsub.f32 1.5, %v3717
    %v3719 = vmul.f32 %v3714, %v3718
    %vm3720 = vweird.f32 %v3626
    %vm3721 = vweird.f32 %v3714
    %vm3722 = vmor %vm3720, %vm3721
    %v3723 = vsel %vm3722, %v3714, %v3719
    %v3724 = vrsqrt.pop %v3627
    %v3725 = vmul.f32 %v3724, %v3627
    %v3726 = vmul.f32 %v3725, %v3724
    %v3727 = vmul.f32 0.5, %v3726
    %v3728 = vsub.f32 1.5, %v3727
    %v3729 = vmul.f32 %v3724, %v3728
    %vm3730 = vweird.f32 %v3627
    %vm3731 = vweird.f32 %v3724
    %vm3732 = vmor %vm3730, %vm3731
    %v3733 = vsel %vm3732, %v3724, %v3729
    %v3734 = vrsqrt.pop %v3628
    %v3735 = vmul.f32 %v3734, %v3628
    %v3736 = vmul.f32 %v3735, %v3734
    %v3737 = vmul.f32 0.5, %v3736
    %v3738 = vsub.f32 1.5, %v3737
    %v3739 = vmul.f32 %v3734, %v3738
    %vm3740 = vweird.f32 %v3628
    %vm3741 = vweird.f32 %v3734
    %vm3742 = vmor %vm3740, %vm3741
    %v3743 = vsel %vm3742, %v3734, %v3739
    %v3744 = vrsqrt.pop %v3629
    %v3745 = vmul.f32 %v3744, %v3629
    %v3746 = vmul.f32 %v3745, %v3744
    %v3747 = vmul.f32 0.5, %v3746
    %v3748 = vsub.f32 1.5, %v3747
    %v3749 = vmul.f32 %v3744, %v3748
    %vm3750 = vweird.f32 %v3629
    %vm3751 = vweird.f32 %v3744
    %vm3752 = vmor %vm3750, %vm3751
    %v3753 = vsel %vm3752, %v3744, %v3749
    %v3754 = vrsqrt.pop %v3630
    %v3755 = vmul.f32 %v3754, %v3630
    %v3756 = vmul.f32 %v3755, %v3754
    %v3757 = vmul.f32 0.5, %v3756
    %v3758 = vsub.f32 1.5, %v3757
    %v3759 = vmul.f32 %v3754, %v3758
    %vm3760 = vweird.f32 %v3630
    %vm3761 = vweird.f32 %v3754
    %vm3762 = vmor %vm3760, %vm3761
    %v3763 = vsel %vm3762, %v3754, %v3759
    %v3764 = vrsqrt.pop %v3631
    %v3765 = vmul.f32 %v3764, %v3631
    %v3766 = vmul.f32 %v3765, %v3764
    %v3767 = vmul.f32 0.5, %v3766
    %v3768 = vsub.f32 1.5, %v3767
    %v3769 = vmul.f32 %v3764, %v3768
    %vm3770 = vweird.f32 %v3631
    %vm3771 = vweird.f32 %v3764
    %vm3772 = vmor %vm3770, %vm3771
    %v3773 = vsel %vm3772, %v3764, %v3769
    %v3774 = vrsqrt.pop %v3632
    %v3775 = vmul.f32 %v3774, %v3632
    %v3776 = vmul.f32 %v3775, %v3774
    %v3777 = vmul.f32 0.5, %v3776
    %v3778 = vsub.f32 1.5, %v3777
    %v3779 = vmul.f32 %v3774, %v3778
    %vm3780 = vweird.f32 %v3632
    %vm3781 = vweird.f32 %v3774
    %vm3782 = vmor %vm3780, %vm3781
    %v3783 = vsel %vm3782, %v3774, %v3779
    %v3784 = vrsqrt.pop %v3633
    %v3785 = vmul.f32 %v3784, %v3633
    %v3786 = vmul.f32 %v3785, %v3784
    %v3787 = vmul.f32 0.5, %v3786
    %v3788 = vsub.f32 1.5, %v3787
    %v3789 = vmul.f32 %v3784, %v3788
    %vm3790 = vweird.f32 %v3633
    %vm3791 = vweird.f32 %v3784
    %vm3792 = vmor %vm3790, %vm3791
    %v3793 = vsel %vm3792, %v3784, %v3789
    %v3794 = vmul.f32 %v3602, %v3643
    %v3795 = vmul.f32 %v3603, %v3653
    %v3796 = vmul.f32 %v3604, %v3663
    %v3797 = vmul.f32 %v3605, %v3673
    %v3798 = vmul.f32 %v3606, %v3683
    %v3799 = vmul.f32 %v3607, %v3693
    %v3800 = vmul.f32 %v3608, %v3703
    %v3801 = vmul.f32 %v3609, %v3713
    %v3802 = vmul.f32 %v3610, %v3723
    %v3803 = vmul.f32 %v3611, %v3733
    %v3804 = vmul.f32 %v3612, %v3743
    %v3805 = vmul.f32 %v3613, %v3753
    %v3806 = vmul.f32 %v3614, %v3763
    %v3807 = vmul.f32 %v3615, %v3773
    %v3808 = vmul.f32 %v3616, %v3783
    %v3809 = vmul.f32 %v3617, %v3793
    %v3810 = vpack.c.bf16 %v3795, %v3794
    %v3811 = vpack.c.bf16 %v3797, %v3796
    %v3812 = vpack.c.bf16 %v3799, %v3798
    %v3813 = vpack.c.bf16 %v3801, %v3800
    %v3814 = vpack.c.bf16 %v3803, %v3802
    %v3815 = vpack.c.bf16 %v3805, %v3804
    %v3816 = vpack.c.bf16 %v3807, %v3806
    %v3817 = vpack.c.bf16 %v3809, %v3808
    %v3818 = vld [vmem:[#allocation10] sm:$0xff]
    %v3819 = vld [vmem:[#allocation10 + $0x8] sm:$0xff]
    %v3820 = vld [vmem:[#allocation10 + $0x10] sm:$0xff]
    %v3821 = vld [vmem:[#allocation10 + $0x18] sm:$0xff]
    %v3822 = vld [vmem:[#allocation10 + $0x20] sm:$0xff]
    %v3823 = vld [vmem:[#allocation10 + $0x28] sm:$0xff]
    %v3824 = vld [vmem:[#allocation10 + $0x30] sm:$0xff]
    %v3825 = vld [vmem:[#allocation10 + $0x38] sm:$0xff]
    %v3826 = vld [vmem:[#allocation10 + $0x40] sm:$0xff]
    %v3827 = vld [vmem:[#allocation10 + $0x48] sm:$0xff]
    %v3828 = vld [vmem:[#allocation10 + $0x50] sm:$0xff]
    %v3829 = vld [vmem:[#allocation10 + $0x58] sm:$0xff]
    %v3830 = vld [vmem:[#allocation10 + $0x60] sm:$0xff]
    %v3831 = vld [vmem:[#allocation10 + $0x68] sm:$0xff]
    %v3832 = vld [vmem:[#allocation10 + $0x70] sm:$0xff]
    %v3833 = vld [vmem:[#allocation10 + $0x78] sm:$0xff]
    %v3834 = vld [vmem:[#allocation10 + $0x80] sm:$0xff]
    %v3835 = vld [vmem:[#allocation10 + $0x88] sm:$0xff]
    %v3836 = vld [vmem:[#allocation10 + $0x90] sm:$0xff]
    %v3837 = vld [vmem:[#allocation10 + $0x98] sm:$0xff]
    %v3838 = vld [vmem:[#allocation10 + $0xa0] sm:$0xff]
    %v3839 = vld [vmem:[#allocation10 + $0xa8] sm:$0xff]
    %v3840 = vld [vmem:[#allocation10 + $0xb0] sm:$0xff]
    %v3841 = vld [vmem:[#allocation10 + $0xb8] sm:$0xff]
    %v3842 = vld [vmem:[#allocation10 + $0xc0] sm:$0xff]
    %v3843 = vld [vmem:[#allocation10 + $0xc8] sm:$0xff]
    %v3844 = vld [vmem:[#allocation10 + $0xd0] sm:$0xff]
    %v3845 = vld [vmem:[#allocation10 + $0xd8] sm:$0xff]
    %v3846 = vld [vmem:[#allocation10 + $0xe0] sm:$0xff]
    %v3847 = vld [vmem:[#allocation10 + $0xe8] sm:$0xff]
    %v3848 = vld [vmem:[#allocation10 + $0xf0] sm:$0xff]
    %v3849 = vld [vmem:[#allocation10 + $0xf8] sm:$0xff]
    %v3850 = vld [vmem:[%s6] sm:$0xf]
    %v3852 = vperm.slane %v3850, 0
    %v3853 = vperm.slane %v3850, 1
    %v3854 = vperm.slane %v3850, 2
    %v3855 = vperm.slane %v3850, 3
    %v3892 = vunpack.c.l.b16 %v3818
    %v3893 = vunpack.c.h.b16 %v3818
    %v3894 = vunpack.c.l.b16 %v3819
    %v3895 = vunpack.c.h.b16 %v3819
    %v3896 = vunpack.c.l.b16 %v3820
    %v3897 = vunpack.c.h.b16 %v3820
    %v3898 = vunpack.c.l.b16 %v3821
    %v3899 = vunpack.c.h.b16 %v3821
    %v3900 = vunpack.c.l.b16 %v3822
    %v3901 = vunpack.c.h.b16 %v3822
    %v3902 = vunpack.c.l.b16 %v3823
    %v3903 = vunpack.c.h.b16 %v3823
    %v3904 = vunpack.c.l.b16 %v3824
    %v3905 = vunpack.c.h.b16 %v3824
    %v3906 = vunpack.c.l.b16 %v3825
    %v3907 = vunpack.c.h.b16 %v3825
    %v3908 = vunpack.c.l.b16 %v3826
    %v3909 = vunpack.c.h.b16 %v3826
    %v3910 = vunpack.c.l.b16 %v3827
    %v3911 = vunpack.c.h.b16 %v3827
    %v3912 = vunpack.c.l.b16 %v3828
    %v3913 = vunpack.c.h.b16 %v3828
    %v3914 = vunpack.c.l.b16 %v3829
    %v3915 = vunpack.c.h.b16 %v3829
    %v3916 = vunpack.c.l.b16 %v3830
    %v3917 = vunpack.c.h.b16 %v3830
    %v3918 = vunpack.c.l.b16 %v3831
    %v3919 = vunpack.c.h.b16 %v3831
    %v3920 = vunpack.c.l.b16 %v3832
    %v3921 = vunpack.c.h.b16 %v3832
    %v3922 = vunpack.c.l.b16 %v3833
    %v3923 = vunpack.c.h.b16 %v3833
    %v3924 = vunpack.c.l.b16 %v3834
    %v3925 = vunpack.c.h.b16 %v3834
    %v3926 = vunpack.c.l.b16 %v3835
    %v3927 = vunpack.c.h.b16 %v3835
    %v3928 = vunpack.c.l.b16 %v3836
    %v3929 = vunpack.c.h.b16 %v3836
    %v3930 = vunpack.c.l.b16 %v3837
    %v3931 = vunpack.c.h.b16 %v3837
    %v3932 = vunpack.c.l.b16 %v3838
    %v3933 = vunpack.c.h.b16 %v3838
    %v3934 = vunpack.c.l.b16 %v3839
    %v3935 = vunpack.c.h.b16 %v3839
    %v3936 = vunpack.c.l.b16 %v3840
    %v3937 = vunpack.c.h.b16 %v3840
    %v3938 = vunpack.c.l.b16 %v3841
    %v3939 = vunpack.c.h.b16 %v3841
    %v3940 = vunpack.c.l.b16 %v3842
    %v3941 = vunpack.c.h.b16 %v3842
    %v3942 = vunpack.c.l.b16 %v3843
    %v3943 = vunpack.c.h.b16 %v3843
    %v3944 = vunpack.c.l.b16 %v3844
    %v3945 = vunpack.c.h.b16 %v3844
    %v3946 = vunpack.c.l.b16 %v3845
    %v3947 = vunpack.c.h.b16 %v3845
    %v3948 = vunpack.c.l.b16 %v3846
    %v3949 = vunpack.c.h.b16 %v3846
    %v3950 = vunpack.c.l.b16 %v3847
    %v3951 = vunpack.c.h.b16 %v3847
    %v3952 = vunpack.c.l.b16 %v3848
    %v3953 = vunpack.c.h.b16 %v3848
    %v3954 = vunpack.c.l.b16 %v3849
    %v3955 = vunpack.c.h.b16 %v3849
    %v3956 = vpack.c.b16 %v3896, %v3892
    %v3957 = vpack.c.b16 %v3897, %v3893
    %v3958 = vpack.c.b16 %v3898, %v3894
    %v3959 = vpack.c.b16 %v3899, %v3895
    %v3960 = vpack.c.b16 %v3904, %v3900
    %v3961 = vpack.c.b16 %v3905, %v3901
    %v3962 = vpack.c.b16 %v3906, %v3902
    %v3963 = vpack.c.b16 %v3907, %v3903
    %v3964 = vpack.c.b16 %v3912, %v3908
    %v3965 = vpack.c.b16 %v3913, %v3909
    %v3966 = vpack.c.b16 %v3914, %v3910
    %v3967 = vpack.c.b16 %v3915, %v3911
    %v3968 = vpack.c.b16 %v3920, %v3916
    %v3969 = vpack.c.b16 %v3921, %v3917
    %v3970 = vpack.c.b16 %v3922, %v3918
    %v3971 = vpack.c.b16 %v3923, %v3919
    %v3972 = vpack.c.b16 %v3928, %v3924
    %v3973 = vpack.c.b16 %v3929, %v3925
    %v3974 = vpack.c.b16 %v3930, %v3926
    %v3975 = vpack.c.b16 %v3931, %v3927
    %v3976 = vpack.c.b16 %v3936, %v3932
    %v3977 = vpack.c.b16 %v3937, %v3933
    %v3978 = vpack.c.b16 %v3938, %v3934
    %v3979 = vpack.c.b16 %v3939, %v3935
    %v3980 = vpack.c.b16 %v3944, %v3940
    %v3981 = vpack.c.b16 %v3945, %v3941
    %v3982 = vpack.c.b16 %v3946, %v3942
    %v3983 = vpack.c.b16 %v3947, %v3943
    %v3984 = vpack.c.b16 %v3952, %v3948
    %v3985 = vpack.c.b16 %v3953, %v3949
    %v3986 = vpack.c.b16 %v3954, %v3950
    %v3987 = vpack.c.b16 %v3955, %v3951
    %4020 = vmatpush.bf16.msra.mxu0 %v3984
    %4021 = vmatpush.bf16.msra.mxu0 %v3980
    %4022 = vmatpush.bf16.msra.mxu0 %v3976
    %4023 = vmatpush.bf16.msra.mxu0 %v3972
    %4024 = vmatpush.bf16.msra.mxu0 %v3968
    %4025 = vmatpush.bf16.msra.mxu0 %v3964
    %4026 = vmatpush.bf16.msra.mxu0 %v3960
    %4027 = vmatpush.bf16.msra.mxu0 %v3956
    %4028 = vmatmul.bf16.gmra.mxu0 %v3810
    %v4029 = vpop.f32.mrf.mxu0
    %v4030 = vadd.f32 %v3852, %v4029
    %v4031 = vpop.f32.mrf.mxu0
    %v4032 = vadd.f32 %v3852, %v4031
    %4033 = vmatmul.bf16.gmra.mxu0 %v3811
    %v4034 = vpop.f32.mrf.mxu0
    %v4035 = vadd.f32 %v3852, %v4034
    %v4036 = vpop.f32.mrf.mxu0
    %v4037 = vadd.f32 %v3852, %v4036
    %4038 = vmatmul.bf16.gmra.mxu0 %v3812
    %v4039 = vpop.f32.mrf.mxu0
    %v4040 = vadd.f32 %v3852, %v4039
    %v4041 = vpop.f32.mrf.mxu0
    %v4042 = vadd.f32 %v3852, %v4041
    %4043 = vmatmul.bf16.gmra.mxu0 %v3813
    %v4044 = vpop.f32.mrf.mxu0
    %v4045 = vadd.f32 %v3852, %v4044
    %v4046 = vpop.f32.mrf.mxu0
    %v4047 = vadd.f32 %v3852, %v4046
    %4048 = vmatmul.bf16.gmra.mxu0 %v3814
    %v4049 = vpop.f32.mrf.mxu0
    %v4050 = vadd.f32 %v3852, %v4049
    %v4051 = vpop.f32.mrf.mxu0
    %v4052 = vadd.f32 %v3852, %v4051
    %4053 = vmatmul.bf16.gmra.mxu0 %v3815
    %v4054 = vpop.f32.mrf.mxu0
    %v4055 = vadd.f32 %v3852, %v4054
    %v4056 = vpop.f32.mrf.mxu0
    %v4057 = vadd.f32 %v3852, %v4056
    %4058 = vmatmul.bf16.gmra.mxu0 %v3816
    %v4059 = vpop.f32.mrf.mxu0
    %v4060 = vadd.f32 %v3852, %v4059
    %v4061 = vpop.f32.mrf.mxu0
    %v4062 = vadd.f32 %v3852, %v4061
    %4063 = vmatmul.bf16.gmra.mxu0 %v3817
    %v4064 = vpop.f32.mrf.mxu0
    %v4065 = vadd.f32 %v3852, %v4064
    %v4066 = vpop.f32.mrf.mxu0
    %v4067 = vadd.f32 %v3852, %v4066
    %4068 = vdwg.mxu0
    %4069 = vmatpush.bf16.msra.mxu0 %v3985
    %4070 = vmatpush.bf16.msra.mxu0 %v3981
    %4071 = vmatpush.bf16.msra.mxu0 %v3977
    %4072 = vmatpush.bf16.msra.mxu0 %v3973
    %4073 = vmatpush.bf16.msra.mxu0 %v3969
    %4074 = vmatpush.bf16.msra.mxu0 %v3965
    %4075 = vmatpush.bf16.msra.mxu0 %v3961
    %4076 = vmatpush.bf16.msra.mxu0 %v3957
    %4077 = vmatmul.bf16.gmra.mxu0 %v3810
    %v4078 = vpop.f32.mrf.mxu0
    %v4079 = vadd.f32 %v3853, %v4078
    %v4080 = vpop.f32.mrf.mxu0
    %v4081 = vadd.f32 %v3853, %v4080
    %4082 = vmatmul.bf16.gmra.mxu0 %v3811
    %v4083 = vpop.f32.mrf.mxu0
    %v4084 = vadd.f32 %v3853, %v4083
    %v4085 = vpop.f32.mrf.mxu0
    %v4086 = vadd.f32 %v3853, %v4085
    %4087 = vmatmul.bf16.gmra.mxu0 %v3812
    %v4088 = vpop.f32.mrf.mxu0
    %v4089 = vadd.f32 %v3853, %v4088
    %v4090 = vpop.f32.mrf.mxu0
    %v4091 = vadd.f32 %v3853, %v4090
    %4092 = vmatmul.bf16.gmra.mxu0 %v3813
    %v4093 = vpop.f32.mrf.mxu0
    %v4094 = vadd.f32 %v3853, %v4093
    %v4095 = vpop.f32.mrf.mxu0
    %v4096 = vadd.f32 %v3853, %v4095
    %4097 = vmatmul.bf16.gmra.mxu0 %v3814
    %v4098 = vpop.f32.mrf.mxu0
    %v4099 = vadd.f32 %v3853, %v4098
    %v4100 = vpop.f32.mrf.mxu0
    %v4101 = vadd.f32 %v3853, %v4100
    %4102 = vmatmul.bf16.gmra.mxu0 %v3815
    %v4103 = vpop.f32.mrf.mxu0
    %v4104 = vadd.f32 %v3853, %v4103
    %v4105 = vpop.f32.mrf.mxu0
    %v4106 = vadd.f32 %v3853, %v4105
    %4107 = vmatmul.bf16.gmra.mxu0 %v3816
    %v4108 = vpop.f32.mrf.mxu0
    %v4109 = vadd.f32 %v3853, %v4108
    %v4110 = vpop.f32.mrf.mxu0
    %v4111 = vadd.f32 %v3853, %v4110
    %4112 = vmatmul.bf16.gmra.mxu0 %v3817
    %v4113 = vpop.f32.mrf.mxu0
    %v4114 = vadd.f32 %v3853, %v4113
    %v4115 = vpop.f32.mrf.mxu0
    %v4116 = vadd.f32 %v3853, %v4115
    %4117 = vdwg.mxu0
    %4118 = vmatpush.bf16.msra.mxu0 %v3986
    %4119 = vmatpush.bf16.msra.mxu0 %v3982
    %4120 = vmatpush.bf16.msra.mxu0 %v3978
    %4121 = vmatpush.bf16.msra.mxu0 %v3974
    %4122 = vmatpush.bf16.msra.mxu0 %v3970
    %4123 = vmatpush.bf16.msra.mxu0 %v3966
    %4124 = vmatpush.bf16.msra.mxu0 %v3962
    %4125 = vmatpush.bf16.msra.mxu0 %v3958
    %4126 = vmatmul.bf16.gmra.mxu0 %v3810
    %v4127 = vpop.f32.mrf.mxu0
    %v4128 = vadd.f32 %v3854, %v4127
    %v4129 = vpop.f32.mrf.mxu0
    %v4130 = vadd.f32 %v3854, %v4129
    %4131 = vmatmul.bf16.gmra.mxu0 %v3811
    %v4132 = vpop.f32.mrf.mxu0
    %v4133 = vadd.f32 %v3854, %v4132
    %v4134 = vpop.f32.mrf.mxu0
    %v4135 = vadd.f32 %v3854, %v4134
    %4136 = vmatmul.bf16.gmra.mxu0 %v3812
    %v4137 = vpop.f32.mrf.mxu0
    %v4138 = vadd.f32 %v3854, %v4137
    %v4139 = vpop.f32.mrf.mxu0
    %v4140 = vadd.f32 %v3854, %v4139
    %4141 = vmatmul.bf16.gmra.mxu0 %v3813
    %v4142 = vpop.f32.mrf.mxu0
    %v4143 = vadd.f32 %v3854, %v4142
    %v4144 = vpop.f32.mrf.mxu0
    %v4145 = vadd.f32 %v3854, %v4144
    %4146 = vmatmul.bf16.gmra.mxu0 %v3814
    %v4147 = vpop.f32.mrf.mxu0
    %v4148 = vadd.f32 %v3854, %v4147
    %v4149 = vpop.f32.mrf.mxu0
    %v4150 = vadd.f32 %v3854, %v4149
    %4151 = vmatmul.bf16.gmra.mxu0 %v3815
    %v4152 = vpop.f32.mrf.mxu0
    %v4153 = vadd.f32 %v3854, %v4152
    %v4154 = vpop.f32.mrf.mxu0
    %v4155 = vadd.f32 %v3854, %v4154
    %4156 = vmatmul.bf16.gmra.mxu0 %v3816
    %v4157 = vpop.f32.mrf.mxu0
    %v4158 = vadd.f32 %v3854, %v4157
    %v4159 = vpop.f32.mrf.mxu0
    %v4160 = vadd.f32 %v3854, %v4159
    %4161 = vmatmul.bf16.gmra.mxu0 %v3817
    %v4162 = vpop.f32.mrf.mxu0
    %v4163 = vadd.f32 %v3854, %v4162
    %v4164 = vpop.f32.mrf.mxu0
    %v4165 = vadd.f32 %v3854, %v4164
    %4166 = vdwg.mxu0
    %4167 = vmatpush.bf16.msra.mxu0 %v3987
    %4168 = vmatpush.bf16.msra.mxu0 %v3983
    %4169 = vmatpush.bf16.msra.mxu0 %v3979
    %4170 = vmatpush.bf16.msra.mxu0 %v3975
    %4171 = vmatpush.bf16.msra.mxu0 %v3971
    %4172 = vmatpush.bf16.msra.mxu0 %v3967
    %4173 = vmatpush.bf16.msra.mxu0 %v3963
    %4174 = vmatpush.bf16.msra.mxu0 %v3959
    %4175 = vmatmul.bf16.gmra.mxu0 %v3810
    %v4176 = vpop.f32.mrf.mxu0
    %v4177 = vadd.f32 %v3855, %v4176
    %v4178 = vpop.f32.mrf.mxu0
    %v4179 = vadd.f32 %v3855, %v4178
    %4180 = vmatmul.bf16.gmra.mxu0 %v3811
    %v4181 = vpop.f32.mrf.mxu0
    %v4182 = vadd.f32 %v3855, %v4181
    %v4183 = vpop.f32.mrf.mxu0
    %v4184 = vadd.f32 %v3855, %v4183
    %4185 = vmatmul.bf16.gmra.mxu0 %v3812
    %v4186 = vpop.f32.mrf.mxu0
    %v4187 = vadd.f32 %v3855, %v4186
    %v4188 = vpop.f32.mrf.mxu0
    %v4189 = vadd.f32 %v3855, %v4188
    %4190 = vmatmul.bf16.gmra.mxu0 %v3813
    %v4191 = vpop.f32.mrf.mxu0
    %v4192 = vadd.f32 %v3855, %v4191
    %v4193 = vpop.f32.mrf.mxu0
    %v4194 = vadd.f32 %v3855, %v4193
    %4195 = vmatmul.bf16.gmra.mxu0 %v3814
    %v4196 = vpop.f32.mrf.mxu0
    %v4197 = vadd.f32 %v3855, %v4196
    %v4198 = vpop.f32.mrf.mxu0
    %v4199 = vadd.f32 %v3855, %v4198
    %4200 = vmatmul.bf16.gmra.mxu0 %v3815
    %v4201 = vpop.f32.mrf.mxu0
    %v4202 = vadd.f32 %v3855, %v4201
    %v4203 = vpop.f32.mrf.mxu0
    %v4204 = vadd.f32 %v3855, %v4203
    %4205 = vmatmul.bf16.gmra.mxu0 %v3816
    %v4206 = vpop.f32.mrf.mxu0
    %v4207 = vadd.f32 %v3855, %v4206
    %v4208 = vpop.f32.mrf.mxu0
    %v4209 = vadd.f32 %v3855, %v4208
    %4210 = vmatmul.bf16.gmra.mxu0 %v3817
    %v4211 = vpop.f32.mrf.mxu0
    %v4212 = vadd.f32 %v3855, %v4211
    %v4213 = vpop.f32.mrf.mxu0
    %v4214 = vadd.f32 %v3855, %v4213
    %4215 = vdwg.mxu0
    %v4216 = vmul.f32 %v4030, 0.5
    %v4217 = vmul.f32 %v4079, 0.5
    %v4218 = vmul.f32 %v4128, 0.5
    %v4219 = vmul.f32 %v4177, 0.5
    %v4220 = vmul.f32 %v4032, 0.5
    %v4221 = vmul.f32 %v4081, 0.5
    %v4222 = vmul.f32 %v4130, 0.5
    %v4223 = vmul.f32 %v4179, 0.5
    %v4224 = vmul.f32 %v4035, 0.5
    %v4225 = vmul.f32 %v4084, 0.5
    %v4226 = vmul.f32 %v4133, 0.5
    %v4227 = vmul.f32 %v4182, 0.5
    %v4228 = vmul.f32 %v4037, 0.5
    %v4229 = vmul.f32 %v4086, 0.5
    %v4230 = vmul.f32 %v4135, 0.5
    %v4231 = vmul.f32 %v4184, 0.5
    %v4232 = vmul.f32 %v4040, 0.5
    %v4233 = vmul.f32 %v4089, 0.5
    %v4234 = vmul.f32 %v4138, 0.5
    %v4235 = vmul.f32 %v4187, 0.5
    %v4236 = vmul.f32 %v4042, 0.5
    %v4237 = vmul.f32 %v4091, 0.5
    %v4238 = vmul.f32 %v4140, 0.5
    %v4239 = vmul.f32 %v4189, 0.5
    %v4240 = vmul.f32 %v4045, 0.5
    %v4241 = vmul.f32 %v4094, 0.5
    %v4242 = vmul.f32 %v4143, 0.5
    %v4243 = vmul.f32 %v4192, 0.5
    %v4244 = vmul.f32 %v4047, 0.5
    %v4245 = vmul.f32 %v4096, 0.5
    %v4246 = vmul.f32 %v4145, 0.5
    %v4247 = vmul.f32 %v4194, 0.5
    %v4248 = vmul.f32 %v4050, 0.5
    %v4249 = vmul.f32 %v4099, 0.5
    %v4250 = vmul.f32 %v4148, 0.5
    %v4251 = vmul.f32 %v4197, 0.5
    %v4252 = vmul.f32 %v4052, 0.5
    %v4253 = vmul.f32 %v4101, 0.5
    %v4254 = vmul.f32 %v4150, 0.5
    %v4255 = vmul.f32 %v4199, 0.5
    %v4256 = vmul.f32 %v4055, 0.5
    %v4257 = vmul.f32 %v4104, 0.5
    %v4258 = vmul.f32 %v4153, 0.5
    %v4259 = vmul.f32 %v4202, 0.5
    %v4260 = vmul.f32 %v4057, 0.5
    %v4261 = vmul.f32 %v4106, 0.5
    %v4262 = vmul.f32 %v4155, 0.5
    %v4263 = vmul.f32 %v4204, 0.5
    %v4264 = vmul.f32 %v4060, 0.5
    %v4265 = vmul.f32 %v4109, 0.5
    %v4266 = vmul.f32 %v4158, 0.5
    %v4267 = vmul.f32 %v4207, 0.5
    %v4268 = vmul.f32 %v4062, 0.5
    %v4269 = vmul.f32 %v4111, 0.5
    %v4270 = vmul.f32 %v4160, 0.5
    %v4271 = vmul.f32 %v4209, 0.5
    %v4272 = vmul.f32 %v4065, 0.5
    %v4273 = vmul.f32 %v4114, 0.5
    %v4274 = vmul.f32 %v4163, 0.5
    %v4275 = vmul.f32 %v4212, 0.5
    %v4276 = vmul.f32 %v4067, 0.5
    %v4277 = vmul.f32 %v4116, 0.5
    %v4278 = vmul.f32 %v4165, 0.5
    %v4279 = vmul.f32 %v4214, 0.5
    %v4280 = vmul.f32 %v4030, %v4030
    %v4281 = vmul.f32 %v4079, %v4079
    %v4282 = vmul.f32 %v4128, %v4128
    %v4283 = vmul.f32 %v4177, %v4177
    %v4284 = vmul.f32 %v4032, %v4032
    %v4285 = vmul.f32 %v4081, %v4081
    %v4286 = vmul.f32 %v4130, %v4130
    %v4287 = vmul.f32 %v4179, %v4179
    %v4288 = vmul.f32 %v4035, %v4035
    %v4289 = vmul.f32 %v4084, %v4084
    %v4290 = vmul.f32 %v4133, %v4133
    %v4291 = vmul.f32 %v4182, %v4182
    %v4292 = vmul.f32 %v4037, %v4037
    %v4293 = vmul.f32 %v4086, %v4086
    %v4294 = vmul.f32 %v4135, %v4135
    %v4295 = vmul.f32 %v4184, %v4184
    %v4296 = vmul.f32 %v4040, %v4040
    %v4297 = vmul.f32 %v4089, %v4089
    %v4298 = vmul.f32 %v4138, %v4138
    %v4299 = vmul.f32 %v4187, %v4187
    %v4300 = vmul.f32 %v4042, %v4042
    %v4301 = vmul.f32 %v4091, %v4091
    %v4302 = vmul.f32 %v4140, %v4140
    %v4303 = vmul.f32 %v4189, %v4189
    %v4304 = vmul.f32 %v4045, %v4045
    %v4305 = vmul.f32 %v4094, %v4094
    %v4306 = vmul.f32 %v4143, %v4143
    %v4307 = vmul.f32 %v4192, %v4192
    %v4308 = vmul.f32 %v4047, %v4047
    %v4309 = vmul.f32 %v4096, %v4096
    %v4310 = vmul.f32 %v4145, %v4145
    %v4311 = vmul.f32 %v4194, %v4194
    %v4312 = vmul.f32 %v4050, %v4050
    %v4313 = vmul.f32 %v4099, %v4099
    %v4314 = vmul.f32 %v4148, %v4148
    %v4315 = vmul.f32 %v4197, %v4197
    %v4316 = vmul.f32 %v4052, %v4052
    %v4317 = vmul.f32 %v4101, %v4101
    %v4318 = vmul.f32 %v4150, %v4150
    %v4319 = vmul.f32 %v4199, %v4199
    %v4320 = vmul.f32 %v4055, %v4055
    %v4321 = vmul.f32 %v4104, %v4104
    %v4322 = vmul.f32 %v4153, %v4153
    %v4323 = vmul.f32 %v4202, %v4202
    %v4324 = vmul.f32 %v4057, %v4057
    %v4325 = vmul.f32 %v4106, %v4106
    %v4326 = vmul.f32 %v4155, %v4155
    %v4327 = vmul.f32 %v4204, %v4204
    %v4328 = vmul.f32 %v4060, %v4060
    %v4329 = vmul.f32 %v4109, %v4109
    %v4330 = vmul.f32 %v4158, %v4158
    %v4331 = vmul.f32 %v4207, %v4207
    %v4332 = vmul.f32 %v4062, %v4062
    %v4333 = vmul.f32 %v4111, %v4111
    %v4334 = vmul.f32 %v4160, %v4160
    %v4335 = vmul.f32 %v4209, %v4209
    %v4336 = vmul.f32 %v4065, %v4065
    %v4337 = vmul.f32 %v4114, %v4114
    %v4338 = vmul.f32 %v4163, %v4163
    %v4339 = vmul.f32 %v4212, %v4212
    %v4340 = vmul.f32 %v4067, %v4067
    %v4341 = vmul.f32 %v4116, %v4116
    %v4342 = vmul.f32 %v4165, %v4165
    %v4343 = vmul.f32 %v4214, %v4214
    %v4344 = vmul.f32 %v4280, %v4030
    %v4345 = vmul.f32 %v4281, %v4079
    %v4346 = vmul.f32 %v4282, %v4128
    %v4347 = vmul.f32 %v4283, %v4177
    %v4348 = vmul.f32 %v4284, %v4032
    %v4349 = vmul.f32 %v4285, %v4081
    %v4350 = vmul.f32 %v4286, %v4130
    %v4351 = vmul.f32 %v4287, %v4179
    %v4352 = vmul.f32 %v4288, %v4035
    %v4353 = vmul.f32 %v4289, %v4084
    %v4354 = vmul.f32 %v4290, %v4133
    %v4355 = vmul.f32 %v4291, %v4182
    %v4356 = vmul.f32 %v4292, %v4037
    %v4357 = vmul.f32 %v4293, %v4086
    %v4358 = vmul.f32 %v4294, %v4135
    %v4359 = vmul.f32 %v4295, %v4184
    %v4360 = vmul.f32 %v4296, %v4040
    %v4361 = vmul.f32 %v4297, %v4089
    %v4362 = vmul.f32 %v4298, %v4138
    %v4363 = vmul.f32 %v4299, %v4187
    %v4364 = vmul.f32 %v4300, %v4042
    %v4365 = vmul.f32 %v4301, %v4091
    %v4366 = vmul.f32 %v4302, %v4140
    %v4367 = vmul.f32 %v4303, %v4189
    %v4368 = vmul.f32 %v4304, %v4045
    %v4369 = vmul.f32 %v4305, %v4094
    %v4370 = vmul.f32 %v4306, %v4143
    %v4371 = vmul.f32 %v4307, %v4192
    %v4372 = vmul.f32 %v4308, %v4047
    %v4373 = vmul.f32 %v4309, %v4096
    %v4374 = vmul.f32 %v4310, %v4145
    %v4375 = vmul.f32 %v4311, %v4194
    %v4376 = vmul.f32 %v4312, %v4050
    %v4377 = vmul.f32 %v4313, %v4099
    %v4378 = vmul.f32 %v4314, %v4148
    %v4379 = vmul.f32 %v4315, %v4197
    %v4380 = vmul.f32 %v4316, %v4052
    %v4381 = vmul.f32 %v4317, %v4101
    %v4382 = vmul.f32 %v4318, %v4150
    %v4383 = vmul.f32 %v4319, %v4199
    %v4384 = vmul.f32 %v4320, %v4055
    %v4385 = vmul.f32 %v4321, %v4104
    %v4386 = vmul.f32 %v4322, %v4153
    %v4387 = vmul.f32 %v4323, %v4202
    %v4388 = vmul.f32 %v4324, %v4057
    %v4389 = vmul.f32 %v4325, %v4106
    %v4390 = vmul.f32 %v4326, %v4155
    %v4391 = vmul.f32 %v4327, %v4204
    %v4392 = vmul.f32 %v4328, %v4060
    %v4393 = vmul.f32 %v4329, %v4109
    %v4394 = vmul.f32 %v4330, %v4158
    %v4395 = vmul.f32 %v4331, %v4207
    %v4396 = vmul.f32 %v4332, %v4062
    %v4397 = vmul.f32 %v4333, %v4111
    %v4398 = vmul.f32 %v4334, %v4160
    %v4399 = vmul.f32 %v4335, %v4209
    %v4400 = vmul.f32 %v4336, %v4065
    %v4401 = vmul.f32 %v4337, %v4114
    %v4402 = vmul.f32 %v4338, %v4163
    %v4403 = vmul.f32 %v4339, %v4212
    %v4404 = vmul.f32 %v4340, %v4067
    %v4405 = vmul.f32 %v4341, %v4116
    %v4406 = vmul.f32 %v4342, %v4165
    %v4407 = vmul.f32 %v4343, %v4214
    %v4408 = vmul.f32 %v4344, 0.044715
    %v4409 = vmul.f32 %v4345, 0.044715
    %v4410 = vmul.f32 %v4346, 0.044715
    %v4411 = vmul.f32 %v4347, 0.044715
    %v4412 = vmul.f32 %v4348, 0.044715
    %v4413 = vmul.f32 %v4349, 0.044715
    %v4414 = vmul.f32 %v4350, 0.044715
    %v4415 = vmul.f32 %v4351, 0.044715
    %v4416 = vmul.f32 %v4352, 0.044715
    %v4417 = vmul.f32 %v4353, 0.044715
    %v4418 = vmul.f32 %v4354, 0.044715
    %v4419 = vmul.f32 %v4355, 0.044715
    %v4420 = vmul.f32 %v4356, 0.044715
    %v4421 = vmul.f32 %v4357, 0.044715
    %v4422 = vmul.f32 %v4358, 0.044715
    %v4423 = vmul.f32 %v4359, 0.044715
    %v4424 = vmul.f32 %v4360, 0.044715
    %v4425 = vmul.f32 %v4361, 0.044715
    %v4426 = vmul.f32 %v4362, 0.044715
    %v4427 = vmul.f32 %v4363, 0.044715
    %v4428 = vmul.f32 %v4364, 0.044715
    %v4429 = vmul.f32 %v4365, 0.044715
    %v4430 = vmul.f32 %v4366, 0.044715
    %v4431 = vmul.f32 %v4367, 0.044715
    %v4432 = vmul.f32 %v4368, 0.044715
    %v4433 = vmul.f32 %v4369, 0.044715
    %v4434 = vmul.f32 %v4370, 0.044715
    %v4435 = vmul.f32 %v4371, 0.044715
    %v4436 = vmul.f32 %v4372, 0.044715
    %v4437 = vmul.f32 %v4373, 0.044715
    %v4438 = vmul.f32 %v4374, 0.044715
    %v4439 = vmul.f32 %v4375, 0.044715
    %v4440 = vmul.f32 %v4376, 0.044715
    %v4441 = vmul.f32 %v4377, 0.044715
    %v4442 = vmul.f32 %v4378, 0.044715
    %v4443 = vmul.f32 %v4379, 0.044715
    %v4444 = vmul.f32 %v4380, 0.044715
    %v4445 = vmul.f32 %v4381, 0.044715
    %v4446 = vmul.f32 %v4382, 0.044715
    %v4447 = vmul.f32 %v4383, 0.044715
    %v4448 = vmul.f32 %v4384, 0.044715
    %v4449 = vmul.f32 %v4385, 0.044715
    %v4450 = vmul.f32 %v4386, 0.044715
    %v4451 = vmul.f32 %v4387, 0.044715
    %v4452 = vmul.f32 %v4388, 0.044715
    %v4453 = vmul.f32 %v4389, 0.044715
    %v4454 = vmul.f32 %v4390, 0.044715
    %v4455 = vmul.f32 %v4391, 0.044715
    %v4456 = vmul.f32 %v4392, 0.044715
    %v4457 = vmul.f32 %v4393, 0.044715
    %v4458 = vmul.f32 %v4394, 0.044715
    %v4459 = vmul.f32 %v4395, 0.044715
    %v4460 = vmul.f32 %v4396, 0.044715
    %v4461 = vmul.f32 %v4397, 0.044715
    %v4462 = vmul.f32 %v4398, 0.044715
    %v4463 = vmul.f32 %v4399, 0.044715
    %v4464 = vmul.f32 %v4400, 0.044715
    %v4465 = vmul.f32 %v4401, 0.044715
    %v4466 = vmul.f32 %v4402, 0.044715
    %v4467 = vmul.f32 %v4403, 0.044715
    %v4468 = vmul.f32 %v4404, 0.044715
    %v4469 = vmul.f32 %v4405, 0.044715
    %v4470 = vmul.f32 %v4406, 0.044715
    %v4471 = vmul.f32 %v4407, 0.044715
    %v4472 = vadd.f32 %v4030, %v4408
    %v4473 = vadd.f32 %v4079, %v4409
    %v4474 = vadd.f32 %v4128, %v4410
    %v4475 = vadd.f32 %v4177, %v4411
    %v4476 = vadd.f32 %v4032, %v4412
    %v4477 = vadd.f32 %v4081, %v4413
    %v4478 = vadd.f32 %v4130, %v4414
    %v4479 = vadd.f32 %v4179, %v4415
    %v4480 = vadd.f32 %v4035, %v4416
    %v4481 = vadd.f32 %v4084, %v4417
    %v4482 = vadd.f32 %v4133, %v4418
    %v4483 = vadd.f32 %v4182, %v4419
    %v4484 = vadd.f32 %v4037, %v4420
    %v4485 = vadd.f32 %v4086, %v4421
    %v4486 = vadd.f32 %v4135, %v4422
    %v4487 = vadd.f32 %v4184, %v4423
    %v4488 = vadd.f32 %v4040, %v4424
    %v4489 = vadd.f32 %v4089, %v4425
    %v4490 = vadd.f32 %v4138, %v4426
    %v4491 = vadd.f32 %v4187, %v4427
    %v4492 = vadd.f32 %v4042, %v4428
    %v4493 = vadd.f32 %v4091, %v4429
    %v4494 = vadd.f32 %v4140, %v4430
    %v4495 = vadd.f32 %v4189, %v4431
    %v4496 = vadd.f32 %v4045, %v4432
    %v4497 = vadd.f32 %v4094, %v4433
    %v4498 = vadd.f32 %v4143, %v4434
    %v4499 = vadd.f32 %v4192, %v4435
    %v4500 = vadd.f32 %v4047, %v4436
    %v4501 = vadd.f32 %v4096, %v4437
    %v4502 = vadd.f32 %v4145, %v4438
    %v4503 = vadd.f32 %v4194, %v4439
    %v4504 = vadd.f32 %v4050, %v4440
    %v4505 = vadd.f32 %v4099, %v4441
    %v4506 = vadd.f32 %v4148, %v4442
    %v4507 = vadd.f32 %v4197, %v4443
    %v4508 = vadd.f32 %v4052, %v4444
    %v4509 = vadd.f32 %v4101, %v4445
    %v4510 = vadd.f32 %v4150, %v4446
    %v4511 = vadd.f32 %v4199, %v4447
    %v4512 = vadd.f32 %v4055, %v4448
    %v4513 = vadd.f32 %v4104, %v4449
    %v4514 = vadd.f32 %v4153, %v4450
    %v4515 = vadd.f32 %v4202, %v4451
    %v4516 = vadd.f32 %v4057, %v4452
    %v4517 = vadd.f32 %v4106, %v4453
    %v4518 = vadd.f32 %v4155, %v4454
    %v4519 = vadd.f32 %v4204, %v4455
    %v4520 = vadd.f32 %v4060, %v4456
    %v4521 = vadd.f32 %v4109, %v4457
    %v4522 = vadd.f32 %v4158, %v4458
    %v4523 = vadd.f32 %v4207, %v4459
    %v4524 = vadd.f32 %v4062, %v4460
    %v4525 = vadd.f32 %v4111, %v4461
    %v4526 = vadd.f32 %v4160, %v4462
    %v4527 = vadd.f32 %v4209, %v4463
    %v4528 = vadd.f32 %v4065, %v4464
    %v4529 = vadd.f32 %v4114, %v4465
    %v4530 = vadd.f32 %v4163, %v4466
    %v4531 = vadd.f32 %v4212, %v4467
    %v4532 = vadd.f32 %v4067, %v4468
    %v4533 = vadd.f32 %v4116, %v4469
    %v4534 = vadd.f32 %v4165, %v4470
    %v4535 = vadd.f32 %v4214, %v4471
    %v4536 = vmul.f32 %v4472, 0.7978846
    %v4537 = vmul.f32 %v4473, 0.7978846
    %v4538 = vmul.f32 %v4474, 0.7978846
    %v4539 = vmul.f32 %v4475, 0.7978846
    %v4540 = vmul.f32 %v4476, 0.7978846
    %v4541 = vmul.f32 %v4477, 0.7978846
    %v4542 = vmul.f32 %v4478, 0.7978846
    %v4543 = vmul.f32 %v4479, 0.7978846
    %v4544 = vmul.f32 %v4480, 0.7978846
    %v4545 = vmul.f32 %v4481, 0.7978846
    %v4546 = vmul.f32 %v4482, 0.7978846
    %v4547 = vmul.f32 %v4483, 0.7978846
    %v4548 = vmul.f32 %v4484, 0.7978846
    %v4549 = vmul.f32 %v4485, 0.7978846
    %v4550 = vmul.f32 %v4486, 0.7978846
    %v4551 = vmul.f32 %v4487, 0.7978846
    %v4552 = vmul.f32 %v4488, 0.7978846
    %v4553 = vmul.f32 %v4489, 0.7978846
    %v4554 = vmul.f32 %v4490, 0.7978846
    %v4555 = vmul.f32 %v4491, 0.7978846
    %v4556 = vmul.f32 %v4492, 0.7978846
    %v4557 = vmul.f32 %v4493, 0.7978846
    %v4558 = vmul.f32 %v4494, 0.7978846
    %v4559 = vmul.f32 %v4495, 0.7978846
    %v4560 = vmul.f32 %v4496, 0.7978846
    %v4561 = vmul.f32 %v4497, 0.7978846
    %v4562 = vmul.f32 %v4498, 0.7978846
    %v4563 = vmul.f32 %v4499, 0.7978846
    %v4564 = vmul.f32 %v4500, 0.7978846
    %v4565 = vmul.f32 %v4501, 0.7978846
    %v4566 = vmul.f32 %v4502, 0.7978846
    %v4567 = vmul.f32 %v4503, 0.7978846
    %v4568 = vmul.f32 %v4504, 0.7978846
    %v4569 = vmul.f32 %v4505, 0.7978846
    %v4570 = vmul.f32 %v4506, 0.7978846
    %v4571 = vmul.f32 %v4507, 0.7978846
    %v4572 = vmul.f32 %v4508, 0.7978846
    %v4573 = vmul.f32 %v4509, 0.7978846
    %v4574 = vmul.f32 %v4510, 0.7978846
    %v4575 = vmul.f32 %v4511, 0.7978846
    %v4576 = vmul.f32 %v4512, 0.7978846
    %v4577 = vmul.f32 %v4513, 0.7978846
    %v4578 = vmul.f32 %v4514, 0.7978846
    %v4579 = vmul.f32 %v4515, 0.7978846
    %v4580 = vmul.f32 %v4516, 0.7978846
    %v4581 = vmul.f32 %v4517, 0.7978846
    %v4582 = vmul.f32 %v4518, 0.7978846
    %v4583 = vmul.f32 %v4519, 0.7978846
    %v4584 = vmul.f32 %v4520, 0.7978846
    %v4585 = vmul.f32 %v4521, 0.7978846
    %v4586 = vmul.f32 %v4522, 0.7978846
    %v4587 = vmul.f32 %v4523, 0.7978846
    %v4588 = vmul.f32 %v4524, 0.7978846
    %v4589 = vmul.f32 %v4525, 0.7978846
    %v4590 = vmul.f32 %v4526, 0.7978846
    %v4591 = vmul.f32 %v4527, 0.7978846
    %v4592 = vmul.f32 %v4528, 0.7978846
    %v4593 = vmul.f32 %v4529, 0.7978846
    %v4594 = vmul.f32 %v4530, 0.7978846
    %v4595 = vmul.f32 %v4531, 0.7978846
    %v4596 = vmul.f32 %v4532, 0.7978846
    %v4597 = vmul.f32 %v4533, 0.7978846
    %v4598 = vmul.f32 %v4534, 0.7978846
    %v4599 = vmul.f32 %v4535, 0.7978846
    %v4600 = vtanh.pop %v4536
    %v4601 = vtanh.pop %v4537
    %v4602 = vtanh.pop %v4538
    %v4603 = vtanh.pop %v4539
    %v4604 = vtanh.pop %v4540
    %v4605 = vtanh.pop %v4541
    %v4606 = vtanh.pop %v4542
    %v4607 = vtanh.pop %v4543
    %v4608 = vtanh.pop %v4544
    %v4609 = vtanh.pop %v4545
    %v4610 = vtanh.pop %v4546
    %v4611 = vtanh.pop %v4547
    %v4612 = vtanh.pop %v4548
    %v4613 = vtanh.pop %v4549
    %v4614 = vtanh.pop %v4550
    %v4615 = vtanh.pop %v4551
    %v4616 = vtanh.pop %v4552
    %v4617 = vtanh.pop %v4553
    %v4618 = vtanh.pop %v4554
    %v4619 = vtanh.pop %v4555
    %v4620 = vtanh.pop %v4556
    %v4621 = vtanh.pop %v4557
    %v4622 = vtanh.pop %v4558
    %v4623 = vtanh.pop %v4559
    %v4624 = vtanh.pop %v4560
    %v4625 = vtanh.pop %v4561
    %v4626 = vtanh.pop %v4562
    %v4627 = vtanh.pop %v4563
    %v4628 = vtanh.pop %v4564
    %v4629 = vtanh.pop %v4565
    %v4630 = vtanh.pop %v4566
    %v4631 = vtanh.pop %v4567
    %v4632 = vtanh.pop %v4568
    %v4633 = vtanh.pop %v4569
    %v4634 = vtanh.pop %v4570
    %v4635 = vtanh.pop %v4571
    %v4636 = vtanh.pop %v4572
    %v4637 = vtanh.pop %v4573
    %v4638 = vtanh.pop %v4574
    %v4639 = vtanh.pop %v4575
    %v4640 = vtanh.pop %v4576
    %v4641 = vtanh.pop %v4577
    %v4642 = vtanh.pop %v4578
    %v4643 = vtanh.pop %v4579
    %v4644 = vtanh.pop %v4580
    %v4645 = vtanh.pop %v4581
    %v4646 = vtanh.pop %v4582
    %v4647 = vtanh.pop %v4583
    %v4648 = vtanh.pop %v4584
    %v4649 = vtanh.pop %v4585
    %v4650 = vtanh.pop %v4586
    %v4651 = vtanh.pop %v4587
    %v4652 = vtanh.pop %v4588
    %v4653 = vtanh.pop %v4589
    %v4654 = vtanh.pop %v4590
    %v4655 = vtanh.pop %v4591
    %v4656 = vtanh.pop %v4592
    %v4657 = vtanh.pop %v4593
    %v4658 = vtanh.pop %v4594
    %v4659 = vtanh.pop %v4595
    %v4660 = vtanh.pop %v4596
    %v4661 = vtanh.pop %v4597
    %v4662 = vtanh.pop %v4598
    %v4663 = vtanh.pop %v4599
    %v4664 = vadd.f32 %v4600, 1.0
    %v4665 = vadd.f32 %v4601, 1.0
    %v4666 = vadd.f32 %v4602, 1.0
    %v4667 = vadd.f32 %v4603, 1.0
    %v4668 = vadd.f32 %v4604, 1.0
    %v4669 = vadd.f32 %v4605, 1.0
    %v4670 = vadd.f32 %v4606, 1.0
    %v4671 = vadd.f32 %v4607, 1.0
    %v4672 = vadd.f32 %v4608, 1.0
    %v4673 = vadd.f32 %v4609, 1.0
    %v4674 = vadd.f32 %v4610, 1.0
    %v4675 = vadd.f32 %v4611, 1.0
    %v4676 = vadd.f32 %v4612, 1.0
    %v4677 = vadd.f32 %v4613, 1.0
    %v4678 = vadd.f32 %v4614, 1.0
    %v4679 = vadd.f32 %v4615, 1.0
    %v4680 = vadd.f32 %v4616, 1.0
    %v4681 = vadd.f32 %v4617, 1.0
    %v4682 = vadd.f32 %v4618, 1.0
    %v4683 = vadd.f32 %v4619, 1.0
    %v4684 = vadd.f32 %v4620, 1.0
    %v4685 = vadd.f32 %v4621, 1.0
    %v4686 = vadd.f32 %v4622, 1.0
    %v4687 = vadd.f32 %v4623, 1.0
    %v4688 = vadd.f32 %v4624, 1.0
    %v4689 = vadd.f32 %v4625, 1.0
    %v4690 = vadd.f32 %v4626, 1.0
    %v4691 = vadd.f32 %v4627, 1.0
    %v4692 = vadd.f32 %v4628, 1.0
    %v4693 = vadd.f32 %v4629, 1.0
    %v4694 = vadd.f32 %v4630, 1.0
    %v4695 = vadd.f32 %v4631, 1.0
    %v4696 = vadd.f32 %v4632, 1.0
    %v4697 = vadd.f32 %v4633, 1.0
    %v4698 = vadd.f32 %v4634, 1.0
    %v4699 = vadd.f32 %v4635, 1.0
    %v4700 = vadd.f32 %v4636, 1.0
    %v4701 = vadd.f32 %v4637, 1.0
    %v4702 = vadd.f32 %v4638, 1.0
    %v4703 = vadd.f32 %v4639, 1.0
    %v4704 = vadd.f32 %v4640, 1.0
    %v4705 = vadd.f32 %v4641, 1.0
    %v4706 = vadd.f32 %v4642, 1.0
    %v4707 = vadd.f32 %v4643, 1.0
    %v4708 = vadd.f32 %v4644, 1.0
    %v4709 = vadd.f32 %v4645, 1.0
    %v4710 = vadd.f32 %v4646, 1.0
    %v4711 = vadd.f32 %v4647, 1.0
    %v4712 = vadd.f32 %v4648, 1.0
    %v4713 = vadd.f32 %v4649, 1.0
    %v4714 = vadd.f32 %v4650, 1.0
    %v4715 = vadd.f32 %v4651, 1.0
    %v4716 = vadd.f32 %v4652, 1.0
    %v4717 = vadd.f32 %v4653, 1.0
    %v4718 = vadd.f32 %v4654, 1.0
    %v4719 = vadd.f32 %v4655, 1.0
    %v4720 = vadd.f32 %v4656, 1.0
    %v4721 = vadd.f32 %v4657, 1.0
    %v4722 = vadd.f32 %v4658, 1.0
    %v4723 = vadd.f32 %v4659, 1.0
    %v4724 = vadd.f32 %v4660, 1.0
    %v4725 = vadd.f32 %v4661, 1.0
    %v4726 = vadd.f32 %v4662, 1.0
    %v4727 = vadd.f32 %v4663, 1.0
    %v4728 = vmul.f32 %v4216, %v4664
    %v4729 = vmul.f32 %v4217, %v4665
    %v4730 = vmul.f32 %v4218, %v4666
    %v4731 = vmul.f32 %v4219, %v4667
    %v4732 = vmul.f32 %v4220, %v4668
    %v4733 = vmul.f32 %v4221, %v4669
    %v4734 = vmul.f32 %v4222, %v4670
    %v4735 = vmul.f32 %v4223, %v4671
    %v4736 = vmul.f32 %v4224, %v4672
    %v4737 = vmul.f32 %v4225, %v4673
    %v4738 = vmul.f32 %v4226, %v4674
    %v4739 = vmul.f32 %v4227, %v4675
    %v4740 = vmul.f32 %v4228, %v4676
    %v4741 = vmul.f32 %v4229, %v4677
    %v4742 = vmul.f32 %v4230, %v4678
    %v4743 = vmul.f32 %v4231, %v4679
    %v4744 = vmul.f32 %v4232, %v4680
    %v4745 = vmul.f32 %v4233, %v4681
    %v4746 = vmul.f32 %v4234, %v4682
    %v4747 = vmul.f32 %v4235, %v4683
    %v4748 = vmul.f32 %v4236, %v4684
    %v4749 = vmul.f32 %v4237, %v4685
    %v4750 = vmul.f32 %v4238, %v4686
    %v4751 = vmul.f32 %v4239, %v4687
    %v4752 = vmul.f32 %v4240, %v4688
    %v4753 = vmul.f32 %v4241, %v4689
    %v4754 = vmul.f32 %v4242, %v4690
    %v4755 = vmul.f32 %v4243, %v4691
    %v4756 = vmul.f32 %v4244, %v4692
    %v4757 = vmul.f32 %v4245, %v4693
    %v4758 = vmul.f32 %v4246, %v4694
    %v4759 = vmul.f32 %v4247, %v4695
    %v4760 = vmul.f32 %v4248, %v4696
    %v4761 = vmul.f32 %v4249, %v4697
    %v4762 = vmul.f32 %v4250, %v4698
    %v4763 = vmul.f32 %v4251, %v4699
    %v4764 = vmul.f32 %v4252, %v4700
    %v4765 = vmul.f32 %v4253, %v4701
    %v4766 = vmul.f32 %v4254, %v4702
    %v4767 = vmul.f32 %v4255, %v4703
    %v4768 = vmul.f32 %v4256, %v4704
    %v4769 = vmul.f32 %v4257, %v4705
    %v4770 = vmul.f32 %v4258, %v4706
    %v4771 = vmul.f32 %v4259, %v4707
    %v4772 = vmul.f32 %v4260, %v4708
    %v4773 = vmul.f32 %v4261, %v4709
    %v4774 = vmul.f32 %v4262, %v4710
    %v4775 = vmul.f32 %v4263, %v4711
    %v4776 = vmul.f32 %v4264, %v4712
    %v4777 = vmul.f32 %v4265, %v4713
    %v4778 = vmul.f32 %v4266, %v4714
    %v4779 = vmul.f32 %v4267, %v4715
    %v4780 = vmul.f32 %v4268, %v4716
    %v4781 = vmul.f32 %v4269, %v4717
    %v4782 = vmul.f32 %v4270, %v4718
    %v4783 = vmul.f32 %v4271, %v4719
    %v4784 = vmul.f32 %v4272, %v4720
    %v4785 = vmul.f32 %v4273, %v4721
    %v4786 = vmul.f32 %v4274, %v4722
    %v4787 = vmul.f32 %v4275, %v4723
    %v4788 = vmul.f32 %v4276, %v4724
    %v4789 = vmul.f32 %v4277, %v4725
    %v4790 = vmul.f32 %v4278, %v4726
    %v4791 = vmul.f32 %v4279, %v4727
    %v4792 = vpack.c.bf16 %v4732, %v4728
    %v4793 = vpack.c.bf16 %v4733, %v4729
    %v4794 = vpack.c.bf16 %v4734, %v4730
    %v4795 = vpack.c.bf16 %v4735, %v4731
    %v4796 = vpack.c.bf16 %v4740, %v4736
    %v4797 = vpack.c.bf16 %v4741, %v4737
    %v4798 = vpack.c.bf16 %v4742, %v4738
    %v4799 = vpack.c.bf16 %v4743, %v4739
    %v4800 = vpack.c.bf16 %v4748, %v4744
    %v4801 = vpack.c.bf16 %v4749, %v4745
    %v4802 = vpack.c.bf16 %v4750, %v4746
    %v4803 = vpack.c.bf16 %v4751, %v4747
    %v4804 = vpack.c.bf16 %v4756, %v4752
    %v4805 = vpack.c.bf16 %v4757, %v4753
    %v4806 = vpack.c.bf16 %v4758, %v4754
    %v4807 = vpack.c.bf16 %v4759, %v4755
    %v4808 = vpack.c.bf16 %v4764, %v4760
    %v4809 = vpack.c.bf16 %v4765, %v4761
    %v4810 = vpack.c.bf16 %v4766, %v4762
    %v4811 = vpack.c.bf16 %v4767, %v4763
    %v4812 = vpack.c.bf16 %v4772, %v4768
    %v4813 = vpack.c.bf16 %v4773, %v4769
    %v4814 = vpack.c.bf16 %v4774, %v4770
    %v4815 = vpack.c.bf16 %v4775, %v4771
    %v4816 = vpack.c.bf16 %v4780, %v4776
    %v4817 = vpack.c.bf16 %v4781, %v4777
    %v4818 = vpack.c.bf16 %v4782, %v4778
    %v4819 = vpack.c.bf16 %v4783, %v4779
    %v4820 = vpack.c.bf16 %v4788, %v4784
    %v4821 = vpack.c.bf16 %v4789, %v4785
    %v4822 = vpack.c.bf16 %v4790, %v4786
    %v4823 = vpack.c.bf16 %v4791, %v4787
    %v4824 = vld [vmem:[#allocation11] sm:$0xf]
    %v4825 = vld [vmem:[#allocation11 + $0x4] sm:$0xf]
    %v4826 = vld [vmem:[#allocation11 + $0x8] sm:$0xf]
    %v4827 = vld [vmem:[#allocation11 + $0xc] sm:$0xf]
    %v4828 = vld [vmem:[#allocation11 + $0x10] sm:$0xf]
    %v4829 = vld [vmem:[#allocation11 + $0x14] sm:$0xf]
    %v4830 = vld [vmem:[#allocation11 + $0x18] sm:$0xf]
    %v4831 = vld [vmem:[#allocation11 + $0x1c] sm:$0xf]
    %v4832 = vld [vmem:[#allocation11 + $0x20] sm:$0xf]
    %v4833 = vld [vmem:[#allocation11 + $0x24] sm:$0xf]
    %v4834 = vld [vmem:[#allocation11 + $0x28] sm:$0xf]
    %v4835 = vld [vmem:[#allocation11 + $0x2c] sm:$0xf]
    %v4836 = vld [vmem:[#allocation11 + $0x30] sm:$0xf]
    %v4837 = vld [vmem:[#allocation11 + $0x34] sm:$0xf]
    %v4838 = vld [vmem:[#allocation11 + $0x38] sm:$0xf]
    %v4839 = vld [vmem:[#allocation11 + $0x3c] sm:$0xf]
    %v4840 = vld [vmem:[#allocation11 + $0x40] sm:$0xf]
    %v4841 = vld [vmem:[#allocation11 + $0x44] sm:$0xf]
    %v4842 = vld [vmem:[#allocation11 + $0x48] sm:$0xf]
    %v4843 = vld [vmem:[#allocation11 + $0x4c] sm:$0xf]
    %v4844 = vld [vmem:[#allocation11 + $0x50] sm:$0xf]
    %v4845 = vld [vmem:[#allocation11 + $0x54] sm:$0xf]
    %v4846 = vld [vmem:[#allocation11 + $0x58] sm:$0xf]
    %v4847 = vld [vmem:[#allocation11 + $0x5c] sm:$0xf]
    %v4848 = vld [vmem:[#allocation11 + $0x60] sm:$0xf]
    %v4849 = vld [vmem:[#allocation11 + $0x64] sm:$0xf]
    %v4850 = vld [vmem:[#allocation11 + $0x68] sm:$0xf]
    %v4851 = vld [vmem:[#allocation11 + $0x6c] sm:$0xf]
    %v4852 = vld [vmem:[#allocation11 + $0x70] sm:$0xf]
    %v4853 = vld [vmem:[#allocation11 + $0x74] sm:$0xf]
    %v4854 = vld [vmem:[#allocation11 + $0x78] sm:$0xf]
    %v4855 = vld [vmem:[#allocation11 + $0x7c] sm:$0xf]
    %v4856 = vld [vmem:[#allocation11 + $0x80] sm:$0xf]
    %v4857 = vld [vmem:[#allocation11 + $0x84] sm:$0xf]
    %v4858 = vld [vmem:[#allocation11 + $0x88] sm:$0xf]
    %v4859 = vld [vmem:[#allocation11 + $0x8c] sm:$0xf]
    %v4860 = vld [vmem:[#allocation11 + $0x90] sm:$0xf]
    %v4861 = vld [vmem:[#allocation11 + $0x94] sm:$0xf]
    %v4862 = vld [vmem:[#allocation11 + $0x98] sm:$0xf]
    %v4863 = vld [vmem:[#allocation11 + $0x9c] sm:$0xf]
    %v4864 = vld [vmem:[#allocation11 + $0xa0] sm:$0xf]
    %v4865 = vld [vmem:[#allocation11 + $0xa4] sm:$0xf]
    %v4866 = vld [vmem:[#allocation11 + $0xa8] sm:$0xf]
    %v4867 = vld [vmem:[#allocation11 + $0xac] sm:$0xf]
    %v4868 = vld [vmem:[#allocation11 + $0xb0] sm:$0xf]
    %v4869 = vld [vmem:[#allocation11 + $0xb4] sm:$0xf]
    %v4870 = vld [vmem:[#allocation11 + $0xb8] sm:$0xf]
    %v4871 = vld [vmem:[#allocation11 + $0xbc] sm:$0xf]
    %v4872 = vld [vmem:[#allocation11 + $0xc0] sm:$0xf]
    %v4873 = vld [vmem:[#allocation11 + $0xc4] sm:$0xf]
    %v4874 = vld [vmem:[#allocation11 + $0xc8] sm:$0xf]
    %v4875 = vld [vmem:[#allocation11 + $0xcc] sm:$0xf]
    %v4876 = vld [vmem:[#allocation11 + $0xd0] sm:$0xf]
    %v4877 = vld [vmem:[#allocation11 + $0xd4] sm:$0xf]
    %v4878 = vld [vmem:[#allocation11 + $0xd8] sm:$0xf]
    %v4879 = vld [vmem:[#allocation11 + $0xdc] sm:$0xf]
    %v4880 = vld [vmem:[#allocation11 + $0xe0] sm:$0xf]
    %v4881 = vld [vmem:[#allocation11 + $0xe4] sm:$0xf]
    %v4882 = vld [vmem:[#allocation11 + $0xe8] sm:$0xf]
    %v4883 = vld [vmem:[#allocation11 + $0xec] sm:$0xf]
    %v4884 = vld [vmem:[#allocation11 + $0xf0] sm:$0xf]
    %v4885 = vld [vmem:[#allocation11 + $0xf4] sm:$0xf]
    %v4886 = vld [vmem:[#allocation11 + $0xf8] sm:$0xf]
    %v4887 = vld [vmem:[#allocation11 + $0xfc] sm:$0xf]
    %v4888 = vld [vmem:[%s8] sm:$0x1]
    %v4890 = vperm.slane %v4888, 0
    %v4956 = vunpack.c.l.b16 %v4824
    %v4957 = vunpack.c.l.b16 %v4825
    %v4958 = vunpack.c.l.b16 %v4826
    %v4959 = vunpack.c.l.b16 %v4827
    %v4960 = vunpack.c.l.b16 %v4828
    %v4961 = vunpack.c.l.b16 %v4829
    %v4962 = vunpack.c.l.b16 %v4830
    %v4963 = vunpack.c.l.b16 %v4831
    %v4964 = vunpack.c.l.b16 %v4832
    %v4965 = vunpack.c.l.b16 %v4833
    %v4966 = vunpack.c.l.b16 %v4834
    %v4967 = vunpack.c.l.b16 %v4835
    %v4968 = vunpack.c.l.b16 %v4836
    %v4969 = vunpack.c.l.b16 %v4837
    %v4970 = vunpack.c.l.b16 %v4838
    %v4971 = vunpack.c.l.b16 %v4839
    %v4972 = vunpack.c.l.b16 %v4840
    %v4973 = vunpack.c.l.b16 %v4841
    %v4974 = vunpack.c.l.b16 %v4842
    %v4975 = vunpack.c.l.b16 %v4843
    %v4976 = vunpack.c.l.b16 %v4844
    %v4977 = vunpack.c.l.b16 %v4845
    %v4978 = vunpack.c.l.b16 %v4846
    %v4979 = vunpack.c.l.b16 %v4847
    %v4980 = vunpack.c.l.b16 %v4848
    %v4981 = vunpack.c.l.b16 %v4849
    %v4982 = vunpack.c.l.b16 %v4850
    %v4983 = vunpack.c.l.b16 %v4851
    %v4984 = vunpack.c.l.b16 %v4852
    %v4985 = vunpack.c.l.b16 %v4853
    %v4986 = vunpack.c.l.b16 %v4854
    %v4987 = vunpack.c.l.b16 %v4855
    %v4988 = vunpack.c.l.b16 %v4856
    %v4989 = vunpack.c.l.b16 %v4857
    %v4990 = vunpack.c.l.b16 %v4858
    %v4991 = vunpack.c.l.b16 %v4859
    %v4992 = vunpack.c.l.b16 %v4860
    %v4993 = vunpack.c.l.b16 %v4861
    %v4994 = vunpack.c.l.b16 %v4862
    %v4995 = vunpack.c.l.b16 %v4863
    %v4996 = vunpack.c.l.b16 %v4864
    %v4997 = vunpack.c.l.b16 %v4865
    %v4998 = vunpack.c.l.b16 %v4866
    %v4999 = vunpack.c.l.b16 %v4867
    %v5000 = vunpack.c.l.b16 %v4868
    %v5001 = vunpack.c.l.b16 %v4869
    %v5002 = vunpack.c.l.b16 %v4870
    %v5003 = vunpack.c.l.b16 %v4871
    %v5004 = vunpack.c.l.b16 %v4872
    %v5005 = vunpack.c.l.b16 %v4873
    %v5006 = vunpack.c.l.b16 %v4874
    %v5007 = vunpack.c.l.b16 %v4875
    %v5008 = vunpack.c.l.b16 %v4876
    %v5009 = vunpack.c.l.b16 %v4877
    %v5010 = vunpack.c.l.b16 %v4878
    %v5011 = vunpack.c.l.b16 %v4879
    %v5012 = vunpack.c.l.b16 %v4880
    %v5013 = vunpack.c.l.b16 %v4881
    %v5014 = vunpack.c.l.b16 %v4882
    %v5015 = vunpack.c.l.b16 %v4883
    %v5016 = vunpack.c.l.b16 %v4884
    %v5017 = vunpack.c.l.b16 %v4885
    %v5018 = vunpack.c.l.b16 %v4886
    %v5019 = vunpack.c.l.b16 %v4887
    %v5020 = vpack.c.b16 %v4957, %v4956
    %v5021 = vpack.c.b16 %v4959, %v4958
    %v5022 = vpack.c.b16 %v4961, %v4960
    %v5023 = vpack.c.b16 %v4963, %v4962
    %v5024 = vpack.c.b16 %v4965, %v4964
    %v5025 = vpack.c.b16 %v4967, %v4966
    %v5026 = vpack.c.b16 %v4969, %v4968
    %v5027 = vpack.c.b16 %v4971, %v4970
    %v5028 = vpack.c.b16 %v4973, %v4972
    %v5029 = vpack.c.b16 %v4975, %v4974
    %v5030 = vpack.c.b16 %v4977, %v4976
    %v5031 = vpack.c.b16 %v4979, %v4978
    %v5032 = vpack.c.b16 %v4981, %v4980
    %v5033 = vpack.c.b16 %v4983, %v4982
    %v5034 = vpack.c.b16 %v4985, %v4984
    %v5035 = vpack.c.b16 %v4987, %v4986
    %v5036 = vpack.c.b16 %v4989, %v4988
    %v5037 = vpack.c.b16 %v4991, %v4990
    %v5038 = vpack.c.b16 %v4993, %v4992
    %v5039 = vpack.c.b16 %v4995, %v4994
    %v5040 = vpack.c.b16 %v4997, %v4996
    %v5041 = vpack.c.b16 %v4999, %v4998
    %v5042 = vpack.c.b16 %v5001, %v5000
    %v5043 = vpack.c.b16 %v5003, %v5002
    %v5044 = vpack.c.b16 %v5005, %v5004
    %v5045 = vpack.c.b16 %v5007, %v5006
    %v5046 = vpack.c.b16 %v5009, %v5008
    %v5047 = vpack.c.b16 %v5011, %v5010
    %v5048 = vpack.c.b16 %v5013, %v5012
    %v5049 = vpack.c.b16 %v5015, %v5014
    %v5050 = vpack.c.b16 %v5017, %v5016
    %v5051 = vpack.c.b16 %v5019, %v5018
    %5084 = vmatpush.bf16.msra.mxu0 %v5027
    %5085 = vmatpush.bf16.msra.mxu0 %v5026
    %5086 = vmatpush.bf16.msra.mxu0 %v5025
    %5087 = vmatpush.bf16.msra.mxu0 %v5024
    %5088 = vmatpush.bf16.msra.mxu0 %v5023
    %5089 = vmatpush.bf16.msra.mxu0 %v5022
    %5090 = vmatpush.bf16.msra.mxu0 %v5021
    %5091 = vmatpush.bf16.msra.mxu0 %v5020
    %5092 = vmatmul.bf16.gmra.mxu0 %v4792
    %v5093 = vpop.f32.mrf.mxu0
    %v5094 = vadd.f32 %v4890, %v5093
    %v5095 = vpop.f32.mrf.mxu0
    %v5096 = vadd.f32 %v4890, %v5095
    %5097 = vmatmul.bf16.gmra.mxu0 %v4796
    %v5098 = vpop.f32.mrf.mxu0
    %v5099 = vadd.f32 %v4890, %v5098
    %v5100 = vpop.f32.mrf.mxu0
    %v5101 = vadd.f32 %v4890, %v5100
    %5102 = vmatmul.bf16.gmra.mxu0 %v4800
    %v5103 = vpop.f32.mrf.mxu0
    %v5104 = vadd.f32 %v4890, %v5103
    %v5105 = vpop.f32.mrf.mxu0
    %v5106 = vadd.f32 %v4890, %v5105
    %5107 = vmatmul.bf16.gmra.mxu0 %v4804
    %v5108 = vpop.f32.mrf.mxu0
    %v5109 = vadd.f32 %v4890, %v5108
    %v5110 = vpop.f32.mrf.mxu0
    %v5111 = vadd.f32 %v4890, %v5110
    %5112 = vmatmul.bf16.gmra.mxu0 %v4808
    %v5113 = vpop.f32.mrf.mxu0
    %v5114 = vadd.f32 %v4890, %v5113
    %v5115 = vpop.f32.mrf.mxu0
    %v5116 = vadd.f32 %v4890, %v5115
    %5117 = vmatmul.bf16.gmra.mxu0 %v4812
    %v5118 = vpop.f32.mrf.mxu0
    %v5119 = vadd.f32 %v4890, %v5118
    %v5120 = vpop.f32.mrf.mxu0
    %v5121 = vadd.f32 %v4890, %v5120
    %5122 = vmatmul.bf16.gmra.mxu0 %v4816
    %v5123 = vpop.f32.mrf.mxu0
    %v5124 = vadd.f32 %v4890, %v5123
    %v5125 = vpop.f32.mrf.mxu0
    %v5126 = vadd.f32 %v4890, %v5125
    %5127 = vmatmul.bf16.gmra.mxu0 %v4820
    %v5128 = vpop.f32.mrf.mxu0
    %v5129 = vadd.f32 %v4890, %v5128
    %v5130 = vpop.f32.mrf.mxu0
    %v5131 = vadd.f32 %v4890, %v5130
    %5132 = vdwg.mxu0
    %5133 = vmatpush.bf16.msra.mxu0 %v5035
    %5134 = vmatpush.bf16.msra.mxu0 %v5034
    %5135 = vmatpush.bf16.msra.mxu0 %v5033
    %5136 = vmatpush.bf16.msra.mxu0 %v5032
    %5137 = vmatpush.bf16.msra.mxu0 %v5031
    %5138 = vmatpush.bf16.msra.mxu0 %v5030
    %5139 = vmatpush.bf16.msra.mxu0 %v5029
    %5140 = vmatpush.bf16.msra.mxu0 %v5028
    %5141 = vmatmul.bf16.gmra.mxu0 %v4793
    %v5142 = vpop.f32.mrf.mxu0
    %v5143 = vadd.f32 %v5094, %v5142
    %v5144 = vpop.f32.mrf.mxu0
    %v5145 = vadd.f32 %v5096, %v5144
    %5146 = vmatmul.bf16.gmra.mxu0 %v4797
    %v5147 = vpop.f32.mrf.mxu0
    %v5148 = vadd.f32 %v5099, %v5147
    %v5149 = vpop.f32.mrf.mxu0
    %v5150 = vadd.f32 %v5101, %v5149
    %5151 = vmatmul.bf16.gmra.mxu0 %v4801
    %v5152 = vpop.f32.mrf.mxu0
    %v5153 = vadd.f32 %v5104, %v5152
    %v5154 = vpop.f32.mrf.mxu0
    %v5155 = vadd.f32 %v5106, %v5154
    %5156 = vmatmul.bf16.gmra.mxu0 %v4805
    %v5157 = vpop.f32.mrf.mxu0
    %v5158 = vadd.f32 %v5109, %v5157
    %v5159 = vpop.f32.mrf.mxu0
    %v5160 = vadd.f32 %v5111, %v5159
    %5161 = vmatmul.bf16.gmra.mxu0 %v4809
    %v5162 = vpop.f32.mrf.mxu0
    %v5163 = vadd.f32 %v5114, %v5162
    %v5164 = vpop.f32.mrf.mxu0
    %v5165 = vadd.f32 %v5116, %v5164
    %5166 = vmatmul.bf16.gmra.mxu0 %v4813
    %v5167 = vpop.f32.mrf.mxu0
    %v5168 = vadd.f32 %v5119, %v5167
    %v5169 = vpop.f32.mrf.mxu0
    %v5170 = vadd.f32 %v5121, %v5169
    %5171 = vmatmul.bf16.gmra.mxu0 %v4817
    %v5172 = vpop.f32.mrf.mxu0
    %v5173 = vadd.f32 %v5124, %v5172
    %v5174 = vpop.f32.mrf.mxu0
    %v5175 = vadd.f32 %v5126, %v5174
    %5176 = vmatmul.bf16.gmra.mxu0 %v4821
    %v5177 = vpop.f32.mrf.mxu0
    %v5178 = vadd.f32 %v5129, %v5177
    %v5179 = vpop.f32.mrf.mxu0
    %v5180 = vadd.f32 %v5131, %v5179
    %5181 = vdwg.mxu0
    %5182 = vmatpush.bf16.msra.mxu0 %v5043
    %5183 = vmatpush.bf16.msra.mxu0 %v5042
    %5184 = vmatpush.bf16.msra.mxu0 %v5041
    %5185 = vmatpush.bf16.msra.mxu0 %v5040
    %5186 = vmatpush.bf16.msra.mxu0 %v5039
    %5187 = vmatpush.bf16.msra.mxu0 %v5038
    %5188 = vmatpush.bf16.msra.mxu0 %v5037
    %5189 = vmatpush.bf16.msra.mxu0 %v5036
    %5190 = vmatmul.bf16.gmra.mxu0 %v4794
    %v5191 = vpop.f32.mrf.mxu0
    %v5192 = vadd.f32 %v5143, %v5191
    %v5193 = vpop.f32.mrf.mxu0
    %v5194 = vadd.f32 %v5145, %v5193
    %5195 = vmatmul.bf16.gmra.mxu0 %v4798
    %v5196 = vpop.f32.mrf.mxu0
    %v5197 = vadd.f32 %v5148, %v5196
    %v5198 = vpop.f32.mrf.mxu0
    %v5199 = vadd.f32 %v5150, %v5198
    %5200 = vmatmul.bf16.gmra.mxu0 %v4802
    %v5201 = vpop.f32.mrf.mxu0
    %v5202 = vadd.f32 %v5153, %v5201
    %v5203 = vpop.f32.mrf.mxu0
    %v5204 = vadd.f32 %v5155, %v5203
    %5205 = vmatmul.bf16.gmra.mxu0 %v4806
    %v5206 = vpop.f32.mrf.mxu0
    %v5207 = vadd.f32 %v5158, %v5206
    %v5208 = vpop.f32.mrf.mxu0
    %v5209 = vadd.f32 %v5160, %v5208
    %5210 = vmatmul.bf16.gmra.mxu0 %v4810
    %v5211 = vpop.f32.mrf.mxu0
    %v5212 = vadd.f32 %v5163, %v5211
    %v5213 = vpop.f32.mrf.mxu0
    %v5214 = vadd.f32 %v5165, %v5213
    %5215 = vmatmul.bf16.gmra.mxu0 %v4814
    %v5216 = vpop.f32.mrf.mxu0
    %v5217 = vadd.f32 %v5168, %v5216
    %v5218 = vpop.f32.mrf.mxu0
    %v5219 = vadd.f32 %v5170, %v5218
    %5220 = vmatmul.bf16.gmra.mxu0 %v4818
    %v5221 = vpop.f32.mrf.mxu0
    %v5222 = vadd.f32 %v5173, %v5221
    %v5223 = vpop.f32.mrf.mxu0
    %v5224 = vadd.f32 %v5175, %v5223
    %5225 = vmatmul.bf16.gmra.mxu0 %v4822
    %v5226 = vpop.f32.mrf.mxu0
    %v5227 = vadd.f32 %v5178, %v5226
    %v5228 = vpop.f32.mrf.mxu0
    %v5229 = vadd.f32 %v5180, %v5228
    %5230 = vdwg.mxu0
    %5231 = vmatpush.bf16.msra.mxu0 %v5051
    %5232 = vmatpush.bf16.msra.mxu0 %v5050
    %5233 = vmatpush.bf16.msra.mxu0 %v5049
    %5234 = vmatpush.bf16.msra.mxu0 %v5048
    %5235 = vmatpush.bf16.msra.mxu0 %v5047
    %5236 = vmatpush.bf16.msra.mxu0 %v5046
    %5237 = vmatpush.bf16.msra.mxu0 %v5045
    %5238 = vmatpush.bf16.msra.mxu0 %v5044
    %5239 = vmatmul.bf16.gmra.mxu0 %v4795
    %v5240 = vpop.f32.mrf.mxu0
    %v5241 = vadd.f32 %v5192, %v5240
    %v5242 = vpop.f32.mrf.mxu0
    %v5243 = vadd.f32 %v5194, %v5242
    %5244 = vmatmul.bf16.gmra.mxu0 %v4799
    %v5245 = vpop.f32.mrf.mxu0
    %v5246 = vadd.f32 %v5197, %v5245
    %v5247 = vpop.f32.mrf.mxu0
    %v5248 = vadd.f32 %v5199, %v5247
    %5249 = vmatmul.bf16.gmra.mxu0 %v4803
    %v5250 = vpop.f32.mrf.mxu0
    %v5251 = vadd.f32 %v5202, %v5250
    %v5252 = vpop.f32.mrf.mxu0
    %v5253 = vadd.f32 %v5204, %v5252
    %5254 = vmatmul.bf16.gmra.mxu0 %v4807
    %v5255 = vpop.f32.mrf.mxu0
    %v5256 = vadd.f32 %v5207, %v5255
    %v5257 = vpop.f32.mrf.mxu0
    %v5258 = vadd.f32 %v5209, %v5257
    %5259 = vmatmul.bf16.gmra.mxu0 %v4811
    %v5260 = vpop.f32.mrf.mxu0
    %v5261 = vadd.f32 %v5212, %v5260
    %v5262 = vpop.f32.mrf.mxu0
    %v5263 = vadd.f32 %v5214, %v5262
    %5264 = vmatmul.bf16.gmra.mxu0 %v4815
    %v5265 = vpop.f32.mrf.mxu0
    %v5266 = vadd.f32 %v5217, %v5265
    %v5267 = vpop.f32.mrf.mxu0
    %v5268 = vadd.f32 %v5219, %v5267
    %5269 = vmatmul.bf16.gmra.mxu0 %v4819
    %v5270 = vpop.f32.mrf.mxu0
    %v5271 = vadd.f32 %v5222, %v5270
    %v5272 = vpop.f32.mrf.mxu0
    %v5273 = vadd.f32 %v5224, %v5272
    %5274 = vmatmul.bf16.gmra.mxu0 %v4823
    %v5275 = vpop.f32.mrf.mxu0
    %v5276 = vadd.f32 %v5227, %v5275
    %v5277 = vpop.f32.mrf.mxu0
    %v5278 = vadd.f32 %v5229, %v5277
    %5279 = vdwg.mxu0
    %v5280 = vadd.f32 %v3442, %v5241
    %v5281 = vadd.f32 %v3443, %v5243
    %v5282 = vadd.f32 %v3444, %v5246
    %v5283 = vadd.f32 %v3445, %v5248
    %v5284 = vadd.f32 %v3446, %v5251
    %v5285 = vadd.f32 %v3447, %v5253
    %v5286 = vadd.f32 %v3448, %v5256
    %v5287 = vadd.f32 %v3449, %v5258
    %v5288 = vadd.f32 %v3450, %v5261
    %v5289 = vadd.f32 %v3451, %v5263
    %v5290 = vadd.f32 %v3452, %v5266
    %v5291 = vadd.f32 %v3453, %v5268
    %v5292 = vadd.f32 %v3454, %v5271
    %v5293 = vadd.f32 %v3455, %v5273
    %v5294 = vadd.f32 %v3456, %v5276
    %v5295 = vadd.f32 %v3457, %v5278
    %5296 = vst [vmem:[#allocation13] sm:$0xff] %v5280
    %5297 = vst [vmem:[#allocation13 + $0x8] sm:$0xff] %v5281
    %5298 = vst [vmem:[#allocation13 + $0x10] sm:$0xff] %v5282
    %5299 = vst [vmem:[#allocation13 + $0x18] sm:$0xff] %v5283
    %5300 = vst [vmem:[#allocation13 + $0x20] sm:$0xff] %v5284
    %5301 = vst [vmem:[#allocation13 + $0x28] sm:$0xff] %v5285
    %5302 = vst [vmem:[#allocation13 + $0x30] sm:$0xff] %v5286
    %5303 = vst [vmem:[#allocation13 + $0x38] sm:$0xff] %v5287
    %5304 = vst [vmem:[#allocation13 + $0x40] sm:$0xff] %v5288
    %5305 = vst [vmem:[#allocation13 + $0x48] sm:$0xff] %v5289
    %5306 = vst [vmem:[#allocation13 + $0x50] sm:$0xff] %v5290
    %5307 = vst [vmem:[#allocation13 + $0x58] sm:$0xff] %v5291
    %5308 = vst [vmem:[#allocation13 + $0x60] sm:$0xff] %v5292
    %5309 = vst [vmem:[#allocation13 + $0x68] sm:$0xff] %v5293
    %5310 = vst [vmem:[#allocation13 + $0x70] sm:$0xff] %v5294
    %5311 = vst [vmem:[#allocation13 + $0x78] sm:$0xff] %v5295
    // Predicated region
    $region62: #{tpu_custom_call.1} parent=1 // pred_check
      _
    $region63: #{tpu_custom_call.1} parent=1 // pred_check_branch
      %5313 = sbr.rel (0) target = $region65
    $region64: #{tpu_custom_call.1} parent=1 // pred_region
      %5315 = vsyncadd [#allocation4], 0
      %s5316 = sshll.u32 [#allocation13], 4
      %s5317 = int_to_ptr.vmem [resolvable:$true] %s5316
      %s5318 = sshll.u32 %s9, 4
      %s5319 = int_to_ptr.hbm [resolvable:$true] %s5318
      %5324 = dma.vmem_to_hbm [thread:$0]  %s5317, 2048, %s5319, [#allocation4], 128, 128, 8
    $region65: #{tpu_custom_call.1} parent=1 // pred_fallthru
      _
    // Predicated region
    $region66: #{tpu_custom_call.1} parent=1 // pred_check
      _
    $region67: #{tpu_custom_call.1} parent=1 // pred_check_branch
      %5326 = sbr.rel (0) target = $region69
    $region68: #{tpu_custom_call.1} parent=1 // pred_region
      %5328 = dma.done [#allocation4], 2048
    $region69: #{tpu_custom_call.1} parent=1 // pred_fallthru
      _
    %5329 = vsyncpa [#allocation3], 1
    %5330 = vsyncpa [#allocation6], 1
    %5331 = vsyncpa [#allocation9], 1
    %5332 = vsyncpa [#allocation12], 1
    %5333 = vsyncpa [#allocation4], 1

</llo_original>
